<compile_context>
chip_gen: v6e
topology: v6e:2x2x1
jax: 0.10.0
libtpu: 0.0.40
codegen_flags: <defaults>
</compile_context>

<pallas_src>
import math
import numpy as np
import jax
import jax.numpy as jnp
from jax import lax
from jax.experimental import pallas as pl
from jax.experimental.pallas import tpu as pltpu  # noqa: F401  (TPU backend)

# ----------------------------- model hyperparams -----------------------------
B = 2            # batch
S = 8            # sequence length
VOCAB = 64       # vocab size
E = 32           # embedding dim
H = 48           # hidden dim (divisible by num_heads=12)
NUM_HEADS = 12
HD = H // NUM_HEADS
FF = 4 * H
NUM_LAYERS = 2
LN_EPS = 1e-5
BH = NUM_HEADS * S   # 96: "all heads stacked" axis used for batched attention
BS = B * S           # 16: batched (batch*seq) slab rows

# -------- constants-slab row layout (all starts are multiples of 8) ----------
R_EMB = 0                    # (VOCAB, H)  embedding @ We  (row 0 stays zero: padding_idx)
R_PEBE = R_EMB + VOCAB       # (BS, H)     pe + be, tiled over batch
R_MASK = R_PEBE + BS         # (BH, H)     head lane mask
R_BLK = R_MASK + BH          # (BH, BH)    per-head block-diagonal ones
R_WFC = R_BLK + BH           # (H, VOCAB)  final fc weight
R_BFC = R_WFC + H            # (1, VOCAB)  final fc bias
R_TOT = R_BFC + 1
CONST_LANES = max(H, BH, VOCAB)   # 96

# --------------- bias/LN slab row layout: shape (L, 8, FF) -------------------
ROW_BQKV, ROW_BO, ROW_B1, ROW_B2, ROW_G1, ROW_BE1, ROW_G2, ROW_BE2 = range(8)


def _layernorm_1pass(x, g, b):
    # One-pass LayerNorm: two independent lane reductions, biased variance.
    n = x.shape[-1]
    s1 = jnp.sum(x, axis=-1, keepdims=True)
    s2 = jnp.sum(x * x, axis=-1, keepdims=True)
    m1 = s1 * (1.0 / n)
    var = s2 * (1.0 / n) - m1 * m1
    return (x - m1) * lax.rsqrt(var + LN_EPS) * g + b


# ------------------------------- fused kernel --------------------------------

def fused_lm_kernel(tok_ref,        # (BS, 1) int32
                    const_ref,      # (R_TOT, 96) f32 constants slab
                    bias_ref,       # (L, 8, FF) f32 bias/LN slab
                    wqkv_ref,       # (L, H, 3H) f32 (Q third pre-scaled)
                    wo_ref,         # (L, H, H)
                    w1_ref,         # (L, H, FF)
                    w2_ref,         # (L, FF, H)
                    out_ref):       # (B, VOCAB)
    # ---- embedding lookup: vectorized one-hot + one matmul against emb@We ----
    col_ids = lax.broadcasted_iota(jnp.int32, (BS, VOCAB), 1)
    onehot = jnp.where(col_ids == tok_ref[...], 1.0, 0.0).astype(jnp.float32)  # (16, 64)
    x = (jnp.dot(onehot, const_ref[R_EMB:R_EMB + VOCAB, 0:H],
                 preferred_element_type=jnp.float32)
         + const_ref[R_PEBE:R_PEBE + BS, 0:H])                                 # (16, 48)
    # embedding dropout is identity in eval mode

    for l in range(NUM_LAYERS):                      # static unroll over layers
        # ---- fused QKV projection (scale folded into Q part on host) ----
        qkv = (jnp.dot(x, wqkv_ref[l], preferred_element_type=jnp.float32)
               + bias_ref[l, ROW_BQKV:ROW_BQKV + 1, 0:3 * H])                  # (16, 144)
        q = qkv[:, 0:H]
        k = qkv[:, H:2 * H]
        v = qkv[:, 2 * H:3 * H]

        # ---- attention: all 12 heads at once, per batch row ----
        ctxs = []
        for b in range(B):
            qb = q[b * S:(b + 1) * S, :]                                       # (8, 48)
            kb = k[b * S:(b + 1) * S, :]
            vb = v[b * S:(b + 1) * S, :]
            mask_big = const_ref[R_MASK:R_MASK + BH, 0:H]                      # (96, 48)
            k_big = jnp.tile(kb, (NUM_HEADS, 1)) * mask_big                    # (96, 48)
            v_big = jnp.tile(vb, (NUM_HEADS, 1)) * mask_big                    # (96, 48)
            # s_all[i, h*S + j] = <q_h[i], k_h[j]>  (scale already folded in).
            # NT dot_general: RHS transpose handled inside the MXU data path,
            # no standalone XLU transpose.
            s_all = lax.dot_general(qb, k_big, (((1,), (1,)), ((), ())),
                                    preferred_element_type=jnp.float32)        # (8, 96)
            s_all = s_all - jnp.max(s_all, axis=-1, keepdims=True)   # softmax-invariant shift
            e = jnp.exp(s_all)
            den = jnp.dot(e, const_ref[R_BLK:R_BLK + BH, 0:BH],
                          preferred_element_type=jnp.float32)        # per-head key sums
            p = e * pl.reciprocal(den, approx=True)                  # per-head softmax
            ctxs.append(jnp.dot(p, v_big, preferred_element_type=jnp.float32))  # (8, 48)
        ctx = jnp.concatenate(ctxs, axis=0)                                    # (16, 48)

        attn = (jnp.dot(ctx, wo_ref[l], preferred_element_type=jnp.float32)
                + bias_ref[l, ROW_BO:ROW_BO + 1, 0:H])
        # attention-weight dropout & post-attention dropout are identities in eval mode
        y = _layernorm_1pass(attn + x,
                             bias_ref[l, ROW_G1:ROW_G1 + 1, 0:H],
                             bias_ref[l, ROW_BE1:ROW_BE1 + 1, 0:H])
        # TODO(synk): auxiliary_predictor output is computed but discarded in the
        # reference model when ideal_distributions is None, so it is skipped here.

        h1 = jnp.maximum(jnp.dot(y, w1_ref[l], preferred_element_type=jnp.float32)
                         + bias_ref[l, ROW_B1:ROW_B1 + 1, 0:FF], 0.0)          # (16, 192)
        ff = (jnp.dot(h1, w2_ref[l], preferred_element_type=jnp.float32)
              + bias_ref[l, ROW_B2:ROW_B2 + 1, 0:H])
        x = _layernorm_1pass(ff + y,
                             bias_ref[l, ROW_G2:ROW_G2 + 1, 0:H],
                             bias_ref[l, ROW_BE2:ROW_BE2 + 1, 0:H])

    # ---- last token of each batch row + final FC ----
    last = jnp.concatenate([x[(b + 1) * S - 1:(b + 1) * S, :] for b in range(B)],
                           axis=0)                                             # (2, 48)
    out_ref[...] = (jnp.dot(last, const_ref[R_WFC:R_WFC + H, 0:VOCAB],
                            preferred_element_type=jnp.float32)
                    + const_ref[R_BFC:R_BFC + 1, 0:VOCAB])


# ------------------------------- host wrapper ---------------------------------

def language_model_forward(tokens, kparams):
    tok_col = tokens.reshape(BS, 1).astype(jnp.int32)
    # Single fused invocation, no grid: every operand is a whole-array VMEM block.
    return pl.pallas_call(
        fused_lm_kernel,
        out_shape=jax.ShapeDtypeStruct((B, VOCAB), jnp.float32),
    )(tok_col, kparams['constA'], kparams['bias_s'], kparams['wqkv_s'],
      kparams['wo_s'], kparams['w1_s'], kparams['w2_s'])


# ------------------------------ parameter setup -------------------------------

def _linear(key, fan_in, fan_out):
    k1, k2 = jax.random.split(key)
    bound = 1.0 / math.sqrt(fan_in)
    w = jax.random.uniform(k1, (fan_in, fan_out), jnp.float32, -bound, bound)
    b = jax.random.uniform(k2, (1, fan_out), jnp.float32, -bound, bound)
    return w, b


def make_params(key):
    keys = jax.random.split(key, 3 + NUM_LAYERS)
    emb = jax.random.normal(keys[0], (VOCAB, E), jnp.float32)
    emb = emb.at[0].set(0.0)                       # padding_idx=0
    we, be = _linear(keys[1], E, H)

    # sinusoidal positional encoding (first S rows)
    pos = np.arange(S)[:, None].astype(np.float32)
    div = np.exp(np.arange(0, H, 2).astype(np.float32) * (-math.log(10000.0) / H))
    pe = np.zeros((S, H), np.float32)
    pe[:, 0::2] = np.sin(pos * div)
    pe[:, 1::2] = np.cos(pos * div)
    pe = jnp.asarray(pe)

    layers = []
    for li in range(NUM_LAYERS):
        lks = jax.random.split(keys[2 + li], 6)
        wq, bq = _linear(lks[0], H, H)
        wk, bk = _linear(lks[1], H, H)
        wv, bv = _linear(lks[2], H, H)
        wo, bo = _linear(lks[3], H, H)
        w1, b1 = _linear(lks[4], H, FF)
        w2, b2 = _linear(lks[5], FF, H)
        g1 = jnp.ones((1, H), jnp.float32); be1 = jnp.zeros((1, H), jnp.float32)
        g2 = jnp.ones((1, H), jnp.float32); be2 = jnp.zeros((1, H), jnp.float32)
        layers.append((wq, bq, wk, bk, wv, bv, wo, bo,
                       g1, be1, w1, b1, w2, b2, g2, be2))

    wfc, bfc = _linear(keys[2 + NUM_LAYERS], H, VOCAB)
    return dict(embedding=emb, we=we, be=be, pe=pe, layers=layers, wfc=wfc, bfc=bfc)


def pack_for_kernel(params):
    """Pack the logical parameters into a small number of HBM arrays."""
    scale = 1.0 / math.sqrt(HD)

    # Host-precomputed: embedding @ We (row 0 stays zero -> padding_idx preserved)
    # and (pe + be) tiled over the batch rows of the slab.
    emb_proj = np.asarray(params['embedding'] @ params['we'])          # (VOCAB, H)
    pe_be = np.tile(np.asarray(params['pe'] + params['be']), (B, 1))   # (BS, H)

    # Attention constants:
    #   mask_big[h*S + j, d] = 1  iff lane d belongs to head h
    #   block_ones[m, n]     = 1  iff m and n are in the same head block of S keys
    mask_big = ((np.arange(BH)[:, None] // S) ==
                (np.arange(H)[None, :] // HD)).astype(np.float32)
    block_ones = ((np.arange(BH)[:, None] // S) ==
                  (np.arange(BH)[None, :] // S)).astype(np.float32)

    constA = np.zeros((R_TOT, CONST_LANES), np.float32)
    constA[R_EMB:R_EMB + VOCAB, :H] = emb_proj
    constA[R_PEBE:R_PEBE + BS, :H] = pe_be
    constA[R_MASK:R_MASK + BH, :H] = mask_big
    constA[R_BLK:R_BLK + BH, :BH] = block_ones
    constA[R_WFC:R_WFC + H, :VOCAB] = np.asarray(params['wfc'])
    constA[R_BFC:R_BFC + 1, :VOCAB] = np.asarray(params['bfc'])

    wqkv_l, wo_l, w1_l, w2_l, bias_l = [], [], [], [], []
    for (wq, bq, wk, bk, wv, bv, wo, bo,
         g1, be1, w1, b1, w2, b2, g2, be2) in params['layers']:
        # Fused QKV with the 1/sqrt(head_dim) attention scale folded into Q.
        wqkv = np.concatenate([np.asarray(wq) * scale, np.asarray(wk),
                               np.asarray(wv)], axis=1)                # (H, 3H)
        bqkv = np.concatenate([np.asarray(bq) * scale, np.asarray(bk),
                               np.asarray(bv)], axis=1)                # (1, 3H)
        bias = np.zeros((8, FF), np.float32)
        bias[ROW_BQKV, :3 * H] = bqkv[0]
        bias[ROW_BO, :H] = np.asarray(bo)[0]
        bias[ROW_B1, :FF] = np.asarray(b1)[0]
        bias[ROW_B2, :H] = np.asarray(b2)[0]
        bias[ROW_G1, :H] = np.asarray(g1)[0]
        bias[ROW_BE1, :H] = np.asarray(be1)[0]
        bias[ROW_G2, :H] = np.asarray(g2)[0]
        bias[ROW_BE2, :H] = np.asarray(be2)[0]
        wqkv_l.append(wqkv); wo_l.append(np.asarray(wo))
        w1_l.append(np.asarray(w1)); w2_l.append(np.asarray(w2))
        bias_l.append(bias)

    return dict(
        constA=jnp.asarray(constA),
        bias_s=jnp.asarray(np.stack(bias_l, axis=0)),
        wqkv_s=jnp.asarray(np.stack(wqkv_l, axis=0)),
        wo_s=jnp.asarray(np.stack(wo_l, axis=0)),
        w1_s=jnp.asarray(np.stack(w1_l, axis=0)),
        w2_s=jnp.asarray(np.stack(w2_l, axis=0)),
    )


# ----------------------------- pure-JAX reference ------------------------------

def _ln(x, g, b):
    mu = jnp.mean(x, -1, keepdims=True)
    var = jnp.mean((x - mu) ** 2, -1, keepdims=True)
    return (x - mu) * lax.rsqrt(var + LN_EPS) * g + b


def ref_forward(tokens, params):
    x = jnp.take(params['embedding'], tokens, axis=0)
    x = x @ params['we'] + params['be'] + params['pe'][None]
    for (wq, bq, wk, bk, wv, bv, wo, bo,
         g1, be1, w1, b1, w2, b2, g2, be2) in params['layers']:
        q = (x @ wq + bq).reshape(B, S, NUM_HEADS, HD).transpose(0, 2, 1, 3)
        k = (x @ wk + bk).reshape(B, S, NUM_HEADS, HD).transpose(0, 2, 1, 3)
        v = (x @ wv + bv).reshape(B, S, NUM_HEADS, HD).transpose(0, 2, 1, 3)
        sc = jnp.einsum('bhqd,bhkd->bhqk', q, k) / math.sqrt(HD)
        p = jax.nn.softmax(sc, axis=-1)
        o = jnp.einsum('bhqk,bhkd->bhqd', p, v).transpose(0, 2, 1, 3).reshape(B, S, H)
        y = _ln(o @ wo + bo + x, g1, be1)
        ff = jnp.maximum(y @ w1 + b1, 0.0) @ w2 + b2
        x = _ln(ff + y, g2, be2)
    return x[:, -1, :] @ params['wfc'] + params['bfc']


# ------------------------------------ main -------------------------------------

if __name__ == "__main__":
    key = jax.random.PRNGKey(0)
    kp, kt = jax.random.split(key)
    params = make_params(kp)
    kparams = pack_for_kernel(params)
    tokens = jax.random.randint(kt, (B, S), 0, VOCAB, dtype=jnp.int32)

    logits = language_model_forward(tokens, kparams)
    logits = jax.block_until_ready(logits)

    ref = jax.block_until_ready(ref_forward(tokens, params))
    assert logits.shape == (B, VOCAB)
    np.testing.assert_allclose(np.asarray(logits), np.asarray(ref),
                               rtol=2e-2, atol=2e-2)
    print("KERNEL_OK")
</pallas_src>

<mosaic_0001>
module attributes {stable_mosaic.version = 11 : i64} {
  func.func @fused_lm_kernel(%arg0: memref<16x1xi32, #tpu.memory_space<vmem>>, %arg1: memref<321x96xf32, #tpu.memory_space<vmem>>, %arg2: memref<2x8x192xf32, #tpu.memory_space<vmem>>, %arg3: memref<2x48x144xf32, #tpu.memory_space<vmem>>, %arg4: memref<2x48x48xf32, #tpu.memory_space<vmem>>, %arg5: memref<2x48x192xf32, #tpu.memory_space<vmem>>, %arg6: memref<2x192x48xf32, #tpu.memory_space<vmem>>, %arg7: memref<2x64xf32, #tpu.memory_space<vmem>>) attributes {dimension_semantics = [], scalar_prefetch = 0 : i64, scratch_operands = 0 : i64, tpu.core_type = #tpu.core_type<tc>} {
    %0 = tpu.iota {dimensions = array<i32: 1>} : vector<16x64xi32>
    %c0 = arith.constant 0 : index
    %c0_0 = arith.constant 0 : index
    %1 = vector.load %arg0[%c0, %c0_0] : memref<16x1xi32, #tpu.memory_space<vmem>>, vector<16x1xi32>
    %2 = vector.broadcast %1 : vector<16x1xi32> to vector<16x64xi32>
    %3 = arith.cmpi eq, %0, %2 : vector<16x64xi32>
    %cst = arith.constant 1.000000e+00 : f32
    %cst_1 = arith.constant 0.000000e+00 : f32
    %4 = vector.broadcast %cst : f32 to vector<16x64xf32>
    %5 = vector.broadcast %cst_1 : f32 to vector<16x64xf32>
    %6 = arith.select %3, %4, %5 : vector<16x64xi1>, vector<16x64xf32>
    %c0_2 = arith.constant 0 : index
    %c0_3 = arith.constant 0 : index
    %7 = vector.load %arg1[%c0_2, %c0_3] : memref<321x96xf32, #tpu.memory_space<vmem>>, vector<64x48xf32>
    %cst_4 = arith.constant dense<0.000000e+00> : vector<16x48xf32>
    %8 = tpu.matmul %6, %7, %cst_4 {dimension_numbers = #tpu.dot_dimension_numbers<[1], [0], [0], [1], [0, 0, 1, 1], [], []>} : vector<16x64xf32>, vector<64x48xf32>, vector<16x48xf32> -> vector<16x48xf32>
    %c64 = arith.constant 64 : index
    %c0_5 = arith.constant 0 : index
    %9 = vector.load %arg1[%c64, %c0_5] : memref<321x96xf32, #tpu.memory_space<vmem>>, vector<16x48xf32>
    %10 = arith.addf %8, %9 : vector<16x48xf32>
    %c0_6 = arith.constant 0 : index
    %c0_7 = arith.constant 0 : index
    %c0_8 = arith.constant 0 : index
    %11 = vector.load %arg3[%c0_6, %c0_7, %c0_8] : memref<2x48x144xf32, #tpu.memory_space<vmem>>, vector<1x48x144xf32>
    %12 = vector.shape_cast %11 : vector<1x48x144xf32> to vector<48x144xf32>
    %cst_9 = arith.constant dense<0.000000e+00> : vector<16x144xf32>
    %13 = tpu.matmul %10, %12, %cst_9 {dimension_numbers = #tpu.dot_dimension_numbers<[1], [0], [0], [1], [0, 0, 1, 1], [], []>} : vector<16x48xf32>, vector<48x144xf32>, vector<16x144xf32> -> vector<16x144xf32>
    %c0_10 = arith.constant 0 : index
    %c0_11 = arith.constant 0 : index
    %c0_12 = arith.constant 0 : index
    %14 = vector.load %arg2[%c0_10, %c0_11, %c0_12] : memref<2x8x192xf32, #tpu.memory_space<vmem>>, vector<1x1x144xf32>
    %15 = vector.shape_cast %14 : vector<1x1x144xf32> to vector<1x144xf32>
    %16 = vector.broadcast %15 : vector<1x144xf32> to vector<16x144xf32>
    %17 = arith.addf %13, %16 : vector<16x144xf32>
    %18 = vector.extract_strided_slice %17 {offsets = [0, 0], sizes = [16, 48], strides = [1, 1]} : vector<16x144xf32> to vector<16x48xf32>
    %19 = vector.extract_strided_slice %17 {offsets = [0, 48], sizes = [16, 48], strides = [1, 1]} : vector<16x144xf32> to vector<16x48xf32>
    %20 = vector.extract_strided_slice %17 {offsets = [0, 96], sizes = [16, 48], strides = [1, 1]} : vector<16x144xf32> to vector<16x48xf32>
    %21 = vector.extract_strided_slice %18 {offsets = [0, 0], sizes = [8, 48], strides = [1, 1]} : vector<16x48xf32> to vector<8x48xf32>
    %22 = vector.extract_strided_slice %19 {offsets = [0, 0], sizes = [8, 48], strides = [1, 1]} : vector<16x48xf32> to vector<8x48xf32>
    %23 = vector.extract_strided_slice %20 {offsets = [0, 0], sizes = [8, 48], strides = [1, 1]} : vector<16x48xf32> to vector<8x48xf32>
    %c80 = arith.constant 80 : index
    %c0_13 = arith.constant 0 : index
    %24 = vector.load %arg1[%c80, %c0_13] : memref<321x96xf32, #tpu.memory_space<vmem>>, vector<96x48xf32>
    %25 = tpu.concatenate %22, %22, %22, %22, %22, %22, %22, %22, %22, %22, %22, %22 in 0 : vector<8x48xf32>, vector<8x48xf32>, vector<8x48xf32>, vector<8x48xf32>, vector<8x48xf32>, vector<8x48xf32>, vector<8x48xf32>, vector<8x48xf32>, vector<8x48xf32>, vector<8x48xf32>, vector<8x48xf32>, vector<8x48xf32> -> vector<96x48xf32>
    %26 = arith.mulf %25, %24 : vector<96x48xf32>
    %27 = tpu.concatenate %23, %23, %23, %23, %23, %23, %23, %23, %23, %23, %23, %23 in 0 : vector<8x48xf32>, vector<8x48xf32>, vector<8x48xf32>, vector<8x48xf32>, vector<8x48xf32>, vector<8x48xf32>, vector<8x48xf32>, vector<8x48xf32>, vector<8x48xf32>, vector<8x48xf32>, vector<8x48xf32>, vector<8x48xf32> -> vector<96x48xf32>
    %28 = arith.mulf %27, %24 : vector<96x48xf32>
    %cst_14 = arith.constant dense<0.000000e+00> : vector<8x96xf32>
    %29 = tpu.matmul %21, %26, %cst_14 {dimension_numbers = #tpu.dot_dimension_numbers<[1], [1], [0], [0], [0, 0, 1, 0], [], []>} : vector<8x48xf32>, vector<96x48xf32>, vector<8x96xf32> -> vector<8x96xf32>
    %cst_15 = arith.constant dense<0xFF800000> : vector<8xf32>
    %30 = vector.multi_reduction <maximumf>, %29, %cst_15 [1] : vector<8x96xf32> to vector<8xf32>
    %31 = vector.shape_cast %30 : vector<8xf32> to vector<8x1xf32>
    %32 = vector.broadcast %31 : vector<8x1xf32> to vector<8x96xf32>
    %33 = arith.subf %29, %32 : vector<8x96xf32>
    %34 = math.exp %33 : vector<8x96xf32>
    %c176 = arith.constant 176 : index
    %c0_16 = arith.constant 0 : index
    %35 = vector.load %arg1[%c176, %c0_16] : memref<321x96xf32, #tpu.memory_space<vmem>>, vector<96x96xf32>
    %cst_17 = arith.constant dense<0.000000e+00> : vector<8x96xf32>
    %36 = tpu.matmul %34, %35, %cst_17 {dimension_numbers = #tpu.dot_dimension_numbers<[1], [0], [0], [1], [0, 0, 1, 1], [], []>} : vector<8x96xf32>, vector<96x96xf32>, vector<8x96xf32> -> vector<8x96xf32>
    %37 = tpu.reciprocal %36 {approx = true} : vector<8x96xf32> -> vector<8x96xf32>
    %38 = arith.mulf %34, %37 : vector<8x96xf32>
    %cst_18 = arith.constant dense<0.000000e+00> : vector<8x48xf32>
    %39 = tpu.matmul %38, %28, %cst_18 {dimension_numbers = #tpu.dot_dimension_numbers<[1], [0], [0], [1], [0, 0, 1, 1], [], []>} : vector<8x96xf32>, vector<96x48xf32>, vector<8x48xf32> -> vector<8x48xf32>
    %40 = vector.extract_strided_slice %18 {offsets = [8, 0], sizes = [8, 48], strides = [1, 1]} : vector<16x48xf32> to vector<8x48xf32>
    %41 = vector.extract_strided_slice %19 {offsets = [8, 0], sizes = [8, 48], strides = [1, 1]} : vector<16x48xf32> to vector<8x48xf32>
    %42 = vector.extract_strided_slice %20 {offsets = [8, 0], sizes = [8, 48], strides = [1, 1]} : vector<16x48xf32> to vector<8x48xf32>
    %c80_19 = arith.constant 80 : index
    %c0_20 = arith.constant 0 : index
    %43 = vector.load %arg1[%c80_19, %c0_20] : memref<321x96xf32, #tpu.memory_space<vmem>>, vector<96x48xf32>
    %44 = tpu.concatenate %41, %41, %41, %41, %41, %41, %41, %41, %41, %41, %41, %41 in 0 : vector<8x48xf32>, vector<8x48xf32>, vector<8x48xf32>, vector<8x48xf32>, vector<8x48xf32>, vector<8x48xf32>, vector<8x48xf32>, vector<8x48xf32>, vector<8x48xf32>, vector<8x48xf32>, vector<8x48xf32>, vector<8x48xf32> -> vector<96x48xf32>
    %45 = arith.mulf %44, %43 : vector<96x48xf32>
    %46 = tpu.concatenate %42, %42, %42, %42, %42, %42, %42, %42, %42, %42, %42, %42 in 0 : vector<8x48xf32>, vector<8x48xf32>, vector<8x48xf32>, vector<8x48xf32>, vector<8x48xf32>, vector<8x48xf32>, vector<8x48xf32>, vector<8x48xf32>, vector<8x48xf32>, vector<8x48xf32>, vector<8x48xf32>, vector<8x48xf32> -> vector<96x48xf32>
    %47 = arith.mulf %46, %43 : vector<96x48xf32>
    %cst_21 = arith.constant dense<0.000000e+00> : vector<8x96xf32>
    %48 = tpu.matmul %40, %45, %cst_21 {dimension_numbers = #tpu.dot_dimension_numbers<[1], [1], [0], [0], [0, 0, 1, 0], [], []>} : vector<8x48xf32>, vector<96x48xf32>, vector<8x96xf32> -> vector<8x96xf32>
    %cst_22 = arith.constant dense<0xFF800000> : vector<8xf32>
    %49 = vector.multi_reduction <maximumf>, %48, %cst_22 [1] : vector<8x96xf32> to vector<8xf32>
    %50 = vector.shape_cast %49 : vector<8xf32> to vector<8x1xf32>
    %51 = vector.broadcast %50 : vector<8x1xf32> to vector<8x96xf32>
    %52 = arith.subf %48, %51 : vector<8x96xf32>
    %53 = math.exp %52 : vector<8x96xf32>
    %c176_23 = arith.constant 176 : index
    %c0_24 = arith.constant 0 : index
    %54 = vector.load %arg1[%c176_23, %c0_24] : memref<321x96xf32, #tpu.memory_space<vmem>>, vector<96x96xf32>
    %cst_25 = arith.constant dense<0.000000e+00> : vector<8x96xf32>
    %55 = tpu.matmul %53, %54, %cst_25 {dimension_numbers = #tpu.dot_dimension_numbers<[1], [0], [0], [1], [0, 0, 1, 1], [], []>} : vector<8x96xf32>, vector<96x96xf32>, vector<8x96xf32> -> vector<8x96xf32>
    %56 = tpu.reciprocal %55 {approx = true} : vector<8x96xf32> -> vector<8x96xf32>
    %57 = arith.mulf %53, %56 : vector<8x96xf32>
    %cst_26 = arith.constant dense<0.000000e+00> : vector<8x48xf32>
    %58 = tpu.matmul %57, %47, %cst_26 {dimension_numbers = #tpu.dot_dimension_numbers<[1], [0], [0], [1], [0, 0, 1, 1], [], []>} : vector<8x96xf32>, vector<96x48xf32>, vector<8x48xf32> -> vector<8x48xf32>
    %59 = tpu.concatenate %39, %58 in 0 : vector<8x48xf32>, vector<8x48xf32> -> vector<16x48xf32>
    %c0_27 = arith.constant 0 : index
    %c0_28 = arith.constant 0 : index
    %c0_29 = arith.constant 0 : index
    %60 = vector.load %arg4[%c0_27, %c0_28, %c0_29] : memref<2x48x48xf32, #tpu.memory_space<vmem>>, vector<1x48x48xf32>
    %61 = vector.shape_cast %60 : vector<1x48x48xf32> to vector<48x48xf32>
    %cst_30 = arith.constant dense<0.000000e+00> : vector<16x48xf32>
    %62 = tpu.matmul %59, %61, %cst_30 {dimension_numbers = #tpu.dot_dimension_numbers<[1], [0], [0], [1], [0, 0, 1, 1], [], []>} : vector<16x48xf32>, vector<48x48xf32>, vector<16x48xf32> -> vector<16x48xf32>
    %c0_31 = arith.constant 0 : index
    %c1 = arith.constant 1 : index
    %c0_32 = arith.constant 0 : index
    %63 = vector.load %arg2[%c0_31, %c1, %c0_32] : memref<2x8x192xf32, #tpu.memory_space<vmem>>, vector<1x1x48xf32>
    %64 = vector.shape_cast %63 : vector<1x1x48xf32> to vector<1x48xf32>
    %65 = vector.broadcast %64 : vector<1x48xf32> to vector<16x48xf32>
    %66 = arith.addf %62, %65 : vector<16x48xf32>
    %67 = arith.addf %66, %10 : vector<16x48xf32>
    %c0_33 = arith.constant 0 : index
    %c4 = arith.constant 4 : index
    %c0_34 = arith.constant 0 : index
    %68 = vector.load %arg2[%c0_33, %c4, %c0_34] : memref<2x8x192xf32, #tpu.memory_space<vmem>>, vector<1x1x48xf32>
    %69 = vector.shape_cast %68 : vector<1x1x48xf32> to vector<1x48xf32>
    %c0_35 = arith.constant 0 : index
    %c5 = arith.constant 5 : index
    %c0_36 = arith.constant 0 : index
    %70 = vector.load %arg2[%c0_35, %c5, %c0_36] : memref<2x8x192xf32, #tpu.memory_space<vmem>>, vector<1x1x48xf32>
    %71 = vector.shape_cast %70 : vector<1x1x48xf32> to vector<1x48xf32>
    %cst_37 = arith.constant dense<0.000000e+00> : vector<16xf32>
    %72 = vector.multi_reduction <add>, %67, %cst_37 [1] : vector<16x48xf32> to vector<16xf32>
    %73 = vector.shape_cast %72 : vector<16xf32> to vector<16x1xf32>
    %74 = arith.mulf %67, %67 : vector<16x48xf32>
    %cst_38 = arith.constant dense<0.000000e+00> : vector<16xf32>
    %75 = vector.multi_reduction <add>, %74, %cst_38 [1] : vector<16x48xf32> to vector<16xf32>
    %76 = vector.shape_cast %75 : vector<16xf32> to vector<16x1xf32>
    %cst_39 = arith.constant 0.020833334 : f32
    %77 = vector.broadcast %cst_39 : f32 to vector<16x1xf32>
    %78 = arith.mulf %73, %77 : vector<16x1xf32>
    %cst_40 = arith.constant 0.020833334 : f32
    %79 = vector.broadcast %cst_40 : f32 to vector<16x1xf32>
    %80 = arith.mulf %76, %79 : vector<16x1xf32>
    %81 = arith.mulf %78, %78 : vector<16x1xf32>
    %82 = arith.subf %80, %81 : vector<16x1xf32>
    %83 = vector.broadcast %78 : vector<16x1xf32> to vector<16x48xf32>
    %84 = arith.subf %67, %83 : vector<16x48xf32>
    %cst_41 = arith.constant 9.99999974E-6 : f32
    %85 = vector.broadcast %cst_41 : f32 to vector<16x1xf32>
    %86 = arith.addf %82, %85 : vector<16x1xf32>
    %87 = math.rsqrt %86 : vector<16x1xf32>
    %88 = vector.broadcast %87 : vector<16x1xf32> to vector<16x48xf32>
    %89 = arith.mulf %84, %88 : vector<16x48xf32>
    %90 = vector.broadcast %69 : vector<1x48xf32> to vector<16x48xf32>
    %91 = arith.mulf %89, %90 : vector<16x48xf32>
    %92 = vector.broadcast %71 : vector<1x48xf32> to vector<16x48xf32>
    %93 = arith.addf %91, %92 : vector<16x48xf32>
    %c0_42 = arith.constant 0 : index
    %c0_43 = arith.constant 0 : index
    %c0_44 = arith.constant 0 : index
    %94 = vector.load %arg5[%c0_42, %c0_43, %c0_44] : memref<2x48x192xf32, #tpu.memory_space<vmem>>, vector<1x48x192xf32>
    %95 = vector.shape_cast %94 : vector<1x48x192xf32> to vector<48x192xf32>
    %cst_45 = arith.constant dense<0.000000e+00> : vector<16x192xf32>
    %96 = tpu.matmul %93, %95, %cst_45 {dimension_numbers = #tpu.dot_dimension_numbers<[1], [0], [0], [1], [0, 0, 1, 1], [], []>} : vector<16x48xf32>, vector<48x192xf32>, vector<16x192xf32> -> vector<16x192xf32>
    %c0_46 = arith.constant 0 : index
    %c2 = arith.constant 2 : index
    %c0_47 = arith.constant 0 : index
    %97 = vector.load %arg2[%c0_46, %c2, %c0_47] : memref<2x8x192xf32, #tpu.memory_space<vmem>>, vector<1x1x192xf32>
    %98 = vector.shape_cast %97 : vector<1x1x192xf32> to vector<1x192xf32>
    %99 = vector.broadcast %98 : vector<1x192xf32> to vector<16x192xf32>
    %100 = arith.addf %96, %99 : vector<16x192xf32>
    %cst_48 = arith.constant 0.000000e+00 : f32
    %101 = vector.broadcast %cst_48 : f32 to vector<16x192xf32>
    %102 = arith.maximumf %100, %101 : vector<16x192xf32>
    %c0_49 = arith.constant 0 : index
    %c0_50 = arith.constant 0 : index
    %c0_51 = arith.constant 0 : index
    %103 = vector.load %arg6[%c0_49, %c0_50, %c0_51] : memref<2x192x48xf32, #tpu.memory_space<vmem>>, vector<1x192x48xf32>
    %104 = vector.shape_cast %103 : vector<1x192x48xf32> to vector<192x48xf32>
    %cst_52 = arith.constant dense<0.000000e+00> : vector<16x48xf32>
    %105 = tpu.matmul %102, %104, %cst_52 {dimension_numbers = #tpu.dot_dimension_numbers<[1], [0], [0], [1], [0, 0, 1, 1], [], []>} : vector<16x192xf32>, vector<192x48xf32>, vector<16x48xf32> -> vector<16x48xf32>
    %c0_53 = arith.constant 0 : index
    %c3 = arith.constant 3 : index
    %c0_54 = arith.constant 0 : index
    %106 = vector.load %arg2[%c0_53, %c3, %c0_54] : memref<2x8x192xf32, #tpu.memory_space<vmem>>, vector<1x1x48xf32>
    %107 = vector.shape_cast %106 : vector<1x1x48xf32> to vector<1x48xf32>
    %108 = vector.broadcast %107 : vector<1x48xf32> to vector<16x48xf32>
    %109 = arith.addf %105, %108 : vector<16x48xf32>
    %110 = arith.addf %109, %93 : vector<16x48xf32>
    %c0_55 = arith.constant 0 : index
    %c6 = arith.constant 6 : index
    %c0_56 = arith.constant 0 : index
    %111 = vector.load %arg2[%c0_55, %c6, %c0_56] : memref<2x8x192xf32, #tpu.memory_space<vmem>>, vector<1x1x48xf32>
    %112 = vector.shape_cast %111 : vector<1x1x48xf32> to vector<1x48xf32>
    %c0_57 = arith.constant 0 : index
    %c7 = arith.constant 7 : index
    %c0_58 = arith.constant 0 : index
    %113 = vector.load %arg2[%c0_57, %c7, %c0_58] : memref<2x8x192xf32, #tpu.memory_space<vmem>>, vector<1x1x48xf32>
    %114 = vector.shape_cast %113 : vector<1x1x48xf32> to vector<1x48xf32>
    %cst_59 = arith.constant dense<0.000000e+00> : vector<16xf32>
    %115 = vector.multi_reduction <add>, %110, %cst_59 [1] : vector<16x48xf32> to vector<16xf32>
    %116 = vector.shape_cast %115 : vector<16xf32> to vector<16x1xf32>
    %117 = arith.mulf %110, %110 : vector<16x48xf32>
    %cst_60 = arith.constant dense<0.000000e+00> : vector<16xf32>
    %118 = vector.multi_reduction <add>, %117, %cst_60 [1] : vector<16x48xf32> to vector<16xf32>
    %119 = vector.shape_cast %118 : vector<16xf32> to vector<16x1xf32>
    %cst_61 = arith.constant 0.020833334 : f32
    %120 = vector.broadcast %cst_61 : f32 to vector<16x1xf32>
    %121 = arith.mulf %116, %120 : vector<16x1xf32>
    %cst_62 = arith.constant 0.020833334 : f32
    %122 = vector.broadcast %cst_62 : f32 to vector<16x1xf32>
    %123 = arith.mulf %119, %122 : vector<16x1xf32>
    %124 = arith.mulf %121, %121 : vector<16x1xf32>
    %125 = arith.subf %123, %124 : vector<16x1xf32>
    %126 = vector.broadcast %121 : vector<16x1xf32> to vector<16x48xf32>
    %127 = arith.subf %110, %126 : vector<16x48xf32>
    %cst_63 = arith.constant 9.99999974E-6 : f32
    %128 = vector.broadcast %cst_63 : f32 to vector<16x1xf32>
    %129 = arith.addf %125, %128 : vector<16x1xf32>
    %130 = math.rsqrt %129 : vector<16x1xf32>
    %131 = vector.broadcast %130 : vector<16x1xf32> to vector<16x48xf32>
    %132 = arith.mulf %127, %131 : vector<16x48xf32>
    %133 = vector.broadcast %112 : vector<1x48xf32> to vector<16x48xf32>
    %134 = arith.mulf %132, %133 : vector<16x48xf32>
    %135 = vector.broadcast %114 : vector<1x48xf32> to vector<16x48xf32>
    %136 = arith.addf %134, %135 : vector<16x48xf32>
    %c1_64 = arith.constant 1 : index
    %c0_65 = arith.constant 0 : index
    %c0_66 = arith.constant 0 : index
    %137 = vector.load %arg3[%c1_64, %c0_65, %c0_66] : memref<2x48x144xf32, #tpu.memory_space<vmem>>, vector<1x48x144xf32>
    %138 = vector.shape_cast %137 : vector<1x48x144xf32> to vector<48x144xf32>
    %cst_67 = arith.constant dense<0.000000e+00> : vector<16x144xf32>
    %139 = tpu.matmul %136, %138, %cst_67 {dimension_numbers = #tpu.dot_dimension_numbers<[1], [0], [0], [1], [0, 0, 1, 1], [], []>} : vector<16x48xf32>, vector<48x144xf32>, vector<16x144xf32> -> vector<16x144xf32>
    %c1_68 = arith.constant 1 : index
    %c0_69 = arith.constant 0 : index
    %c0_70 = arith.constant 0 : index
    %140 = vector.load %arg2[%c1_68, %c0_69, %c0_70] : memref<2x8x192xf32, #tpu.memory_space<vmem>>, vector<1x1x144xf32>
    %141 = vector.shape_cast %140 : vector<1x1x144xf32> to vector<1x144xf32>
    %142 = vector.broadcast %141 : vector<1x144xf32> to vector<16x144xf32>
    %143 = arith.addf %139, %142 : vector<16x144xf32>
    %144 = vector.extract_strided_slice %143 {offsets = [0, 0], sizes = [16, 48], strides = [1, 1]} : vector<16x144xf32> to vector<16x48xf32>
    %145 = vector.extract_strided_slice %143 {offsets = [0, 48], sizes = [16, 48], strides = [1, 1]} : vector<16x144xf32> to vector<16x48xf32>
    %146 = vector.extract_strided_slice %143 {offsets = [0, 96], sizes = [16, 48], strides = [1, 1]} : vector<16x144xf32> to vector<16x48xf32>
    %147 = vector.extract_strided_slice %144 {offsets = [0, 0], sizes = [8, 48], strides = [1, 1]} : vector<16x48xf32> to vector<8x48xf32>
    %148 = vector.extract_strided_slice %145 {offsets = [0, 0], sizes = [8, 48], strides = [1, 1]} : vector<16x48xf32> to vector<8x48xf32>
    %149 = vector.extract_strided_slice %146 {offsets = [0, 0], sizes = [8, 48], strides = [1, 1]} : vector<16x48xf32> to vector<8x48xf32>
    %c80_71 = arith.constant 80 : index
    %c0_72 = arith.constant 0 : index
    %150 = vector.load %arg1[%c80_71, %c0_72] : memref<321x96xf32, #tpu.memory_space<vmem>>, vector<96x48xf32>
    %151 = tpu.concatenate %148, %148, %148, %148, %148, %148, %148, %148, %148, %148, %148, %148 in 0 : vector<8x48xf32>, vector<8x48xf32>, vector<8x48xf32>, vector<8x48xf32>, vector<8x48xf32>, vector<8x48xf32>, vector<8x48xf32>, vector<8x48xf32>, vector<8x48xf32>, vector<8x48xf32>, vector<8x48xf32>, vector<8x48xf32> -> vector<96x48xf32>
    %152 = arith.mulf %151, %150 : vector<96x48xf32>
    %153 = tpu.concatenate %149, %149, %149, %149, %149, %149, %149, %149, %149, %149, %149, %149 in 0 : vector<8x48xf32>, vector<8x48xf32>, vector<8x48xf32>, vector<8x48xf32>, vector<8x48xf32>, vector<8x48xf32>, vector<8x48xf32>, vector<8x48xf32>, vector<8x48xf32>, vector<8x48xf32>, vector<8x48xf32>, vector<8x48xf32> -> vector<96x48xf32>
    %154 = arith.mulf %153, %150 : vector<96x48xf32>
    %cst_73 = arith.constant dense<0.000000e+00> : vector<8x96xf32>
    %155 = tpu.matmul %147, %152, %cst_73 {dimension_numbers = #tpu.dot_dimension_numbers<[1], [1], [0], [0], [0, 0, 1, 0], [], []>} : vector<8x48xf32>, vector<96x48xf32>, vector<8x96xf32> -> vector<8x96xf32>
    %cst_74 = arith.constant dense<0xFF800000> : vector<8xf32>
    %156 = vector.multi_reduction <maximumf>, %155, %cst_74 [1] : vector<8x96xf32> to vector<8xf32>
    %157 = vector.shape_cast %156 : vector<8xf32> to vector<8x1xf32>
    %158 = vector.broadcast %157 : vector<8x1xf32> to vector<8x96xf32>
    %159 = arith.subf %155, %158 : vector<8x96xf32>
    %160 = math.exp %159 : vector<8x96xf32>
    %c176_75 = arith.constant 176 : index
    %c0_76 = arith.constant 0 : index
    %161 = vector.load %arg1[%c176_75, %c0_76] : memref<321x96xf32, #tpu.memory_space<vmem>>, vector<96x96xf32>
    %cst_77 = arith.constant dense<0.000000e+00> : vector<8x96xf32>
    %162 = tpu.matmul %160, %161, %cst_77 {dimension_numbers = #tpu.dot_dimension_numbers<[1], [0], [0], [1], [0, 0, 1, 1], [], []>} : vector<8x96xf32>, vector<96x96xf32>, vector<8x96xf32> -> vector<8x96xf32>
    %163 = tpu.reciprocal %162 {approx = true} : vector<8x96xf32> -> vector<8x96xf32>
    %164 = arith.mulf %160, %163 : vector<8x96xf32>
    %cst_78 = arith.constant dense<0.000000e+00> : vector<8x48xf32>
    %165 = tpu.matmul %164, %154, %cst_78 {dimension_numbers = #tpu.dot_dimension_numbers<[1], [0], [0], [1], [0, 0, 1, 1], [], []>} : vector<8x96xf32>, vector<96x48xf32>, vector<8x48xf32> -> vector<8x48xf32>
    %166 = vector.extract_strided_slice %144 {offsets = [8, 0], sizes = [8, 48], strides = [1, 1]} : vector<16x48xf32> to vector<8x48xf32>
    %167 = vector.extract_strided_slice %145 {offsets = [8, 0], sizes = [8, 48], strides = [1, 1]} : vector<16x48xf32> to vector<8x48xf32>
    %168 = vector.extract_strided_slice %146 {offsets = [8, 0], sizes = [8, 48], strides = [1, 1]} : vector<16x48xf32> to vector<8x48xf32>
    %c80_79 = arith.constant 80 : index
    %c0_80 = arith.constant 0 : index
    %169 = vector.load %arg1[%c80_79, %c0_80] : memref<321x96xf32, #tpu.memory_space<vmem>>, vector<96x48xf32>
    %170 = tpu.concatenate %167, %167, %167, %167, %167, %167, %167, %167, %167, %167, %167, %167 in 0 : vector<8x48xf32>, vector<8x48xf32>, vector<8x48xf32>, vector<8x48xf32>, vector<8x48xf32>, vector<8x48xf32>, vector<8x48xf32>, vector<8x48xf32>, vector<8x48xf32>, vector<8x48xf32>, vector<8x48xf32>, vector<8x48xf32> -> vector<96x48xf32>
    %171 = arith.mulf %170, %169 : vector<96x48xf32>
    %172 = tpu.concatenate %168, %168, %168, %168, %168, %168, %168, %168, %168, %168, %168, %168 in 0 : vector<8x48xf32>, vector<8x48xf32>, vector<8x48xf32>, vector<8x48xf32>, vector<8x48xf32>, vector<8x48xf32>, vector<8x48xf32>, vector<8x48xf32>, vector<8x48xf32>, vector<8x48xf32>, vector<8x48xf32>, vector<8x48xf32> -> vector<96x48xf32>
    %173 = arith.mulf %172, %169 : vector<96x48xf32>
    %cst_81 = arith.constant dense<0.000000e+00> : vector<8x96xf32>
    %174 = tpu.matmul %166, %171, %cst_81 {dimension_numbers = #tpu.dot_dimension_numbers<[1], [1], [0], [0], [0, 0, 1, 0], [], []>} : vector<8x48xf32>, vector<96x48xf32>, vector<8x96xf32> -> vector<8x96xf32>
    %cst_82 = arith.constant dense<0xFF800000> : vector<8xf32>
    %175 = vector.multi_reduction <maximumf>, %174, %cst_82 [1] : vector<8x96xf32> to vector<8xf32>
    %176 = vector.shape_cast %175 : vector<8xf32> to vector<8x1xf32>
    %177 = vector.broadcast %176 : vector<8x1xf32> to vector<8x96xf32>
    %178 = arith.subf %174, %177 : vector<8x96xf32>
    %179 = math.exp %178 : vector<8x96xf32>
    %c176_83 = arith.constant 176 : index
    %c0_84 = arith.constant 0 : index
    %180 = vector.load %arg1[%c176_83, %c0_84] : memref<321x96xf32, #tpu.memory_space<vmem>>, vector<96x96xf32>
    %cst_85 = arith.constant dense<0.000000e+00> : vector<8x96xf32>
    %181 = tpu.matmul %179, %180, %cst_85 {dimension_numbers = #tpu.dot_dimension_numbers<[1], [0], [0], [1], [0, 0, 1, 1], [], []>} : vector<8x96xf32>, vector<96x96xf32>, vector<8x96xf32> -> vector<8x96xf32>
    %182 = tpu.reciprocal %181 {approx = true} : vector<8x96xf32> -> vector<8x96xf32>
    %183 = arith.mulf %179, %182 : vector<8x96xf32>
    %cst_86 = arith.constant dense<0.000000e+00> : vector<8x48xf32>
    %184 = tpu.matmul %183, %173, %cst_86 {dimension_numbers = #tpu.dot_dimension_numbers<[1], [0], [0], [1], [0, 0, 1, 1], [], []>} : vector<8x96xf32>, vector<96x48xf32>, vector<8x48xf32> -> vector<8x48xf32>
    %185 = tpu.concatenate %165, %184 in 0 : vector<8x48xf32>, vector<8x48xf32> -> vector<16x48xf32>
    %c1_87 = arith.constant 1 : index
    %c0_88 = arith.constant 0 : index
    %c0_89 = arith.constant 0 : index
    %186 = vector.load %arg4[%c1_87, %c0_88, %c0_89] : memref<2x48x48xf32, #tpu.memory_space<vmem>>, vector<1x48x48xf32>
    %187 = vector.shape_cast %186 : vector<1x48x48xf32> to vector<48x48xf32>
    %cst_90 = arith.constant dense<0.000000e+00> : vector<16x48xf32>
    %188 = tpu.matmul %185, %187, %cst_90 {dimension_numbers = #tpu.dot_dimension_numbers<[1], [0], [0], [1], [0, 0, 1, 1], [], []>} : vector<16x48xf32>, vector<48x48xf32>, vector<16x48xf32> -> vector<16x48xf32>
    %c1_91 = arith.constant 1 : index
    %c1_92 = arith.constant 1 : index
    %c0_93 = arith.constant 0 : index
    %189 = vector.load %arg2[%c1_91, %c1_92, %c0_93] : memref<2x8x192xf32, #tpu.memory_space<vmem>>, vector<1x1x48xf32>
    %190 = vector.shape_cast %189 : vector<1x1x48xf32> to vector<1x48xf32>
    %191 = vector.broadcast %190 : vector<1x48xf32> to vector<16x48xf32>
    %192 = arith.addf %188, %191 : vector<16x48xf32>
    %193 = arith.addf %192, %136 : vector<16x48xf32>
    %c1_94 = arith.constant 1 : index
    %c4_95 = arith.constant 4 : index
    %c0_96 = arith.constant 0 : index
    %194 = vector.load %arg2[%c1_94, %c4_95, %c0_96] : memref<2x8x192xf32, #tpu.memory_space<vmem>>, vector<1x1x48xf32>
    %195 = vector.shape_cast %194 : vector<1x1x48xf32> to vector<1x48xf32>
    %c1_97 = arith.constant 1 : index
    %c5_98 = arith.constant 5 : index
    %c0_99 = arith.constant 0 : index
    %196 = vector.load %arg2[%c1_97, %c5_98, %c0_99] : memref<2x8x192xf32, #tpu.memory_space<vmem>>, vector<1x1x48xf32>
    %197 = vector.shape_cast %196 : vector<1x1x48xf32> to vector<1x48xf32>
    %cst_100 = arith.constant dense<0.000000e+00> : vector<16xf32>
    %198 = vector.multi_reduction <add>, %193, %cst_100 [1] : vector<16x48xf32> to vector<16xf32>
    %199 = vector.shape_cast %198 : vector<16xf32> to vector<16x1xf32>
    %200 = arith.mulf %193, %193 : vector<16x48xf32>
    %cst_101 = arith.constant dense<0.000000e+00> : vector<16xf32>
    %201 = vector.multi_reduction <add>, %200, %cst_101 [1] : vector<16x48xf32> to vector<16xf32>
    %202 = vector.shape_cast %201 : vector<16xf32> to vector<16x1xf32>
    %cst_102 = arith.constant 0.020833334 : f32
    %203 = vector.broadcast %cst_102 : f32 to vector<16x1xf32>
    %204 = arith.mulf %199, %203 : vector<16x1xf32>
    %cst_103 = arith.constant 0.020833334 : f32
    %205 = vector.broadcast %cst_103 : f32 to vector<16x1xf32>
    %206 = arith.mulf %202, %205 : vector<16x1xf32>
    %207 = arith.mulf %204, %204 : vector<16x1xf32>
    %208 = arith.subf %206, %207 : vector<16x1xf32>
    %209 = vector.broadcast %204 : vector<16x1xf32> to vector<16x48xf32>
    %210 = arith.subf %193, %209 : vector<16x48xf32>
    %cst_104 = arith.constant 9.99999974E-6 : f32
    %211 = vector.broadcast %cst_104 : f32 to vector<16x1xf32>
    %212 = arith.addf %208, %211 : vector<16x1xf32>
    %213 = math.rsqrt %212 : vector<16x1xf32>
    %214 = vector.broadcast %213 : vector<16x1xf32> to vector<16x48xf32>
    %215 = arith.mulf %210, %214 : vector<16x48xf32>
    %216 = vector.broadcast %195 : vector<1x48xf32> to vector<16x48xf32>
    %217 = arith.mulf %215, %216 : vector<16x48xf32>
    %218 = vector.broadcast %197 : vector<1x48xf32> to vector<16x48xf32>
    %219 = arith.addf %217, %218 : vector<16x48xf32>
    %c1_105 = arith.constant 1 : index
    %c0_106 = arith.constant 0 : index
    %c0_107 = arith.constant 0 : index
    %220 = vector.load %arg5[%c1_105, %c0_106, %c0_107] : memref<2x48x192xf32, #tpu.memory_space<vmem>>, vector<1x48x192xf32>
    %221 = vector.shape_cast %220 : vector<1x48x192xf32> to vector<48x192xf32>
    %cst_108 = arith.constant dense<0.000000e+00> : vector<16x192xf32>
    %222 = tpu.matmul %219, %221, %cst_108 {dimension_numbers = #tpu.dot_dimension_numbers<[1], [0], [0], [1], [0, 0, 1, 1], [], []>} : vector<16x48xf32>, vector<48x192xf32>, vector<16x192xf32> -> vector<16x192xf32>
    %c1_109 = arith.constant 1 : index
    %c2_110 = arith.constant 2 : index
    %c0_111 = arith.constant 0 : index
    %223 = vector.load %arg2[%c1_109, %c2_110, %c0_111] : memref<2x8x192xf32, #tpu.memory_space<vmem>>, vector<1x1x192xf32>
    %224 = vector.shape_cast %223 : vector<1x1x192xf32> to vector<1x192xf32>
    %225 = vector.broadcast %224 : vector<1x192xf32> to vector<16x192xf32>
    %226 = arith.addf %222, %225 : vector<16x192xf32>
    %cst_112 = arith.constant 0.000000e+00 : f32
    %227 = vector.broadcast %cst_112 : f32 to vector<16x192xf32>
    %228 = arith.maximumf %226, %227 : vector<16x192xf32>
    %c1_113 = arith.constant 1 : index
    %c0_114 = arith.constant 0 : index
    %c0_115 = arith.constant 0 : index
    %229 = vector.load %arg6[%c1_113, %c0_114, %c0_115] : memref<2x192x48xf32, #tpu.memory_space<vmem>>, vector<1x192x48xf32>
    %230 = vector.shape_cast %229 : vector<1x192x48xf32> to vector<192x48xf32>
    %cst_116 = arith.constant dense<0.000000e+00> : vector<16x48xf32>
    %231 = tpu.matmul %228, %230, %cst_116 {dimension_numbers = #tpu.dot_dimension_numbers<[1], [0], [0], [1], [0, 0, 1, 1], [], []>} : vector<16x192xf32>, vector<192x48xf32>, vector<16x48xf32> -> vector<16x48xf32>
    %c1_117 = arith.constant 1 : index
    %c3_118 = arith.constant 3 : index
    %c0_119 = arith.constant 0 : index
    %232 = vector.load %arg2[%c1_117, %c3_118, %c0_119] : memref<2x8x192xf32, #tpu.memory_space<vmem>>, vector<1x1x48xf32>
    %233 = vector.shape_cast %232 : vector<1x1x48xf32> to vector<1x48xf32>
    %234 = vector.broadcast %233 : vector<1x48xf32> to vector<16x48xf32>
    %235 = arith.addf %231, %234 : vector<16x48xf32>
    %236 = arith.addf %235, %219 : vector<16x48xf32>
    %c1_120 = arith.constant 1 : index
    %c6_121 = arith.constant 6 : index
    %c0_122 = arith.constant 0 : index
    %237 = vector.load %arg2[%c1_120, %c6_121, %c0_122] : memref<2x8x192xf32, #tpu.memory_space<vmem>>, vector<1x1x48xf32>
    %238 = vector.shape_cast %237 : vector<1x1x48xf32> to vector<1x48xf32>
    %c1_123 = arith.constant 1 : index
    %c7_124 = arith.constant 7 : index
    %c0_125 = arith.constant 0 : index
    %239 = vector.load %arg2[%c1_123, %c7_124, %c0_125] : memref<2x8x192xf32, #tpu.memory_space<vmem>>, vector<1x1x48xf32>
    %240 = vector.shape_cast %239 : vector<1x1x48xf32> to vector<1x48xf32>
    %cst_126 = arith.constant dense<0.000000e+00> : vector<16xf32>
    %241 = vector.multi_reduction <add>, %236, %cst_126 [1] : vector<16x48xf32> to vector<16xf32>
    %242 = vector.shape_cast %241 : vector<16xf32> to vector<16x1xf32>
    %243 = arith.mulf %236, %236 : vector<16x48xf32>
    %cst_127 = arith.constant dense<0.000000e+00> : vector<16xf32>
    %244 = vector.multi_reduction <add>, %243, %cst_127 [1] : vector<16x48xf32> to vector<16xf32>
    %245 = vector.shape_cast %244 : vector<16xf32> to vector<16x1xf32>
    %cst_128 = arith.constant 0.020833334 : f32
    %246 = vector.broadcast %cst_128 : f32 to vector<16x1xf32>
    %247 = arith.mulf %242, %246 : vector<16x1xf32>
    %cst_129 = arith.constant 0.020833334 : f32
    %248 = vector.broadcast %cst_129 : f32 to vector<16x1xf32>
    %249 = arith.mulf %245, %248 : vector<16x1xf32>
    %250 = arith.mulf %247, %247 : vector<16x1xf32>
    %251 = arith.subf %249, %250 : vector<16x1xf32>
    %252 = vector.broadcast %247 : vector<16x1xf32> to vector<16x48xf32>
    %253 = arith.subf %236, %252 : vector<16x48xf32>
    %cst_130 = arith.constant 9.99999974E-6 : f32
    %254 = vector.broadcast %cst_130 : f32 to vector<16x1xf32>
    %255 = arith.addf %251, %254 : vector<16x1xf32>
    %256 = math.rsqrt %255 : vector<16x1xf32>
    %257 = vector.broadcast %256 : vector<16x1xf32> to vector<16x48xf32>
    %258 = arith.mulf %253, %257 : vector<16x48xf32>
    %259 = vector.broadcast %238 : vector<1x48xf32> to vector<16x48xf32>
    %260 = arith.mulf %258, %259 : vector<16x48xf32>
    %261 = vector.broadcast %240 : vector<1x48xf32> to vector<16x48xf32>
    %262 = arith.addf %260, %261 : vector<16x48xf32>
    %263 = vector.extract_strided_slice %262 {offsets = [7, 0], sizes = [1, 48], strides = [1, 1]} : vector<16x48xf32> to vector<1x48xf32>
    %264 = vector.extract_strided_slice %262 {offsets = [15, 0], sizes = [1, 48], strides = [1, 1]} : vector<16x48xf32> to vector<1x48xf32>
    %265 = tpu.concatenate %263, %264 in 0 : vector<1x48xf32>, vector<1x48xf32> -> vector<2x48xf32>
    %c272 = arith.constant 272 : index
    %c0_131 = arith.constant 0 : index
    %266 = vector.load %arg1[%c272, %c0_131] : memref<321x96xf32, #tpu.memory_space<vmem>>, vector<48x64xf32>
    %cst_132 = arith.constant dense<0.000000e+00> : vector<2x64xf32>
    %267 = tpu.matmul %265, %266, %cst_132 {dimension_numbers = #tpu.dot_dimension_numbers<[1], [0], [0], [1], [0, 0, 1, 1], [], []>} : vector<2x48xf32>, vector<48x64xf32>, vector<2x64xf32> -> vector<2x64xf32>
    %c320 = arith.constant 320 : index
    %c0_133 = arith.constant 0 : index
    %268 = vector.load %arg1[%c320, %c0_133] : memref<321x96xf32, #tpu.memory_space<vmem>>, vector<1x64xf32>
    %269 = vector.broadcast %268 : vector<1x64xf32> to vector<2x64xf32>
    %270 = arith.addf %267, %269 : vector<2x64xf32>
    %c0_134 = arith.constant 0 : index
    %c0_135 = arith.constant 0 : index
    %271 = vector.load %arg7[%c0_134, %c0_135] : memref<2x64xf32, #tpu.memory_space<vmem>>, vector<2x64xf32>
    tpu.vector_store %arg7[%c0_134, %c0_135], %270 {strides = array<i32>} : memref<2x64xf32, #tpu.memory_space<vmem>>, vector<2x64xf32>,
    return
  }
}

</mosaic_0001>

<llo_original>
// kernel: tpu_custom_call.1
$region0: #{tpu_custom_call.1}
  #allocation0 [shape = 'u32[]', space=smem, size = 0x4, offset = 0x4, fixed_abs, tag = 'smem constant byte address 0x4 - core index']
  #allocation1 [shape = 'u32[144,128]{1,0:T(1,128)}', space=vmem, size = 0x12000, scoped, tag = 'internal scratch']
  %s0 = inlined_call_operand.vmem [shape: s32[16,1], index: 0, kind: input, shape index: {}]
  %s1 = inlined_call_operand.vmem [shape: f32[321,96], index: 1, kind: input, shape index: {}]
  %s2 = inlined_call_operand.vmem [shape: f32[2,8,192], index: 2, kind: input, shape index: {}]
  %s3 = inlined_call_operand.vmem [shape: f32[2,48,144], index: 3, kind: input, shape index: {}]
  %s4 = inlined_call_operand.vmem [shape: f32[2,48,48], index: 4, kind: input, shape index: {}]
  %s5 = inlined_call_operand.vmem [shape: f32[2,48,192], index: 5, kind: input, shape index: {}]
  %s6 = inlined_call_operand.vmem [shape: f32[2,192,48], index: 6, kind: input, shape index: {}]
  %s7 = inlined_call_operand.hbm [shape: f32[2,64], index: 7, kind: output, shape index: {}]
  %s8 = sld [smem:[#allocation0]]
  $region38: #{tpu_custom_call.1} parent=0
    _
  %s10 = ssub.s32 1, %s8
  %s11 = scalar_select 0, %s10, %s8
  $region1: #{tpu_custom_call.1} parent=0
    #allocation2 [shape = 'u8[1024]{0}', space=vmem, size = 0x400, scoped, tag = 'output window, operand 0, single buffered']
    #allocation3 [shape = 's32[1]{0}', space=sflag, size = 0x4, scoped, tag = 'scoped memory for tpu_custom_call.1']
    %12 = vsyncpa [#allocation3], 0
    // Predicated region
    $region2: #{tpu_custom_call.1} parent=1 // pred_check
      _
    $region3: #{tpu_custom_call.1} parent=1 // pred_check_branch
      %14 = sbr.rel (0) target = $region5
    $region4: #{tpu_custom_call.1} parent=1 // pred_region
      _
    $region5: #{tpu_custom_call.1} parent=1 // pred_fallthru
      _
    // Predicated region
    $region6: #{tpu_custom_call.1} parent=1 // pred_check
      _
    $region7: #{tpu_custom_call.1} parent=1 // pred_check_branch
      %16 = sbr.rel (0) target = $region9
    $region8: #{tpu_custom_call.1} parent=1 // pred_region
      _
    $region9: #{tpu_custom_call.1} parent=1 // pred_fallthru
      _
    // Predicated region
    $region10: #{tpu_custom_call.1} parent=1 // pred_check
      _
    $region11: #{tpu_custom_call.1} parent=1 // pred_check_branch
      %18 = sbr.rel (0) target = $region13
    $region12: #{tpu_custom_call.1} parent=1 // pred_region
      _
    $region13: #{tpu_custom_call.1} parent=1 // pred_fallthru
      _
    // Predicated region
    $region14: #{tpu_custom_call.1} parent=1 // pred_check
      _
    $region15: #{tpu_custom_call.1} parent=1 // pred_check_branch
      %20 = sbr.rel (0) target = $region17
    $region16: #{tpu_custom_call.1} parent=1 // pred_region
      _
    $region17: #{tpu_custom_call.1} parent=1 // pred_fallthru
      _
    // Predicated region
    $region18: #{tpu_custom_call.1} parent=1 // pred_check
      _
    $region19: #{tpu_custom_call.1} parent=1 // pred_check_branch
      %22 = sbr.rel (0) target = $region21
    $region20: #{tpu_custom_call.1} parent=1 // pred_region
      _
    $region21: #{tpu_custom_call.1} parent=1 // pred_fallthru
      _
    // Predicated region
    $region22: #{tpu_custom_call.1} parent=1 // pred_check
      _
    $region23: #{tpu_custom_call.1} parent=1 // pred_check_branch
      %24 = sbr.rel (0) target = $region25
    $region24: #{tpu_custom_call.1} parent=1 // pred_region
      _
    $region25: #{tpu_custom_call.1} parent=1 // pred_fallthru
      _
    // Predicated region
    $region26: #{tpu_custom_call.1} parent=1 // pred_check
      _
    $region27: #{tpu_custom_call.1} parent=1 // pred_check_branch
      %26 = sbr.rel (0) target = $region29
    $region28: #{tpu_custom_call.1} parent=1 // pred_region
      _
    $region29: #{tpu_custom_call.1} parent=1 // pred_fallthru
      _
    %v27 = vlaneseq
    %v28 = vand.u32 %v27, 127
    %v29 = vld [vmem:[%s0] sm:$0xff]
    %v30 = vld [vmem:[%s0 + $0x8] sm:$0xff]
    %31 = vset.pattern.permute.xlu0 0
    %32 = vperm.xlu0 %31, %v29
    %v33 = vpop.permute.xlu0 %32
    %34 = vset.pattern.permute.xlu0 0
    %35 = vperm.xlu0 %34, %v30
    %v36 = vpop.permute.xlu0 %35
    %vm37 = vcmp.eq.s32.totalorder %v28, %v33
    %vm38 = vcmp.eq.s32.totalorder %v28, %v36
    %v39 = vsel %vm37, 1.0, 0.0
    %v40 = vsel %vm38, 1.0, 0.0
    %v41 = vld [vmem:[%s1] sm:$0xff]
    %v42 = vld [vmem:[%s1 + $0x8] sm:$0xff]
    %v43 = vld [vmem:[%s1 + $0x10] sm:$0xff]
    %v44 = vld [vmem:[%s1 + $0x18] sm:$0xff]
    %v45 = vld [vmem:[%s1 + $0x20] sm:$0xff]
    %v46 = vld [vmem:[%s1 + $0x28] sm:$0xff]
    %v47 = vld [vmem:[%s1 + $0x30] sm:$0xff]
    %v48 = vld [vmem:[%s1 + $0x38] sm:$0xff]
    %v49 = vld [vmem:[%s1 + $0x40] sm:$0xff]
    %v50 = vld [vmem:[%s1 + $0x48] sm:$0xff]
    %vm51 = vcmask 523264
    %v53 = vsel %vm51, %v39, 0
    %v56 = vsel %vm51, %v40, 0
    %58 = vmatprep.subr.mxu0 0.0
    %59 = vmatpush1.msra.mxu0 0.0
    %60 = vmatprep.subr.mxu0 0.0
    %61 = vmatpush1.msra.mxu0 0.0
    %62 = vmatprep.subr.mxu0 0.0
    %63 = vmatpush1.msra.mxu0 0.0
    %64 = vmatprep.subr.mxu0 0.0
    %65 = vmatpush1.msra.mxu0 0.0
    %66 = vmatprep.subr.mxu0 0.0
    %67 = vmatpush1.msra.mxu0 0.0
    %68 = vmatprep.subr.mxu0 0.0
    %69 = vmatpush1.msra.mxu0 0.0
    %70 = vmatprep.subr.mxu0 0.0
    %71 = vmatpush1.msra.mxu0 0.0
    %72 = vmatprep.subr.mxu0 0.0
    %73 = vmatpush1.msra.mxu0 0.0
    %74 = vmatprep.subr.mxu0 0.0
    %75 = vmatpush1.msra.mxu0 %v48
    %76 = vmatprep.subr.mxu0 0.0
    %77 = vmatpush1.msra.mxu0 %v47
    %78 = vmatprep.subr.mxu0 0.0
    %79 = vmatpush1.msra.mxu0 %v46
    %80 = vmatprep.subr.mxu0 0.0
    %81 = vmatpush1.msra.mxu0 %v45
    %82 = vmatprep.subr.mxu0 0.0
    %83 = vmatpush1.msra.mxu0 %v44
    %84 = vmatprep.subr.mxu0 0.0
    %85 = vmatpush1.msra.mxu0 %v43
    %86 = vmatprep.subr.mxu0 0.0
    %87 = vmatpush1.msra.mxu0 %v42
    %88 = vmatprep.subr.mxu0 0.0
    %89 = vmatpush1.msra.mxu0 %v41
    %90 = vmatprep.subr.mxu0 0.0
    %91 = vmatpush2.msra.mxu0 0.0
    %92 = vmatprep.subr.mxu0 0.0
    %93 = vmatpush2.msra.mxu0 0.0
    %94 = vmatprep.subr.mxu0 0.0
    %95 = vmatpush2.msra.mxu0 0.0
    %96 = vmatprep.subr.mxu0 0.0
    %97 = vmatpush2.msra.mxu0 0.0
    %98 = vmatprep.subr.mxu0 0.0
    %99 = vmatpush2.msra.mxu0 0.0
    %100 = vmatprep.subr.mxu0 0.0
    %101 = vmatpush2.msra.mxu0 0.0
    %102 = vmatprep.subr.mxu0 0.0
    %103 = vmatpush2.msra.mxu0 0.0
    %104 = vmatprep.subr.mxu0 0.0
    %105 = vmatpush2.msra.mxu0 0.0
    %106 = vmatprep.subr.mxu0 0.0
    %107 = vmatpush2.msra.mxu0 0.0
    %108 = vmatprep.subr.mxu0 0.0
    %109 = vmatpush2.msra.mxu0 0.0
    %110 = vmatprep.subr.mxu0 0.0
    %111 = vmatpush2.msra.mxu0 0.0
    %112 = vmatprep.subr.mxu0 0.0
    %113 = vmatpush2.msra.mxu0 0.0
    %114 = vmatprep.subr.mxu0 0.0
    %115 = vmatpush2.msra.mxu0 0.0
    %116 = vmatprep.subr.mxu0 0.0
    %117 = vmatpush2.msra.mxu0 0.0
    %118 = vmatprep.subr.mxu0 0.0
    %119 = vmatpush2.msra.mxu0 0.0
    %120 = vmatprep.subr.mxu0 0.0
    %121 = vmatpush2.msra.mxu0 0.0
    %122 = vmatprep.mubr.f32.mxu0 0.0
    %123 = vmatmul.mubr.f32.gmra.mxu0 %v53
    %v124 = vpop.f32.mrf.mxu0
    %v125 = vadd.f32 %v49, %v124
    %v126 = vpop.f32.mrf.mxu0
    %127 = vmatprep.mubr.f32.mxu0 0.0
    %128 = vmatmul.mubr.f32.gmra.mxu0 %v56
    %v129 = vpop.f32.mrf.mxu0
    %v130 = vadd.f32 %v50, %v129
    %v131 = vpop.f32.mrf.mxu0
    %132 = vdwg.mxu0
    %v133 = vld [vmem:[%s3] sm:$0xff]
    %v134 = vld [vmem:[%s3 + $0x8] sm:$0xff]
    %v135 = vld [vmem:[%s3 + $0x10] sm:$0xff]
    %v136 = vld [vmem:[%s3 + $0x18] sm:$0xff]
    %v137 = vld [vmem:[%s3 + $0x20] sm:$0xff]
    %v138 = vld [vmem:[%s3 + $0x28] sm:$0xff]
    %v139 = vld [vmem:[%s3 + $0x30] sm:$0xff]
    %v140 = vld [vmem:[%s3 + $0x38] sm:$0xff]
    %v141 = vld [vmem:[%s3 + $0x40] sm:$0xff]
    %v142 = vld [vmem:[%s3 + $0x48] sm:$0xff]
    %v143 = vld [vmem:[%s3 + $0x50] sm:$0xff]
    %v144 = vld [vmem:[%s3 + $0x58] sm:$0xff]
    %v145 = vld [vmem:[%s2] ss:$8 sm:$0x3]
    %v147 = vlaneseq
    %v148 = vshrl.u32 %v147, 7
    %v149 = vsub.s32 0, %v148
    %v150 = vrot.slane %v145, %v149
    %v151 = vlaneseq
    %v152 = vshrl.u32 %v151, 7
    %v153 = vsub.s32 1, %v152
    %v154 = vrot.slane %v145, %v153
    %vm157 = vcmask 392192
    %v159 = vsel %vm157, %v125, 0
    %v162 = vsel %vm157, %v130, 0
    %164 = vmatprep.subr.mxu0 0.0
    %165 = vmatpush1.msra.mxu0 0.0
    %166 = vmatprep.subr.mxu0 0.0
    %167 = vmatpush1.msra.mxu0 0.0
    %168 = vmatprep.subr.mxu0 0.0
    %169 = vmatpush1.msra.mxu0 0.0
    %170 = vmatprep.subr.mxu0 0.0
    %171 = vmatpush1.msra.mxu0 0.0
    %172 = vmatprep.subr.mxu0 0.0
    %173 = vmatpush1.msra.mxu0 0.0
    %174 = vmatprep.subr.mxu0 0.0
    %175 = vmatpush1.msra.mxu0 0.0
    %176 = vmatprep.subr.mxu0 0.0
    %177 = vmatpush1.msra.mxu0 0.0
    %178 = vmatprep.subr.mxu0 0.0
    %179 = vmatpush1.msra.mxu0 0.0
    %180 = vmatprep.subr.mxu0 0.0
    %181 = vmatpush1.msra.mxu0 0.0
    %182 = vmatprep.subr.mxu0 0.0
    %183 = vmatpush1.msra.mxu0 0.0
    %184 = vmatprep.subr.mxu0 %v144
    %185 = vmatpush1.msra.mxu0 %v143
    %186 = vmatprep.subr.mxu0 %v142
    %187 = vmatpush1.msra.mxu0 %v141
    %188 = vmatprep.subr.mxu0 %v140
    %189 = vmatpush1.msra.mxu0 %v139
    %190 = vmatprep.subr.mxu0 %v138
    %191 = vmatpush1.msra.mxu0 %v137
    %192 = vmatprep.subr.mxu0 %v136
    %193 = vmatpush1.msra.mxu0 %v135
    %194 = vmatprep.subr.mxu0 %v134
    %195 = vmatpush1.msra.mxu0 %v133
    %196 = vmatprep.subr.mxu0 0.0
    %197 = vmatpush2.msra.mxu0 0.0
    %198 = vmatprep.subr.mxu0 0.0
    %199 = vmatpush2.msra.mxu0 0.0
    %200 = vmatprep.subr.mxu0 0.0
    %201 = vmatpush2.msra.mxu0 0.0
    %202 = vmatprep.subr.mxu0 0.0
    %203 = vmatpush2.msra.mxu0 0.0
    %204 = vmatprep.subr.mxu0 0.0
    %205 = vmatpush2.msra.mxu0 0.0
    %206 = vmatprep.subr.mxu0 0.0
    %207 = vmatpush2.msra.mxu0 0.0
    %208 = vmatprep.subr.mxu0 0.0
    %209 = vmatpush2.msra.mxu0 0.0
    %210 = vmatprep.subr.mxu0 0.0
    %211 = vmatpush2.msra.mxu0 0.0
    %212 = vmatprep.subr.mxu0 0.0
    %213 = vmatpush2.msra.mxu0 0.0
    %214 = vmatprep.subr.mxu0 0.0
    %215 = vmatpush2.msra.mxu0 0.0
    %216 = vmatprep.subr.mxu0 0.0
    %217 = vmatpush2.msra.mxu0 0.0
    %218 = vmatprep.subr.mxu0 0.0
    %219 = vmatpush2.msra.mxu0 0.0
    %220 = vmatprep.subr.mxu0 0.0
    %221 = vmatpush2.msra.mxu0 0.0
    %222 = vmatprep.subr.mxu0 0.0
    %223 = vmatpush2.msra.mxu0 0.0
    %224 = vmatprep.subr.mxu0 0.0
    %225 = vmatpush2.msra.mxu0 0.0
    %226 = vmatprep.subr.mxu0 0.0
    %227 = vmatpush2.msra.mxu0 0.0
    %228 = vmatprep.mubr.f32.mxu0 0.0
    %229 = vmatmul.mubr.f32.gmra.mxu0 %v159
    %v230 = vpop.f32.mrf.mxu0
    %v231 = vadd.f32 %v150, %v230
    %v232 = vpop.f32.mrf.mxu0
    %v233 = vadd.f32 %v154, %v232
    %234 = vmatprep.mubr.f32.mxu0 0.0
    %235 = vmatmul.mubr.f32.gmra.mxu0 %v162
    %v236 = vpop.f32.mrf.mxu0
    %v237 = vadd.f32 %v150, %v236
    %v238 = vpop.f32.mrf.mxu0
    %v239 = vadd.f32 %v154, %v238
    %240 = vdwg.mxu0
    %v241 = vld [vmem:[%s1 + $0x50] sm:$0xff]
    %v242 = vld [vmem:[%s1 + $0x58] sm:$0xff]
    %v243 = vld [vmem:[%s1 + $0x60] sm:$0xff]
    %v244 = vld [vmem:[%s1 + $0x68] sm:$0xff]
    %v245 = vld [vmem:[%s1 + $0x70] sm:$0xff]
    %v246 = vld [vmem:[%s1 + $0x78] sm:$0xff]
    %v247 = vld [vmem:[%s1 + $0x80] sm:$0xff]
    %v248 = vld [vmem:[%s1 + $0x88] sm:$0xff]
    %v249 = vld [vmem:[%s1 + $0x90] sm:$0xff]
    %v250 = vld [vmem:[%s1 + $0x98] sm:$0xff]
    %v251 = vld [vmem:[%s1 + $0xa0] sm:$0xff]
    %v252 = vld [vmem:[%s1 + $0xa8] sm:$0xff]
    %265 = vrot.lane.b32.xlu0 %v241, 48
    %v266 = vpop.permute.xlu0 %265
    %267 = vrot.lane.b32.xlu0 %v242, 48
    %v268 = vpop.permute.xlu0 %267
    %269 = vrot.lane.b32.xlu0 %v243, 48
    %v270 = vpop.permute.xlu0 %269
    %271 = vrot.lane.b32.xlu0 %v244, 48
    %v272 = vpop.permute.xlu0 %271
    %273 = vrot.lane.b32.xlu0 %v245, 48
    %v274 = vpop.permute.xlu0 %273
    %275 = vrot.lane.b32.xlu0 %v246, 48
    %v276 = vpop.permute.xlu0 %275
    %277 = vrot.lane.b32.xlu0 %v247, 48
    %v278 = vpop.permute.xlu0 %277
    %279 = vrot.lane.b32.xlu0 %v248, 48
    %v280 = vpop.permute.xlu0 %279
    %281 = vrot.lane.b32.xlu0 %v249, 48
    %v282 = vpop.permute.xlu0 %281
    %283 = vrot.lane.b32.xlu0 %v250, 48
    %v284 = vpop.permute.xlu0 %283
    %285 = vrot.lane.b32.xlu0 %v251, 48
    %v286 = vpop.permute.xlu0 %285
    %287 = vrot.lane.b32.xlu0 %v252, 48
    %v288 = vpop.permute.xlu0 %287
    %v301 = vmul.f32 %v231, %v266
    %v302 = vmul.f32 %v231, %v268
    %v303 = vmul.f32 %v231, %v270
    %v304 = vmul.f32 %v231, %v272
    %v305 = vmul.f32 %v231, %v274
    %v306 = vmul.f32 %v231, %v276
    %v307 = vmul.f32 %v231, %v278
    %v308 = vmul.f32 %v231, %v280
    %v309 = vmul.f32 %v231, %v282
    %v310 = vmul.f32 %v231, %v284
    %v311 = vmul.f32 %v231, %v286
    %v312 = vmul.f32 %v231, %v288
    %313 = vrot.lane.b32.xlu0 %v241, 96
    %v314 = vpop.permute.xlu0 %313
    %315 = vrot.lane.b32.xlu0 %v242, 96
    %v316 = vpop.permute.xlu0 %315
    %317 = vrot.lane.b32.xlu0 %v243, 96
    %v318 = vpop.permute.xlu0 %317
    %319 = vrot.lane.b32.xlu0 %v244, 96
    %v320 = vpop.permute.xlu0 %319
    %321 = vrot.lane.b32.xlu0 %v245, 96
    %v322 = vpop.permute.xlu0 %321
    %323 = vrot.lane.b32.xlu0 %v246, 96
    %v324 = vpop.permute.xlu0 %323
    %325 = vrot.lane.b32.xlu0 %v247, 96
    %v326 = vpop.permute.xlu0 %325
    %327 = vrot.lane.b32.xlu0 %v248, 96
    %v328 = vpop.permute.xlu0 %327
    %329 = vrot.lane.b32.xlu0 %v249, 96
    %v330 = vpop.permute.xlu0 %329
    %331 = vrot.lane.b32.xlu0 %v250, 96
    %v332 = vpop.permute.xlu0 %331
    %333 = vrot.lane.b32.xlu0 %v251, 96
    %v334 = vpop.permute.xlu0 %333
    %335 = vrot.lane.b32.xlu0 %v252, 96
    %v336 = vpop.permute.xlu0 %335
    %v349 = vmul.f32 %v231, %v314
    %v350 = vmul.f32 %v233, %v314
    %v351 = vmul.f32 %v231, %v316
    %v352 = vmul.f32 %v233, %v316
    %v353 = vmul.f32 %v231, %v318
    %v354 = vmul.f32 %v233, %v318
    %v355 = vmul.f32 %v231, %v320
    %v356 = vmul.f32 %v233, %v320
    %v357 = vmul.f32 %v231, %v322
    %v358 = vmul.f32 %v233, %v322
    %v359 = vmul.f32 %v231, %v324
    %v360 = vmul.f32 %v233, %v324
    %v361 = vmul.f32 %v231, %v326
    %v362 = vmul.f32 %v233, %v326
    %v363 = vmul.f32 %v231, %v328
    %v364 = vmul.f32 %v233, %v328
    %v365 = vmul.f32 %v231, %v330
    %v366 = vmul.f32 %v233, %v330
    %v367 = vmul.f32 %v231, %v332
    %v368 = vmul.f32 %v233, %v332
    %v369 = vmul.f32 %v231, %v334
    %v370 = vmul.f32 %v233, %v334
    %v371 = vmul.f32 %v231, %v336
    %v372 = vmul.f32 %v233, %v336
    %385 = vrot.lane.b32.xlu0 %v301, 80
    %v386 = vpop.permute.xlu0 %385
    %387 = vrot.lane.b32.xlu0 %v302, 80
    %v388 = vpop.permute.xlu0 %387
    %389 = vrot.lane.b32.xlu0 %v303, 80
    %v390 = vpop.permute.xlu0 %389
    %391 = vrot.lane.b32.xlu0 %v304, 80
    %v392 = vpop.permute.xlu0 %391
    %393 = vrot.lane.b32.xlu0 %v305, 80
    %v394 = vpop.permute.xlu0 %393
    %395 = vrot.lane.b32.xlu0 %v306, 80
    %v396 = vpop.permute.xlu0 %395
    %397 = vrot.lane.b32.xlu0 %v307, 80
    %v398 = vpop.permute.xlu0 %397
    %399 = vrot.lane.b32.xlu0 %v308, 80
    %v400 = vpop.permute.xlu0 %399
    %401 = vrot.lane.b32.xlu0 %v309, 80
    %v402 = vpop.permute.xlu0 %401
    %403 = vrot.lane.b32.xlu0 %v310, 80
    %v404 = vpop.permute.xlu0 %403
    %405 = vrot.lane.b32.xlu0 %v311, 80
    %v406 = vpop.permute.xlu0 %405
    %407 = vrot.lane.b32.xlu0 %v312, 80
    %v408 = vpop.permute.xlu0 %407
    %v410 = vsel %vm157, %v231, 0
    %v412 = vsel %vm157, %v386, 0
    %v414 = vsel %vm157, %v388, 0
    %v416 = vsel %vm157, %v390, 0
    %v418 = vsel %vm157, %v392, 0
    %v420 = vsel %vm157, %v394, 0
    %v422 = vsel %vm157, %v396, 0
    %v424 = vsel %vm157, %v398, 0
    %v426 = vsel %vm157, %v400, 0
    %v428 = vsel %vm157, %v402, 0
    %v430 = vsel %vm157, %v404, 0
    %v432 = vsel %vm157, %v406, 0
    %v434 = vsel %vm157, %v408, 0
    %436 = vmatprep.subr.mxu0 0.0
    %437 = vmatpush1.xpose.msra.mxu0 0.0
    %438 = vmatprep.subr.mxu0 0.0
    %439 = vmatpush1.xpose.msra.mxu0 0.0
    %440 = vmatprep.subr.mxu0 0.0
    %441 = vmatpush1.xpose.msra.mxu0 0.0
    %442 = vmatprep.subr.mxu0 0.0
    %443 = vmatpush1.xpose.msra.mxu0 0.0
    %444 = vmatprep.subr.mxu0 0.0
    %445 = vmatpush1.xpose.msra.mxu0 %v434
    %446 = vmatprep.subr.mxu0 0.0
    %447 = vmatpush1.xpose.msra.mxu0 %v432
    %448 = vmatprep.subr.mxu0 0.0
    %449 = vmatpush1.xpose.msra.mxu0 %v430
    %450 = vmatprep.subr.mxu0 0.0
    %451 = vmatpush1.xpose.msra.mxu0 %v428
    %452 = vmatprep.subr.mxu0 0.0
    %453 = vmatpush1.xpose.msra.mxu0 %v426
    %454 = vmatprep.subr.mxu0 0.0
    %455 = vmatpush1.xpose.msra.mxu0 %v424
    %456 = vmatprep.subr.mxu0 0.0
    %457 = vmatpush1.xpose.msra.mxu0 %v422
    %458 = vmatprep.subr.mxu0 0.0
    %459 = vmatpush1.xpose.msra.mxu0 %v420
    %460 = vmatprep.subr.mxu0 0.0
    %461 = vmatpush1.xpose.msra.mxu0 %v418
    %462 = vmatprep.subr.mxu0 0.0
    %463 = vmatpush1.xpose.msra.mxu0 %v416
    %464 = vmatprep.subr.mxu0 0.0
    %465 = vmatpush1.xpose.msra.mxu0 %v414
    %466 = vmatprep.subr.mxu0 0.0
    %467 = vmatpush1.xpose.msra.mxu0 %v412
    %468 = vmatprep.subr.mxu0 0.0
    %469 = vmatpush2.xpose.msra.mxu0 0.0
    %470 = vmatprep.subr.mxu0 0.0
    %471 = vmatpush2.xpose.msra.mxu0 0.0
    %472 = vmatprep.subr.mxu0 0.0
    %473 = vmatpush2.xpose.msra.mxu0 0.0
    %474 = vmatprep.subr.mxu0 0.0
    %475 = vmatpush2.xpose.msra.mxu0 0.0
    %476 = vmatprep.subr.mxu0 0.0
    %477 = vmatpush2.xpose.msra.mxu0 0.0
    %478 = vmatprep.subr.mxu0 0.0
    %479 = vmatpush2.xpose.msra.mxu0 0.0
    %480 = vmatprep.subr.mxu0 0.0
    %481 = vmatpush2.xpose.msra.mxu0 0.0
    %482 = vmatprep.subr.mxu0 0.0
    %483 = vmatpush2.xpose.msra.mxu0 0.0
    %484 = vmatprep.subr.mxu0 0.0
    %485 = vmatpush2.xpose.msra.mxu0 0.0
    %486 = vmatprep.subr.mxu0 0.0
    %487 = vmatpush2.xpose.msra.mxu0 0.0
    %488 = vmatprep.subr.mxu0 0.0
    %489 = vmatpush2.xpose.msra.mxu0 0.0
    %490 = vmatprep.subr.mxu0 0.0
    %491 = vmatpush2.xpose.msra.mxu0 0.0
    %492 = vmatprep.subr.mxu0 0.0
    %493 = vmatpush2.xpose.msra.mxu0 0.0
    %494 = vmatprep.subr.mxu0 0.0
    %495 = vmatpush2.xpose.msra.mxu0 0.0
    %496 = vmatprep.subr.mxu0 0.0
    %497 = vmatpush2.xpose.msra.mxu0 0.0
    %498 = vmatprep.subr.mxu0 0.0
    %499 = vmatpush2.xpose.msra.mxu0 0.0
    %500 = vmatprep.mubr.f32.mxu0 0.0
    %501 = vmatmul.mubr.f32.gmra.mxu0 %v410
    %v502 = vpop.f32.mrf.mxu0
    %v503 = vadd.f32 0.0, %v502
    %v504 = vpop.f32.mrf.mxu0
    %505 = vdwg.mxu0
    %vm506 = vcmask 785408
    %v507 = vsel %vm506, %v503, -inf
    %508 = vmax.xlane.f32.xlu0 %v507
    %v509 = vpop.xlane.xlu0 %508
    %v510 = vsub.f32 %v503, %v509
    %v511 = vmul.f32 %v510, 1.442695
    %v512 = vpow.pop %v511
    %v513 = vld [vmem:[%s1 + $0xb0] sm:$0xff]
    %v514 = vld [vmem:[%s1 + $0xb8] sm:$0xff]
    %v515 = vld [vmem:[%s1 + $0xc0] sm:$0xff]
    %v516 = vld [vmem:[%s1 + $0xc8] sm:$0xff]
    %v517 = vld [vmem:[%s1 + $0xd0] sm:$0xff]
    %v518 = vld [vmem:[%s1 + $0xd8] sm:$0xff]
    %v519 = vld [vmem:[%s1 + $0xe0] sm:$0xff]
    %v520 = vld [vmem:[%s1 + $0xe8] sm:$0xff]
    %v521 = vld [vmem:[%s1 + $0xf0] sm:$0xff]
    %v522 = vld [vmem:[%s1 + $0xf8] sm:$0xff]
    %v523 = vld [vmem:[%s1 + $0x100] sm:$0xff]
    %v524 = vld [vmem:[%s1 + $0x108] sm:$0xff]
    %v526 = vsel %vm506, %v512, 0
    %528 = vmatprep.subr.mxu0 0.0
    %529 = vmatpush1.msra.mxu0 0.0
    %530 = vmatprep.subr.mxu0 0.0
    %531 = vmatpush1.msra.mxu0 0.0
    %532 = vmatprep.subr.mxu0 0.0
    %533 = vmatpush1.msra.mxu0 0.0
    %534 = vmatprep.subr.mxu0 0.0
    %535 = vmatpush1.msra.mxu0 0.0
    %536 = vmatprep.subr.mxu0 0.0
    %537 = vmatpush1.msra.mxu0 %v524
    %538 = vmatprep.subr.mxu0 0.0
    %539 = vmatpush1.msra.mxu0 %v523
    %540 = vmatprep.subr.mxu0 0.0
    %541 = vmatpush1.msra.mxu0 %v522
    %542 = vmatprep.subr.mxu0 0.0
    %543 = vmatpush1.msra.mxu0 %v521
    %544 = vmatprep.subr.mxu0 0.0
    %545 = vmatpush1.msra.mxu0 %v520
    %546 = vmatprep.subr.mxu0 0.0
    %547 = vmatpush1.msra.mxu0 %v519
    %548 = vmatprep.subr.mxu0 0.0
    %549 = vmatpush1.msra.mxu0 %v518
    %550 = vmatprep.subr.mxu0 0.0
    %551 = vmatpush1.msra.mxu0 %v517
    %552 = vmatprep.subr.mxu0 0.0
    %553 = vmatpush1.msra.mxu0 %v516
    %554 = vmatprep.subr.mxu0 0.0
    %555 = vmatpush1.msra.mxu0 %v515
    %556 = vmatprep.subr.mxu0 0.0
    %557 = vmatpush1.msra.mxu0 %v514
    %558 = vmatprep.subr.mxu0 0.0
    %559 = vmatpush1.msra.mxu0 %v513
    %560 = vmatprep.subr.mxu0 0.0
    %561 = vmatpush2.msra.mxu0 0.0
    %562 = vmatprep.subr.mxu0 0.0
    %563 = vmatpush2.msra.mxu0 0.0
    %564 = vmatprep.subr.mxu0 0.0
    %565 = vmatpush2.msra.mxu0 0.0
    %566 = vmatprep.subr.mxu0 0.0
    %567 = vmatpush2.msra.mxu0 0.0
    %568 = vmatprep.subr.mxu0 0.0
    %569 = vmatpush2.msra.mxu0 0.0
    %570 = vmatprep.subr.mxu0 0.0
    %571 = vmatpush2.msra.mxu0 0.0
    %572 = vmatprep.subr.mxu0 0.0
    %573 = vmatpush2.msra.mxu0 0.0
    %574 = vmatprep.subr.mxu0 0.0
    %575 = vmatpush2.msra.mxu0 0.0
    %576 = vmatprep.subr.mxu0 0.0
    %577 = vmatpush2.msra.mxu0 0.0
    %578 = vmatprep.subr.mxu0 0.0
    %579 = vmatpush2.msra.mxu0 0.0
    %580 = vmatprep.subr.mxu0 0.0
    %581 = vmatpush2.msra.mxu0 0.0
    %582 = vmatprep.subr.mxu0 0.0
    %583 = vmatpush2.msra.mxu0 0.0
    %584 = vmatprep.subr.mxu0 0.0
    %585 = vmatpush2.msra.mxu0 0.0
    %586 = vmatprep.subr.mxu0 0.0
    %587 = vmatpush2.msra.mxu0 0.0
    %588 = vmatprep.subr.mxu0 0.0
    %589 = vmatpush2.msra.mxu0 0.0
    %590 = vmatprep.subr.mxu0 0.0
    %591 = vmatpush2.msra.mxu0 0.0
    %592 = vmatprep.mubr.f32.mxu0 0.0
    %593 = vmatmul.mubr.f32.gmra.mxu0 %v526
    %v594 = vpop.f32.mrf.mxu0
    %v595 = vadd.f32 0.0, %v594
    %v596 = vpop.f32.mrf.mxu0
    %597 = vdwg.mxu0
    %v598 = vrcp.pop %v595
    %v599 = vmul.f32 %v512, %v598
    %624 = vrot.lane.b32.xlu0 %v349, 32
    %v625 = vpop.permute.xlu0 %624
    %626 = vrot.lane.b32.xlu0 %v350, 32
    %v627 = vpop.permute.xlu0 %626
    %628 = vrot.lane.b32.xlu0 %v351, 32
    %v629 = vpop.permute.xlu0 %628
    %630 = vrot.lane.b32.xlu0 %v352, 32
    %v631 = vpop.permute.xlu0 %630
    %632 = vrot.lane.b32.xlu0 %v353, 32
    %v633 = vpop.permute.xlu0 %632
    %634 = vrot.lane.b32.xlu0 %v354, 32
    %v635 = vpop.permute.xlu0 %634
    %636 = vrot.lane.b32.xlu0 %v355, 32
    %v637 = vpop.permute.xlu0 %636
    %638 = vrot.lane.b32.xlu0 %v356, 32
    %v639 = vpop.permute.xlu0 %638
    %640 = vrot.lane.b32.xlu0 %v357, 32
    %v641 = vpop.permute.xlu0 %640
    %642 = vrot.lane.b32.xlu0 %v358, 32
    %v643 = vpop.permute.xlu0 %642
    %644 = vrot.lane.b32.xlu0 %v359, 32
    %v645 = vpop.permute.xlu0 %644
    %646 = vrot.lane.b32.xlu0 %v360, 32
    %v647 = vpop.permute.xlu0 %646
    %648 = vrot.lane.b32.xlu0 %v361, 32
    %v649 = vpop.permute.xlu0 %648
    %650 = vrot.lane.b32.xlu0 %v362, 32
    %v651 = vpop.permute.xlu0 %650
    %652 = vrot.lane.b32.xlu0 %v363, 32
    %v653 = vpop.permute.xlu0 %652
    %654 = vrot.lane.b32.xlu0 %v364, 32
    %v655 = vpop.permute.xlu0 %654
    %656 = vrot.lane.b32.xlu0 %v365, 32
    %v657 = vpop.permute.xlu0 %656
    %658 = vrot.lane.b32.xlu0 %v366, 32
    %v659 = vpop.permute.xlu0 %658
    %660 = vrot.lane.b32.xlu0 %v367, 32
    %v661 = vpop.permute.xlu0 %660
    %662 = vrot.lane.b32.xlu0 %v368, 32
    %v663 = vpop.permute.xlu0 %662
    %664 = vrot.lane.b32.xlu0 %v369, 32
    %v665 = vpop.permute.xlu0 %664
    %666 = vrot.lane.b32.xlu0 %v370, 32
    %v667 = vpop.permute.xlu0 %666
    %668 = vrot.lane.b32.xlu0 %v371, 32
    %v669 = vpop.permute.xlu0 %668
    %670 = vrot.lane.b32.xlu0 %v372, 32
    %v671 = vpop.permute.xlu0 %670
    %vm672 = vcmask 261120
    %v673 = vsel %vm672, %v625, %v627
    %v674 = vsel %vm672, %v629, %v631
    %v675 = vsel %vm672, %v633, %v635
    %v676 = vsel %vm672, %v637, %v639
    %v677 = vsel %vm672, %v641, %v643
    %v678 = vsel %vm672, %v645, %v647
    %v679 = vsel %vm672, %v649, %v651
    %v680 = vsel %vm672, %v653, %v655
    %v681 = vsel %vm672, %v657, %v659
    %v682 = vsel %vm672, %v661, %v663
    %v683 = vsel %vm672, %v665, %v667
    %v684 = vsel %vm672, %v669, %v671
    %v698 = vsel %vm506, %v599, 0
    %700 = vmatprep.subr.mxu0 0.0
    %701 = vmatpush1.msra.mxu0 0.0
    %702 = vmatprep.subr.mxu0 0.0
    %703 = vmatpush1.msra.mxu0 0.0
    %704 = vmatprep.subr.mxu0 0.0
    %705 = vmatpush1.msra.mxu0 0.0
    %706 = vmatprep.subr.mxu0 0.0
    %707 = vmatpush1.msra.mxu0 0.0
    %708 = vmatprep.subr.mxu0 0.0
    %709 = vmatpush1.msra.mxu0 %v684
    %710 = vmatprep.subr.mxu0 0.0
    %711 = vmatpush1.msra.mxu0 %v683
    %712 = vmatprep.subr.mxu0 0.0
    %713 = vmatpush1.msra.mxu0 %v682
    %714 = vmatprep.subr.mxu0 0.0
    %715 = vmatpush1.msra.mxu0 %v681
    %716 = vmatprep.subr.mxu0 0.0
    %717 = vmatpush1.msra.mxu0 %v680
    %718 = vmatprep.subr.mxu0 0.0
    %719 = vmatpush1.msra.mxu0 %v679
    %720 = vmatprep.subr.mxu0 0.0
    %721 = vmatpush1.msra.mxu0 %v678
    %722 = vmatprep.subr.mxu0 0.0
    %723 = vmatpush1.msra.mxu0 %v677
    %724 = vmatprep.subr.mxu0 0.0
    %725 = vmatpush1.msra.mxu0 %v676
    %726 = vmatprep.subr.mxu0 0.0
    %727 = vmatpush1.msra.mxu0 %v675
    %728 = vmatprep.subr.mxu0 0.0
    %729 = vmatpush1.msra.mxu0 %v674
    %730 = vmatprep.subr.mxu0 0.0
    %731 = vmatpush1.msra.mxu0 %v673
    %732 = vmatprep.subr.mxu0 0.0
    %733 = vmatpush2.msra.mxu0 0.0
    %734 = vmatprep.subr.mxu0 0.0
    %735 = vmatpush2.msra.mxu0 0.0
    %736 = vmatprep.subr.mxu0 0.0
    %737 = vmatpush2.msra.mxu0 0.0
    %738 = vmatprep.subr.mxu0 0.0
    %739 = vmatpush2.msra.mxu0 0.0
    %740 = vmatprep.subr.mxu0 0.0
    %741 = vmatpush2.msra.mxu0 0.0
    %742 = vmatprep.subr.mxu0 0.0
    %743 = vmatpush2.msra.mxu0 0.0
    %744 = vmatprep.subr.mxu0 0.0
    %745 = vmatpush2.msra.mxu0 0.0
    %746 = vmatprep.subr.mxu0 0.0
    %747 = vmatpush2.msra.mxu0 0.0
    %748 = vmatprep.subr.mxu0 0.0
    %749 = vmatpush2.msra.mxu0 0.0
    %750 = vmatprep.subr.mxu0 0.0
    %751 = vmatpush2.msra.mxu0 0.0
    %752 = vmatprep.subr.mxu0 0.0
    %753 = vmatpush2.msra.mxu0 0.0
    %754 = vmatprep.subr.mxu0 0.0
    %755 = vmatpush2.msra.mxu0 0.0
    %756 = vmatprep.subr.mxu0 0.0
    %757 = vmatpush2.msra.mxu0 0.0
    %758 = vmatprep.subr.mxu0 0.0
    %759 = vmatpush2.msra.mxu0 0.0
    %760 = vmatprep.subr.mxu0 0.0
    %761 = vmatpush2.msra.mxu0 0.0
    %762 = vmatprep.subr.mxu0 0.0
    %763 = vmatpush2.msra.mxu0 0.0
    %764 = vmatprep.mubr.f32.mxu0 0.0
    %765 = vmatmul.mubr.f32.gmra.mxu0 %v698
    %v766 = vpop.f32.mrf.mxu0
    %v767 = vadd.f32 0.0, %v766
    %v768 = vpop.f32.mrf.mxu0
    %769 = vdwg.mxu0
    %v770 = vmul.f32 %v237, %v266
    %v771 = vmul.f32 %v237, %v268
    %v772 = vmul.f32 %v237, %v270
    %v773 = vmul.f32 %v237, %v272
    %v774 = vmul.f32 %v237, %v274
    %v775 = vmul.f32 %v237, %v276
    %v776 = vmul.f32 %v237, %v278
    %v777 = vmul.f32 %v237, %v280
    %v778 = vmul.f32 %v237, %v282
    %v779 = vmul.f32 %v237, %v284
    %v780 = vmul.f32 %v237, %v286
    %v781 = vmul.f32 %v237, %v288
    %v782 = vmul.f32 %v237, %v314
    %v783 = vmul.f32 %v239, %v314
    %v784 = vmul.f32 %v237, %v316
    %v785 = vmul.f32 %v239, %v316
    %v786 = vmul.f32 %v237, %v318
    %v787 = vmul.f32 %v239, %v318
    %v788 = vmul.f32 %v237, %v320
    %v789 = vmul.f32 %v239, %v320
    %v790 = vmul.f32 %v237, %v322
    %v791 = vmul.f32 %v239, %v322
    %v792 = vmul.f32 %v237, %v324
    %v793 = vmul.f32 %v239, %v324
    %v794 = vmul.f32 %v237, %v326
    %v795 = vmul.f32 %v239, %v326
    %v796 = vmul.f32 %v237, %v328
    %v797 = vmul.f32 %v239, %v328
    %v798 = vmul.f32 %v237, %v330
    %v799 = vmul.f32 %v239, %v330
    %v800 = vmul.f32 %v237, %v332
    %v801 = vmul.f32 %v239, %v332
    %v802 = vmul.f32 %v237, %v334
    %v803 = vmul.f32 %v239, %v334
    %v804 = vmul.f32 %v237, %v336
    %v805 = vmul.f32 %v239, %v336
    %818 = vrot.lane.b32.xlu0 %v770, 80
    %v819 = vpop.permute.xlu0 %818
    %820 = vrot.lane.b32.xlu0 %v771, 80
    %v821 = vpop.permute.xlu0 %820
    %822 = vrot.lane.b32.xlu0 %v772, 80
    %v823 = vpop.permute.xlu0 %822
    %824 = vrot.lane.b32.xlu0 %v773, 80
    %v825 = vpop.permute.xlu0 %824
    %826 = vrot.lane.b32.xlu0 %v774, 80
    %v827 = vpop.permute.xlu0 %826
    %828 = vrot.lane.b32.xlu0 %v775, 80
    %v829 = vpop.permute.xlu0 %828
    %830 = vrot.lane.b32.xlu0 %v776, 80
    %v831 = vpop.permute.xlu0 %830
    %832 = vrot.lane.b32.xlu0 %v777, 80
    %v833 = vpop.permute.xlu0 %832
    %834 = vrot.lane.b32.xlu0 %v778, 80
    %v835 = vpop.permute.xlu0 %834
    %836 = vrot.lane.b32.xlu0 %v779, 80
    %v837 = vpop.permute.xlu0 %836
    %838 = vrot.lane.b32.xlu0 %v780, 80
    %v839 = vpop.permute.xlu0 %838
    %840 = vrot.lane.b32.xlu0 %v781, 80
    %v841 = vpop.permute.xlu0 %840
    %v843 = vsel %vm157, %v237, 0
    %v845 = vsel %vm157, %v819, 0
    %v847 = vsel %vm157, %v821, 0
    %v849 = vsel %vm157, %v823, 0
    %v851 = vsel %vm157, %v825, 0
    %v853 = vsel %vm157, %v827, 0
    %v855 = vsel %vm157, %v829, 0
    %v857 = vsel %vm157, %v831, 0
    %v859 = vsel %vm157, %v833, 0
    %v861 = vsel %vm157, %v835, 0
    %v863 = vsel %vm157, %v837, 0
    %v865 = vsel %vm157, %v839, 0
    %v867 = vsel %vm157, %v841, 0
    %869 = vmatprep.subr.mxu0 0.0
    %870 = vmatpush1.xpose.msra.mxu0 0.0
    %871 = vmatprep.subr.mxu0 0.0
    %872 = vmatpush1.xpose.msra.mxu0 0.0
    %873 = vmatprep.subr.mxu0 0.0
    %874 = vmatpush1.xpose.msra.mxu0 0.0
    %875 = vmatprep.subr.mxu0 0.0
    %876 = vmatpush1.xpose.msra.mxu0 0.0
    %877 = vmatprep.subr.mxu0 0.0
    %878 = vmatpush1.xpose.msra.mxu0 %v867
    %879 = vmatprep.subr.mxu0 0.0
    %880 = vmatpush1.xpose.msra.mxu0 %v865
    %881 = vmatprep.subr.mxu0 0.0
    %882 = vmatpush1.xpose.msra.mxu0 %v863
    %883 = vmatprep.subr.mxu0 0.0
    %884 = vmatpush1.xpose.msra.mxu0 %v861
    %885 = vmatprep.subr.mxu0 0.0
    %886 = vmatpush1.xpose.msra.mxu0 %v859
    %887 = vmatprep.subr.mxu0 0.0
    %888 = vmatpush1.xpose.msra.mxu0 %v857
    %889 = vmatprep.subr.mxu0 0.0
    %890 = vmatpush1.xpose.msra.mxu0 %v855
    %891 = vmatprep.subr.mxu0 0.0
    %892 = vmatpush1.xpose.msra.mxu0 %v853
    %893 = vmatprep.subr.mxu0 0.0
    %894 = vmatpush1.xpose.msra.mxu0 %v851
    %895 = vmatprep.subr.mxu0 0.0
    %896 = vmatpush1.xpose.msra.mxu0 %v849
    %897 = vmatprep.subr.mxu0 0.0
    %898 = vmatpush1.xpose.msra.mxu0 %v847
    %899 = vmatprep.subr.mxu0 0.0
    %900 = vmatpush1.xpose.msra.mxu0 %v845
    %901 = vmatprep.subr.mxu0 0.0
    %902 = vmatpush2.xpose.msra.mxu0 0.0
    %903 = vmatprep.subr.mxu0 0.0
    %904 = vmatpush2.xpose.msra.mxu0 0.0
    %905 = vmatprep.subr.mxu0 0.0
    %906 = vmatpush2.xpose.msra.mxu0 0.0
    %907 = vmatprep.subr.mxu0 0.0
    %908 = vmatpush2.xpose.msra.mxu0 0.0
    %909 = vmatprep.subr.mxu0 0.0
    %910 = vmatpush2.xpose.msra.mxu0 0.0
    %911 = vmatprep.subr.mxu0 0.0
    %912 = vmatpush2.xpose.msra.mxu0 0.0
    %913 = vmatprep.subr.mxu0 0.0
    %914 = vmatpush2.xpose.msra.mxu0 0.0
    %915 = vmatprep.subr.mxu0 0.0
    %916 = vmatpush2.xpose.msra.mxu0 0.0
    %917 = vmatprep.subr.mxu0 0.0
    %918 = vmatpush2.xpose.msra.mxu0 0.0
    %919 = vmatprep.subr.mxu0 0.0
    %920 = vmatpush2.xpose.msra.mxu0 0.0
    %921 = vmatprep.subr.mxu0 0.0
    %922 = vmatpush2.xpose.msra.mxu0 0.0
    %923 = vmatprep.subr.mxu0 0.0
    %924 = vmatpush2.xpose.msra.mxu0 0.0
    %925 = vmatprep.subr.mxu0 0.0
    %926 = vmatpush2.xpose.msra.mxu0 0.0
    %927 = vmatprep.subr.mxu0 0.0
    %928 = vmatpush2.xpose.msra.mxu0 0.0
    %929 = vmatprep.subr.mxu0 0.0
    %930 = vmatpush2.xpose.msra.mxu0 0.0
    %931 = vmatprep.subr.mxu0 0.0
    %932 = vmatpush2.xpose.msra.mxu0 0.0
    %933 = vmatprep.mubr.f32.mxu0 0.0
    %934 = vmatmul.mubr.f32.gmra.mxu0 %v843
    %v935 = vpop.f32.mrf.mxu0
    %v936 = vadd.f32 0.0, %v935
    %v937 = vpop.f32.mrf.mxu0
    %938 = vdwg.mxu0
    %v939 = vsel %vm506, %v936, -inf
    %940 = vmax.xlane.f32.xlu0 %v939
    %v941 = vpop.xlane.xlu0 %940
    %v942 = vsub.f32 %v936, %v941
    %v943 = vmul.f32 %v942, 1.442695
    %v944 = vpow.pop %v943
    %v946 = vsel %vm506, %v944, 0
    %948 = vmatprep.subr.mxu0 0.0
    %949 = vmatpush1.msra.mxu0 0.0
    %950 = vmatprep.subr.mxu0 0.0
    %951 = vmatpush1.msra.mxu0 0.0
    %952 = vmatprep.subr.mxu0 0.0
    %953 = vmatpush1.msra.mxu0 0.0
    %954 = vmatprep.subr.mxu0 0.0
    %955 = vmatpush1.msra.mxu0 0.0
    %956 = vmatprep.subr.mxu0 0.0
    %957 = vmatpush1.msra.mxu0 %v524
    %958 = vmatprep.subr.mxu0 0.0
    %959 = vmatpush1.msra.mxu0 %v523
    %960 = vmatprep.subr.mxu0 0.0
    %961 = vmatpush1.msra.mxu0 %v522
    %962 = vmatprep.subr.mxu0 0.0
    %963 = vmatpush1.msra.mxu0 %v521
    %964 = vmatprep.subr.mxu0 0.0
    %965 = vmatpush1.msra.mxu0 %v520
    %966 = vmatprep.subr.mxu0 0.0
    %967 = vmatpush1.msra.mxu0 %v519
    %968 = vmatprep.subr.mxu0 0.0
    %969 = vmatpush1.msra.mxu0 %v518
    %970 = vmatprep.subr.mxu0 0.0
    %971 = vmatpush1.msra.mxu0 %v517
    %972 = vmatprep.subr.mxu0 0.0
    %973 = vmatpush1.msra.mxu0 %v516
    %974 = vmatprep.subr.mxu0 0.0
    %975 = vmatpush1.msra.mxu0 %v515
    %976 = vmatprep.subr.mxu0 0.0
    %977 = vmatpush1.msra.mxu0 %v514
    %978 = vmatprep.subr.mxu0 0.0
    %979 = vmatpush1.msra.mxu0 %v513
    %980 = vmatprep.subr.mxu0 0.0
    %981 = vmatpush2.msra.mxu0 0.0
    %982 = vmatprep.subr.mxu0 0.0
    %983 = vmatpush2.msra.mxu0 0.0
    %984 = vmatprep.subr.mxu0 0.0
    %985 = vmatpush2.msra.mxu0 0.0
    %986 = vmatprep.subr.mxu0 0.0
    %987 = vmatpush2.msra.mxu0 0.0
    %988 = vmatprep.subr.mxu0 0.0
    %989 = vmatpush2.msra.mxu0 0.0
    %990 = vmatprep.subr.mxu0 0.0
    %991 = vmatpush2.msra.mxu0 0.0
    %992 = vmatprep.subr.mxu0 0.0
    %993 = vmatpush2.msra.mxu0 0.0
    %994 = vmatprep.subr.mxu0 0.0
    %995 = vmatpush2.msra.mxu0 0.0
    %996 = vmatprep.subr.mxu0 0.0
    %997 = vmatpush2.msra.mxu0 0.0
    %998 = vmatprep.subr.mxu0 0.0
    %999 = vmatpush2.msra.mxu0 0.0
    %1000 = vmatprep.subr.mxu0 0.0
    %1001 = vmatpush2.msra.mxu0 0.0
    %1002 = vmatprep.subr.mxu0 0.0
    %1003 = vmatpush2.msra.mxu0 0.0
    %1004 = vmatprep.subr.mxu0 0.0
    %1005 = vmatpush2.msra.mxu0 0.0
    %1006 = vmatprep.subr.mxu0 0.0
    %1007 = vmatpush2.msra.mxu0 0.0
    %1008 = vmatprep.subr.mxu0 0.0
    %1009 = vmatpush2.msra.mxu0 0.0
    %1010 = vmatprep.subr.mxu0 0.0
    %1011 = vmatpush2.msra.mxu0 0.0
    %1012 = vmatprep.mubr.f32.mxu0 0.0
    %1013 = vmatmul.mubr.f32.gmra.mxu0 %v946
    %v1014 = vpop.f32.mrf.mxu0
    %v1015 = vadd.f32 0.0, %v1014
    %v1016 = vpop.f32.mrf.mxu0
    %1017 = vdwg.mxu0
    %v1018 = vrcp.pop %v1015
    %v1019 = vmul.f32 %v944, %v1018
    %1044 = vrot.lane.b32.xlu0 %v782, 32
    %v1045 = vpop.permute.xlu0 %1044
    %1046 = vrot.lane.b32.xlu0 %v783, 32
    %v1047 = vpop.permute.xlu0 %1046
    %1048 = vrot.lane.b32.xlu0 %v784, 32
    %v1049 = vpop.permute.xlu0 %1048
    %1050 = vrot.lane.b32.xlu0 %v785, 32
    %v1051 = vpop.permute.xlu0 %1050
    %1052 = vrot.lane.b32.xlu0 %v786, 32
    %v1053 = vpop.permute.xlu0 %1052
    %1054 = vrot.lane.b32.xlu0 %v787, 32
    %v1055 = vpop.permute.xlu0 %1054
    %1056 = vrot.lane.b32.xlu0 %v788, 32
    %v1057 = vpop.permute.xlu0 %1056
    %1058 = vrot.lane.b32.xlu0 %v789, 32
    %v1059 = vpop.permute.xlu0 %1058
    %1060 = vrot.lane.b32.xlu0 %v790, 32
    %v1061 = vpop.permute.xlu0 %1060
    %1062 = vrot.lane.b32.xlu0 %v791, 32
    %v1063 = vpop.permute.xlu0 %1062
    %1064 = vrot.lane.b32.xlu0 %v792, 32
    %v1065 = vpop.permute.xlu0 %1064
    %1066 = vrot.lane.b32.xlu0 %v793, 32
    %v1067 = vpop.permute.xlu0 %1066
    %1068 = vrot.lane.b32.xlu0 %v794, 32
    %v1069 = vpop.permute.xlu0 %1068
    %1070 = vrot.lane.b32.xlu0 %v795, 32
    %v1071 = vpop.permute.xlu0 %1070
    %1072 = vrot.lane.b32.xlu0 %v796, 32
    %v1073 = vpop.permute.xlu0 %1072
    %1074 = vrot.lane.b32.xlu0 %v797, 32
    %v1075 = vpop.permute.xlu0 %1074
    %1076 = vrot.lane.b32.xlu0 %v798, 32
    %v1077 = vpop.permute.xlu0 %1076
    %1078 = vrot.lane.b32.xlu0 %v799, 32
    %v1079 = vpop.permute.xlu0 %1078
    %1080 = vrot.lane.b32.xlu0 %v800, 32
    %v1081 = vpop.permute.xlu0 %1080
    %1082 = vrot.lane.b32.xlu0 %v801, 32
    %v1083 = vpop.permute.xlu0 %1082
    %1084 = vrot.lane.b32.xlu0 %v802, 32
    %v1085 = vpop.permute.xlu0 %1084
    %1086 = vrot.lane.b32.xlu0 %v803, 32
    %v1087 = vpop.permute.xlu0 %1086
    %1088 = vrot.lane.b32.xlu0 %v804, 32
    %v1089 = vpop.permute.xlu0 %1088
    %1090 = vrot.lane.b32.xlu0 %v805, 32
    %v1091 = vpop.permute.xlu0 %1090
    %v1092 = vsel %vm672, %v1045, %v1047
    %v1093 = vsel %vm672, %v1049, %v1051
    %v1094 = vsel %vm672, %v1053, %v1055
    %v1095 = vsel %vm672, %v1057, %v1059
    %v1096 = vsel %vm672, %v1061, %v1063
    %v1097 = vsel %vm672, %v1065, %v1067
    %v1098 = vsel %vm672, %v1069, %v1071
    %v1099 = vsel %vm672, %v1073, %v1075
    %v1100 = vsel %vm672, %v1077, %v1079
    %v1101 = vsel %vm672, %v1081, %v1083
    %v1102 = vsel %vm672, %v1085, %v1087
    %v1103 = vsel %vm672, %v1089, %v1091
    %v1117 = vsel %vm506, %v1019, 0
    %1119 = vmatprep.subr.mxu0 0.0
    %1120 = vmatpush1.msra.mxu0 0.0
    %1121 = vmatprep.subr.mxu0 0.0
    %1122 = vmatpush1.msra.mxu0 0.0
    %1123 = vmatprep.subr.mxu0 0.0
    %1124 = vmatpush1.msra.mxu0 0.0
    %1125 = vmatprep.subr.mxu0 0.0
    %1126 = vmatpush1.msra.mxu0 0.0
    %1127 = vmatprep.subr.mxu0 0.0
    %1128 = vmatpush1.msra.mxu0 %v1103
    %1129 = vmatprep.subr.mxu0 0.0
    %1130 = vmatpush1.msra.mxu0 %v1102
    %1131 = vmatprep.subr.mxu0 0.0
    %1132 = vmatpush1.msra.mxu0 %v1101
    %1133 = vmatprep.subr.mxu0 0.0
    %1134 = vmatpush1.msra.mxu0 %v1100
    %1135 = vmatprep.subr.mxu0 0.0
    %1136 = vmatpush1.msra.mxu0 %v1099
    %1137 = vmatprep.subr.mxu0 0.0
    %1138 = vmatpush1.msra.mxu0 %v1098
    %1139 = vmatprep.subr.mxu0 0.0
    %1140 = vmatpush1.msra.mxu0 %v1097
    %1141 = vmatprep.subr.mxu0 0.0
    %1142 = vmatpush1.msra.mxu0 %v1096
    %1143 = vmatprep.subr.mxu0 0.0
    %1144 = vmatpush1.msra.mxu0 %v1095
    %1145 = vmatprep.subr.mxu0 0.0
    %1146 = vmatpush1.msra.mxu0 %v1094
    %1147 = vmatprep.subr.mxu0 0.0
    %1148 = vmatpush1.msra.mxu0 %v1093
    %1149 = vmatprep.subr.mxu0 0.0
    %1150 = vmatpush1.msra.mxu0 %v1092
    %1151 = vmatprep.subr.mxu0 0.0
    %1152 = vmatpush2.msra.mxu0 0.0
    %1153 = vmatprep.subr.mxu0 0.0
    %1154 = vmatpush2.msra.mxu0 0.0
    %1155 = vmatprep.subr.mxu0 0.0
    %1156 = vmatpush2.msra.mxu0 0.0
    %1157 = vmatprep.subr.mxu0 0.0
    %1158 = vmatpush2.msra.mxu0 0.0
    %1159 = vmatprep.subr.mxu0 0.0
    %1160 = vmatpush2.msra.mxu0 0.0
    %1161 = vmatprep.subr.mxu0 0.0
    %1162 = vmatpush2.msra.mxu0 0.0
    %1163 = vmatprep.subr.mxu0 0.0
    %1164 = vmatpush2.msra.mxu0 0.0
    %1165 = vmatprep.subr.mxu0 0.0
    %1166 = vmatpush2.msra.mxu0 0.0
    %1167 = vmatprep.subr.mxu0 0.0
    %1168 = vmatpush2.msra.mxu0 0.0
    %1169 = vmatprep.subr.mxu0 0.0
    %1170 = vmatpush2.msra.mxu0 0.0
    %1171 = vmatprep.subr.mxu0 0.0
    %1172 = vmatpush2.msra.mxu0 0.0
    %1173 = vmatprep.subr.mxu0 0.0
    %1174 = vmatpush2.msra.mxu0 0.0
    %1175 = vmatprep.subr.mxu0 0.0
    %1176 = vmatpush2.msra.mxu0 0.0
    %1177 = vmatprep.subr.mxu0 0.0
    %1178 = vmatpush2.msra.mxu0 0.0
    %1179 = vmatprep.subr.mxu0 0.0
    %1180 = vmatpush2.msra.mxu0 0.0
    %1181 = vmatprep.subr.mxu0 0.0
    %1182 = vmatpush2.msra.mxu0 0.0
    %1183 = vmatprep.mubr.f32.mxu0 0.0
    %1184 = vmatmul.mubr.f32.gmra.mxu0 %v1117
    %v1185 = vpop.f32.mrf.mxu0
    %v1186 = vadd.f32 0.0, %v1185
    %v1187 = vpop.f32.mrf.mxu0
    %1188 = vdwg.mxu0
    %v1189 = vld [vmem:[%s4] sm:$0xff]
    %v1190 = vld [vmem:[%s4 + $0x8] sm:$0xff]
    %v1191 = vld [vmem:[%s4 + $0x10] sm:$0xff]
    %v1192 = vld [vmem:[%s4 + $0x18] sm:$0xff]
    %v1193 = vld [vmem:[%s4 + $0x20] sm:$0xff]
    %v1194 = vld [vmem:[%s4 + $0x28] sm:$0xff]
    %v1195 = vld [vmem:[%s2 + $0x1] ss:$0 sm:$0xff]
    %v1197 = vsel %vm157, %v767, 0
    %v1200 = vsel %vm157, %v1186, 0
    %1202 = vmatprep.subr.mxu0 0.0
    %1203 = vmatpush1.msra.mxu0 0.0
    %1204 = vmatprep.subr.mxu0 0.0
    %1205 = vmatpush1.msra.mxu0 0.0
    %1206 = vmatprep.subr.mxu0 0.0
    %1207 = vmatpush1.msra.mxu0 0.0
    %1208 = vmatprep.subr.mxu0 0.0
    %1209 = vmatpush1.msra.mxu0 0.0
    %1210 = vmatprep.subr.mxu0 0.0
    %1211 = vmatpush1.msra.mxu0 0.0
    %1212 = vmatprep.subr.mxu0 0.0
    %1213 = vmatpush1.msra.mxu0 0.0
    %1214 = vmatprep.subr.mxu0 0.0
    %1215 = vmatpush1.msra.mxu0 0.0
    %1216 = vmatprep.subr.mxu0 0.0
    %1217 = vmatpush1.msra.mxu0 0.0
    %1218 = vmatprep.subr.mxu0 0.0
    %1219 = vmatpush1.msra.mxu0 0.0
    %1220 = vmatprep.subr.mxu0 0.0
    %1221 = vmatpush1.msra.mxu0 0.0
    %1222 = vmatprep.subr.mxu0 0.0
    %1223 = vmatpush1.msra.mxu0 %v1194
    %1224 = vmatprep.subr.mxu0 0.0
    %1225 = vmatpush1.msra.mxu0 %v1193
    %1226 = vmatprep.subr.mxu0 0.0
    %1227 = vmatpush1.msra.mxu0 %v1192
    %1228 = vmatprep.subr.mxu0 0.0
    %1229 = vmatpush1.msra.mxu0 %v1191
    %1230 = vmatprep.subr.mxu0 0.0
    %1231 = vmatpush1.msra.mxu0 %v1190
    %1232 = vmatprep.subr.mxu0 0.0
    %1233 = vmatpush1.msra.mxu0 %v1189
    %1234 = vmatprep.subr.mxu0 0.0
    %1235 = vmatpush2.msra.mxu0 0.0
    %1236 = vmatprep.subr.mxu0 0.0
    %1237 = vmatpush2.msra.mxu0 0.0
    %1238 = vmatprep.subr.mxu0 0.0
    %1239 = vmatpush2.msra.mxu0 0.0
    %1240 = vmatprep.subr.mxu0 0.0
    %1241 = vmatpush2.msra.mxu0 0.0
    %1242 = vmatprep.subr.mxu0 0.0
    %1243 = vmatpush2.msra.mxu0 0.0
    %1244 = vmatprep.subr.mxu0 0.0
    %1245 = vmatpush2.msra.mxu0 0.0
    %1246 = vmatprep.subr.mxu0 0.0
    %1247 = vmatpush2.msra.mxu0 0.0
    %1248 = vmatprep.subr.mxu0 0.0
    %1249 = vmatpush2.msra.mxu0 0.0
    %1250 = vmatprep.subr.mxu0 0.0
    %1251 = vmatpush2.msra.mxu0 0.0
    %1252 = vmatprep.subr.mxu0 0.0
    %1253 = vmatpush2.msra.mxu0 0.0
    %1254 = vmatprep.subr.mxu0 0.0
    %1255 = vmatpush2.msra.mxu0 0.0
    %1256 = vmatprep.subr.mxu0 0.0
    %1257 = vmatpush2.msra.mxu0 0.0
    %1258 = vmatprep.subr.mxu0 0.0
    %1259 = vmatpush2.msra.mxu0 0.0
    %1260 = vmatprep.subr.mxu0 0.0
    %1261 = vmatpush2.msra.mxu0 0.0
    %1262 = vmatprep.subr.mxu0 0.0
    %1263 = vmatpush2.msra.mxu0 0.0
    %1264 = vmatprep.subr.mxu0 0.0
    %1265 = vmatpush2.msra.mxu0 0.0
    %1266 = vmatprep.mubr.f32.mxu0 0.0
    %1267 = vmatmul.mubr.f32.gmra.mxu0 %v1197
    %v1268 = vpop.f32.mrf.mxu0
    %v1269 = vadd.f32 %v1195, %v1268
    %v1270 = vpop.f32.mrf.mxu0
    %1271 = vmatprep.mubr.f32.mxu0 0.0
    %1272 = vmatmul.mubr.f32.gmra.mxu0 %v1200
    %v1273 = vpop.f32.mrf.mxu0
    %v1274 = vadd.f32 %v1195, %v1273
    %v1275 = vpop.f32.mrf.mxu0
    %1276 = vdwg.mxu0
    %v1277 = vadd.f32 %v1269, %v125
    %v1278 = vadd.f32 %v1274, %v130
    %v1279 = vld [vmem:[%s2 + $0x4] ss:$0 sm:$0xff]
    %v1280 = vld [vmem:[%s2 + $0x5] ss:$0 sm:$0xff]
    %v1281 = vsel %vm157, %v1277, 0.0
    %1282 = vadd.xlane.f32.xlu0 %v1281
    %v1283 = vpop.xlane.xlu0 %1282
    %v1284 = vsel %vm157, %v1278, 0.0
    %1285 = vadd.xlane.f32.xlu0 %v1284
    %v1286 = vpop.xlane.xlu0 %1285
    %v1287 = vmul.f32 %v1277, %v1277
    %v1288 = vmul.f32 %v1278, %v1278
    %v1289 = vsel %vm157, %v1287, 0.0
    %1290 = vadd.xlane.f32.xlu0 %v1289
    %v1291 = vpop.xlane.xlu0 %1290
    %v1292 = vsel %vm157, %v1288, 0.0
    %1293 = vadd.xlane.f32.xlu0 %v1292
    %v1294 = vpop.xlane.xlu0 %1293
    %v1295 = vmul.f32 %v1283, 0.020833334
    %v1296 = vmul.f32 %v1286, 0.020833334
    %v1297 = vmul.f32 %v1291, 0.020833334
    %v1298 = vmul.f32 %v1294, 0.020833334
    %v1299 = vmul.f32 %v1295, %v1295
    %v1300 = vmul.f32 %v1296, %v1296
    %v1301 = vsub.f32 %v1297, %v1299
    %v1302 = vsub.f32 %v1298, %v1300
    %v1303 = vsub.f32 %v1277, %v1295
    %v1304 = vsub.f32 %v1278, %v1296
    %v1305 = vadd.f32 %v1301, 1e-05
    %v1306 = vadd.f32 %v1302, 1e-05
    %v1307 = vrsqrt.pop %v1305
    %v1308 = vrsqrt.pop %v1306
    %v1309 = vmul.f32 %v1303, %v1307
    %v1310 = vmul.f32 %v1304, %v1308
    %v1311 = vmul.f32 %v1309, %v1279
    %v1312 = vmul.f32 %v1310, %v1279
    %v1313 = vadd.f32 %v1311, %v1280
    %v1314 = vadd.f32 %v1312, %v1280
    %v1315 = vld [vmem:[%s5] sm:$0xff]
    %v1316 = vld [vmem:[%s5 + $0x8] sm:$0xff]
    %v1317 = vld [vmem:[%s5 + $0x10] sm:$0xff]
    %v1318 = vld [vmem:[%s5 + $0x18] sm:$0xff]
    %v1319 = vld [vmem:[%s5 + $0x20] sm:$0xff]
    %v1320 = vld [vmem:[%s5 + $0x28] sm:$0xff]
    %v1321 = vld [vmem:[%s5 + $0x30] sm:$0xff]
    %v1322 = vld [vmem:[%s5 + $0x38] sm:$0xff]
    %v1323 = vld [vmem:[%s5 + $0x40] sm:$0xff]
    %v1324 = vld [vmem:[%s5 + $0x48] sm:$0xff]
    %v1325 = vld [vmem:[%s5 + $0x50] sm:$0xff]
    %v1326 = vld [vmem:[%s5 + $0x58] sm:$0xff]
    %s1327 = scalar_lea.vmem %s2, 2
    %v1328 = vld [vmem:[%s1327] ss:$8 sm:$0x3]
    %v1330 = vlaneseq
    %v1331 = vshrl.u32 %v1330, 7
    %v1332 = vsub.s32 0, %v1331
    %v1333 = vrot.slane %v1328, %v1332
    %v1334 = vlaneseq
    %v1335 = vshrl.u32 %v1334, 7
    %v1336 = vsub.s32 1, %v1335
    %v1337 = vrot.slane %v1328, %v1336
    %v1341 = vsel %vm157, %v1313, 0
    %v1344 = vsel %vm157, %v1314, 0
    %1346 = vmatprep.subr.mxu0 0.0
    %1347 = vmatpush1.msra.mxu0 0.0
    %1348 = vmatprep.subr.mxu0 0.0
    %1349 = vmatpush1.msra.mxu0 0.0
    %1350 = vmatprep.subr.mxu0 0.0
    %1351 = vmatpush1.msra.mxu0 0.0
    %1352 = vmatprep.subr.mxu0 0.0
    %1353 = vmatpush1.msra.mxu0 0.0
    %1354 = vmatprep.subr.mxu0 0.0
    %1355 = vmatpush1.msra.mxu0 0.0
    %1356 = vmatprep.subr.mxu0 0.0
    %1357 = vmatpush1.msra.mxu0 0.0
    %1358 = vmatprep.subr.mxu0 0.0
    %1359 = vmatpush1.msra.mxu0 0.0
    %1360 = vmatprep.subr.mxu0 0.0
    %1361 = vmatpush1.msra.mxu0 0.0
    %1362 = vmatprep.subr.mxu0 0.0
    %1363 = vmatpush1.msra.mxu0 0.0
    %1364 = vmatprep.subr.mxu0 0.0
    %1365 = vmatpush1.msra.mxu0 0.0
    %1366 = vmatprep.subr.mxu0 %v1326
    %1367 = vmatpush1.msra.mxu0 %v1325
    %1368 = vmatprep.subr.mxu0 %v1324
    %1369 = vmatpush1.msra.mxu0 %v1323
    %1370 = vmatprep.subr.mxu0 %v1322
    %1371 = vmatpush1.msra.mxu0 %v1321
    %1372 = vmatprep.subr.mxu0 %v1320
    %1373 = vmatpush1.msra.mxu0 %v1319
    %1374 = vmatprep.subr.mxu0 %v1318
    %1375 = vmatpush1.msra.mxu0 %v1317
    %1376 = vmatprep.subr.mxu0 %v1316
    %1377 = vmatpush1.msra.mxu0 %v1315
    %1378 = vmatprep.subr.mxu0 0.0
    %1379 = vmatpush2.msra.mxu0 0.0
    %1380 = vmatprep.subr.mxu0 0.0
    %1381 = vmatpush2.msra.mxu0 0.0
    %1382 = vmatprep.subr.mxu0 0.0
    %1383 = vmatpush2.msra.mxu0 0.0
    %1384 = vmatprep.subr.mxu0 0.0
    %1385 = vmatpush2.msra.mxu0 0.0
    %1386 = vmatprep.subr.mxu0 0.0
    %1387 = vmatpush2.msra.mxu0 0.0
    %1388 = vmatprep.subr.mxu0 0.0
    %1389 = vmatpush2.msra.mxu0 0.0
    %1390 = vmatprep.subr.mxu0 0.0
    %1391 = vmatpush2.msra.mxu0 0.0
    %1392 = vmatprep.subr.mxu0 0.0
    %1393 = vmatpush2.msra.mxu0 0.0
    %1394 = vmatprep.subr.mxu0 0.0
    %1395 = vmatpush2.msra.mxu0 0.0
    %1396 = vmatprep.subr.mxu0 0.0
    %1397 = vmatpush2.msra.mxu0 0.0
    %1398 = vmatprep.subr.mxu0 0.0
    %1399 = vmatpush2.msra.mxu0 0.0
    %1400 = vmatprep.subr.mxu0 0.0
    %1401 = vmatpush2.msra.mxu0 0.0
    %1402 = vmatprep.subr.mxu0 0.0
    %1403 = vmatpush2.msra.mxu0 0.0
    %1404 = vmatprep.subr.mxu0 0.0
    %1405 = vmatpush2.msra.mxu0 0.0
    %1406 = vmatprep.subr.mxu0 0.0
    %1407 = vmatpush2.msra.mxu0 0.0
    %1408 = vmatprep.subr.mxu0 0.0
    %1409 = vmatpush2.msra.mxu0 0.0
    %1410 = vmatprep.mubr.f32.mxu0 0.0
    %1411 = vmatmul.mubr.f32.gmra.mxu0 %v1341
    %v1412 = vpop.f32.mrf.mxu0
    %v1413 = vadd.f32 %v1333, %v1412
    %v1414 = vpop.f32.mrf.mxu0
    %v1415 = vadd.f32 %v1337, %v1414
    %1416 = vmatprep.mubr.f32.mxu0 0.0
    %1417 = vmatmul.mubr.f32.gmra.mxu0 %v1344
    %v1418 = vpop.f32.mrf.mxu0
    %v1419 = vadd.f32 %v1333, %v1418
    %v1420 = vpop.f32.mrf.mxu0
    %v1421 = vadd.f32 %v1337, %v1420
    %1422 = vdwg.mxu0
    %v1423 = vmax.f32 %v1413, 0.0
    %v1424 = vmax.f32 %v1415, 0.0
    %v1425 = vmax.f32 %v1419, 0.0
    %v1426 = vmax.f32 %v1421, 0.0
    %v1427 = vld [vmem:[%s6] sm:$0xff]
    %v1428 = vld [vmem:[%s6 + $0x8] sm:$0xff]
    %v1429 = vld [vmem:[%s6 + $0x10] sm:$0xff]
    %v1430 = vld [vmem:[%s6 + $0x18] sm:$0xff]
    %v1431 = vld [vmem:[%s6 + $0x20] sm:$0xff]
    %v1432 = vld [vmem:[%s6 + $0x28] sm:$0xff]
    %v1433 = vld [vmem:[%s6 + $0x30] sm:$0xff]
    %v1434 = vld [vmem:[%s6 + $0x38] sm:$0xff]
    %v1435 = vld [vmem:[%s6 + $0x40] sm:$0xff]
    %v1436 = vld [vmem:[%s6 + $0x48] sm:$0xff]
    %v1437 = vld [vmem:[%s6 + $0x50] sm:$0xff]
    %v1438 = vld [vmem:[%s6 + $0x58] sm:$0xff]
    %v1439 = vld [vmem:[%s6 + $0x60] sm:$0xff]
    %v1440 = vld [vmem:[%s6 + $0x68] sm:$0xff]
    %v1441 = vld [vmem:[%s6 + $0x70] sm:$0xff]
    %v1442 = vld [vmem:[%s6 + $0x78] sm:$0xff]
    %v1443 = vld [vmem:[%s6 + $0x80] sm:$0xff]
    %v1444 = vld [vmem:[%s6 + $0x88] sm:$0xff]
    %v1445 = vld [vmem:[%s6 + $0x90] sm:$0xff]
    %v1446 = vld [vmem:[%s6 + $0x98] sm:$0xff]
    %v1447 = vld [vmem:[%s6 + $0xa0] sm:$0xff]
    %v1448 = vld [vmem:[%s6 + $0xa8] sm:$0xff]
    %v1449 = vld [vmem:[%s6 + $0xb0] sm:$0xff]
    %v1450 = vld [vmem:[%s6 + $0xb8] sm:$0xff]
    %v1451 = vld [vmem:[%s2 + $0x3] ss:$0 sm:$0xff]
    %v1453 = vsel %vm51, %v1424, 0
    %v1456 = vsel %vm51, %v1426, 0
    %1458 = vmatprep.subr.mxu0 0.0
    %1459 = vmatpush1.msra.mxu0 %v1442
    %1460 = vmatprep.subr.mxu0 0.0
    %1461 = vmatpush1.msra.mxu0 %v1441
    %1462 = vmatprep.subr.mxu0 0.0
    %1463 = vmatpush1.msra.mxu0 %v1440
    %1464 = vmatprep.subr.mxu0 0.0
    %1465 = vmatpush1.msra.mxu0 %v1439
    %1466 = vmatprep.subr.mxu0 0.0
    %1467 = vmatpush1.msra.mxu0 %v1438
    %1468 = vmatprep.subr.mxu0 0.0
    %1469 = vmatpush1.msra.mxu0 %v1437
    %1470 = vmatprep.subr.mxu0 0.0
    %1471 = vmatpush1.msra.mxu0 %v1436
    %1472 = vmatprep.subr.mxu0 0.0
    %1473 = vmatpush1.msra.mxu0 %v1435
    %1474 = vmatprep.subr.mxu0 0.0
    %1475 = vmatpush1.msra.mxu0 %v1434
    %1476 = vmatprep.subr.mxu0 0.0
    %1477 = vmatpush1.msra.mxu0 %v1433
    %1478 = vmatprep.subr.mxu0 0.0
    %1479 = vmatpush1.msra.mxu0 %v1432
    %1480 = vmatprep.subr.mxu0 0.0
    %1481 = vmatpush1.msra.mxu0 %v1431
    %1482 = vmatprep.subr.mxu0 0.0
    %1483 = vmatpush1.msra.mxu0 %v1430
    %1484 = vmatprep.subr.mxu0 0.0
    %1485 = vmatpush1.msra.mxu0 %v1429
    %1486 = vmatprep.subr.mxu0 0.0
    %1487 = vmatpush1.msra.mxu0 %v1428
    %1488 = vmatprep.subr.mxu0 0.0
    %1489 = vmatpush1.msra.mxu0 %v1427
    %1490 = vmatprep.subr.mxu0 0.0
    %1491 = vmatpush2.msra.mxu0 0.0
    %1492 = vmatprep.subr.mxu0 0.0
    %1493 = vmatpush2.msra.mxu0 0.0
    %1494 = vmatprep.subr.mxu0 0.0
    %1495 = vmatpush2.msra.mxu0 0.0
    %1496 = vmatprep.subr.mxu0 0.0
    %1497 = vmatpush2.msra.mxu0 0.0
    %1498 = vmatprep.subr.mxu0 0.0
    %1499 = vmatpush2.msra.mxu0 0.0
    %1500 = vmatprep.subr.mxu0 0.0
    %1501 = vmatpush2.msra.mxu0 0.0
    %1502 = vmatprep.subr.mxu0 0.0
    %1503 = vmatpush2.msra.mxu0 0.0
    %1504 = vmatprep.subr.mxu0 0.0
    %1505 = vmatpush2.msra.mxu0 0.0
    %1506 = vmatprep.subr.mxu0 0.0
    %1507 = vmatpush2.msra.mxu0 %v1450
    %1508 = vmatprep.subr.mxu0 0.0
    %1509 = vmatpush2.msra.mxu0 %v1449
    %1510 = vmatprep.subr.mxu0 0.0
    %1511 = vmatpush2.msra.mxu0 %v1448
    %1512 = vmatprep.subr.mxu0 0.0
    %1513 = vmatpush2.msra.mxu0 %v1447
    %1514 = vmatprep.subr.mxu0 0.0
    %1515 = vmatpush2.msra.mxu0 %v1446
    %1516 = vmatprep.subr.mxu0 0.0
    %1517 = vmatpush2.msra.mxu0 %v1445
    %1518 = vmatprep.subr.mxu0 0.0
    %1519 = vmatpush2.msra.mxu0 %v1444
    %1520 = vmatprep.subr.mxu0 0.0
    %1521 = vmatpush2.msra.mxu0 %v1443
    %1522 = vmatprep.mubr.f32.mxu0 %v1453
    %1523 = vmatmul.mubr.f32.gmra.mxu0 %v1423
    %v1524 = vpop.f32.mrf.mxu0
    %v1525 = vadd.f32 %v1451, %v1524
    %v1526 = vpop.f32.mrf.mxu0
    %1527 = vmatprep.mubr.f32.mxu0 %v1456
    %1528 = vmatmul.mubr.f32.gmra.mxu0 %v1425
    %v1529 = vpop.f32.mrf.mxu0
    %v1530 = vadd.f32 %v1451, %v1529
    %v1531 = vpop.f32.mrf.mxu0
    %1532 = vdwg.mxu0
    %v1533 = vadd.f32 %v1525, %v1313
    %v1534 = vadd.f32 %v1530, %v1314
    %v1535 = vld [vmem:[%s2 + $0x6] ss:$0 sm:$0xff]
    %v1536 = vld [vmem:[%s2 + $0x7] ss:$0 sm:$0xff]
    %v1537 = vsel %vm157, %v1533, 0.0
    %1538 = vadd.xlane.f32.xlu0 %v1537
    %v1539 = vpop.xlane.xlu0 %1538
    %v1540 = vsel %vm157, %v1534, 0.0
    %1541 = vadd.xlane.f32.xlu0 %v1540
    %v1542 = vpop.xlane.xlu0 %1541
    %v1543 = vmul.f32 %v1533, %v1533
    %v1544 = vmul.f32 %v1534, %v1534
    %v1545 = vsel %vm157, %v1543, 0.0
    %1546 = vadd.xlane.f32.xlu0 %v1545
    %v1547 = vpop.xlane.xlu0 %1546
    %v1548 = vsel %vm157, %v1544, 0.0
    %1549 = vadd.xlane.f32.xlu0 %v1548
    %v1550 = vpop.xlane.xlu0 %1549
    %v1551 = vmul.f32 %v1539, 0.020833334
    %v1552 = vmul.f32 %v1542, 0.020833334
    %v1553 = vmul.f32 %v1547, 0.020833334
    %v1554 = vmul.f32 %v1550, 0.020833334
    %v1555 = vmul.f32 %v1551, %v1551
    %v1556 = vmul.f32 %v1552, %v1552
    %v1557 = vsub.f32 %v1553, %v1555
    %v1558 = vsub.f32 %v1554, %v1556
    %v1559 = vsub.f32 %v1533, %v1551
    %v1560 = vsub.f32 %v1534, %v1552
    %v1561 = vadd.f32 %v1557, 1e-05
    %v1562 = vadd.f32 %v1558, 1e-05
    %v1563 = vrsqrt.pop %v1561
    %v1564 = vrsqrt.pop %v1562
    %v1565 = vmul.f32 %v1559, %v1563
    %v1566 = vmul.f32 %v1560, %v1564
    %v1567 = vmul.f32 %v1565, %v1535
    %v1568 = vmul.f32 %v1566, %v1535
    %v1569 = vadd.f32 %v1567, %v1536
    %v1570 = vadd.f32 %v1568, %v1536
    %s1571 = scalar_lea.vmem %s3, 96
    %v1572 = vld [vmem:[%s1571] sm:$0xff]
    %v1573 = vld [vmem:[%s1571 + $0x8] sm:$0xff]
    %v1574 = vld [vmem:[%s1571 + $0x10] sm:$0xff]
    %v1575 = vld [vmem:[%s1571 + $0x18] sm:$0xff]
    %v1576 = vld [vmem:[%s1571 + $0x20] sm:$0xff]
    %v1577 = vld [vmem:[%s1571 + $0x28] sm:$0xff]
    %v1578 = vld [vmem:[%s1571 + $0x30] sm:$0xff]
    %v1579 = vld [vmem:[%s1571 + $0x38] sm:$0xff]
    %v1580 = vld [vmem:[%s1571 + $0x40] sm:$0xff]
    %v1581 = vld [vmem:[%s1571 + $0x48] sm:$0xff]
    %v1582 = vld [vmem:[%s1571 + $0x50] sm:$0xff]
    %v1583 = vld [vmem:[%s1571 + $0x58] sm:$0xff]
    %s1584 = scalar_lea.vmem %s2, 16
    %v1585 = vld [vmem:[%s1584] ss:$8 sm:$0x3]
    %v1587 = vlaneseq
    %v1588 = vshrl.u32 %v1587, 7
    %v1589 = vsub.s32 0, %v1588
    %v1590 = vrot.slane %v1585, %v1589
    %v1591 = vlaneseq
    %v1592 = vshrl.u32 %v1591, 7
    %v1593 = vsub.s32 1, %v1592
    %v1594 = vrot.slane %v1585, %v1593
    %v1598 = vsel %vm157, %v1569, 0
    %v1601 = vsel %vm157, %v1570, 0
    %1603 = vmatprep.subr.mxu0 0.0
    %1604 = vmatpush1.msra.mxu0 0.0
    %1605 = vmatprep.subr.mxu0 0.0
    %1606 = vmatpush1.msra.mxu0 0.0
    %1607 = vmatprep.subr.mxu0 0.0
    %1608 = vmatpush1.msra.mxu0 0.0
    %1609 = vmatprep.subr.mxu0 0.0
    %1610 = vmatpush1.msra.mxu0 0.0
    %1611 = vmatprep.subr.mxu0 0.0
    %1612 = vmatpush1.msra.mxu0 0.0
    %1613 = vmatprep.subr.mxu0 0.0
    %1614 = vmatpush1.msra.mxu0 0.0
    %1615 = vmatprep.subr.mxu0 0.0
    %1616 = vmatpush1.msra.mxu0 0.0
    %1617 = vmatprep.subr.mxu0 0.0
    %1618 = vmatpush1.msra.mxu0 0.0
    %1619 = vmatprep.subr.mxu0 0.0
    %1620 = vmatpush1.msra.mxu0 0.0
    %1621 = vmatprep.subr.mxu0 0.0
    %1622 = vmatpush1.msra.mxu0 0.0
    %1623 = vmatprep.subr.mxu0 %v1583
    %1624 = vmatpush1.msra.mxu0 %v1582
    %1625 = vmatprep.subr.mxu0 %v1581
    %1626 = vmatpush1.msra.mxu0 %v1580
    %1627 = vmatprep.subr.mxu0 %v1579
    %1628 = vmatpush1.msra.mxu0 %v1578
    %1629 = vmatprep.subr.mxu0 %v1577
    %1630 = vmatpush1.msra.mxu0 %v1576
    %1631 = vmatprep.subr.mxu0 %v1575
    %1632 = vmatpush1.msra.mxu0 %v1574
    %1633 = vmatprep.subr.mxu0 %v1573
    %1634 = vmatpush1.msra.mxu0 %v1572
    %1635 = vmatprep.subr.mxu0 0.0
    %1636 = vmatpush2.msra.mxu0 0.0
    %1637 = vmatprep.subr.mxu0 0.0
    %1638 = vmatpush2.msra.mxu0 0.0
    %1639 = vmatprep.subr.mxu0 0.0
    %1640 = vmatpush2.msra.mxu0 0.0
    %1641 = vmatprep.subr.mxu0 0.0
    %1642 = vmatpush2.msra.mxu0 0.0
    %1643 = vmatprep.subr.mxu0 0.0
    %1644 = vmatpush2.msra.mxu0 0.0
    %1645 = vmatprep.subr.mxu0 0.0
    %1646 = vmatpush2.msra.mxu0 0.0
    %1647 = vmatprep.subr.mxu0 0.0
    %1648 = vmatpush2.msra.mxu0 0.0
    %1649 = vmatprep.subr.mxu0 0.0
    %1650 = vmatpush2.msra.mxu0 0.0
    %1651 = vmatprep.subr.mxu0 0.0
    %1652 = vmatpush2.msra.mxu0 0.0
    %1653 = vmatprep.subr.mxu0 0.0
    %1654 = vmatpush2.msra.mxu0 0.0
    %1655 = vmatprep.subr.mxu0 0.0
    %1656 = vmatpush2.msra.mxu0 0.0
    %1657 = vmatprep.subr.mxu0 0.0
    %1658 = vmatpush2.msra.mxu0 0.0
    %1659 = vmatprep.subr.mxu0 0.0
    %1660 = vmatpush2.msra.mxu0 0.0
    %1661 = vmatprep.subr.mxu0 0.0
    %1662 = vmatpush2.msra.mxu0 0.0
    %1663 = vmatprep.subr.mxu0 0.0
    %1664 = vmatpush2.msra.mxu0 0.0
    %1665 = vmatprep.subr.mxu0 0.0
    %1666 = vmatpush2.msra.mxu0 0.0
    %1667 = vmatprep.mubr.f32.mxu0 0.0
    %1668 = vmatmul.mubr.f32.gmra.mxu0 %v1598
    %v1669 = vpop.f32.mrf.mxu0
    %v1670 = vadd.f32 %v1590, %v1669
    %v1671 = vpop.f32.mrf.mxu0
    %v1672 = vadd.f32 %v1594, %v1671
    %1673 = vmatprep.mubr.f32.mxu0 0.0
    %1674 = vmatmul.mubr.f32.gmra.mxu0 %v1601
    %v1675 = vpop.f32.mrf.mxu0
    %v1676 = vadd.f32 %v1590, %v1675
    %v1677 = vpop.f32.mrf.mxu0
    %v1678 = vadd.f32 %v1594, %v1677
    %1679 = vdwg.mxu0
    %v1680 = vmul.f32 %v1670, %v266
    %v1681 = vmul.f32 %v1670, %v268
    %v1682 = vmul.f32 %v1670, %v270
    %v1683 = vmul.f32 %v1670, %v272
    %v1684 = vmul.f32 %v1670, %v274
    %v1685 = vmul.f32 %v1670, %v276
    %v1686 = vmul.f32 %v1670, %v278
    %v1687 = vmul.f32 %v1670, %v280
    %v1688 = vmul.f32 %v1670, %v282
    %v1689 = vmul.f32 %v1670, %v284
    %v1690 = vmul.f32 %v1670, %v286
    %v1691 = vmul.f32 %v1670, %v288
    %v1692 = vmul.f32 %v1670, %v314
    %v1693 = vmul.f32 %v1672, %v314
    %v1694 = vmul.f32 %v1670, %v316
    %v1695 = vmul.f32 %v1672, %v316
    %v1696 = vmul.f32 %v1670, %v318
    %v1697 = vmul.f32 %v1672, %v318
    %v1698 = vmul.f32 %v1670, %v320
    %v1699 = vmul.f32 %v1672, %v320
    %v1700 = vmul.f32 %v1670, %v322
    %v1701 = vmul.f32 %v1672, %v322
    %v1702 = vmul.f32 %v1670, %v324
    %v1703 = vmul.f32 %v1672, %v324
    %v1704 = vmul.f32 %v1670, %v326
    %v1705 = vmul.f32 %v1672, %v326
    %v1706 = vmul.f32 %v1670, %v328
    %v1707 = vmul.f32 %v1672, %v328
    %v1708 = vmul.f32 %v1670, %v330
    %v1709 = vmul.f32 %v1672, %v330
    %v1710 = vmul.f32 %v1670, %v332
    %v1711 = vmul.f32 %v1672, %v332
    %v1712 = vmul.f32 %v1670, %v334
    %v1713 = vmul.f32 %v1672, %v334
    %v1714 = vmul.f32 %v1670, %v336
    %v1715 = vmul.f32 %v1672, %v336
    %1728 = vrot.lane.b32.xlu0 %v1680, 80
    %v1729 = vpop.permute.xlu0 %1728
    %1730 = vrot.lane.b32.xlu0 %v1681, 80
    %v1731 = vpop.permute.xlu0 %1730
    %1732 = vrot.lane.b32.xlu0 %v1682, 80
    %v1733 = vpop.permute.xlu0 %1732
    %1734 = vrot.lane.b32.xlu0 %v1683, 80
    %v1735 = vpop.permute.xlu0 %1734
    %1736 = vrot.lane.b32.xlu0 %v1684, 80
    %v1737 = vpop.permute.xlu0 %1736
    %1738 = vrot.lane.b32.xlu0 %v1685, 80
    %v1739 = vpop.permute.xlu0 %1738
    %1740 = vrot.lane.b32.xlu0 %v1686, 80
    %v1741 = vpop.permute.xlu0 %1740
    %1742 = vrot.lane.b32.xlu0 %v1687, 80
    %v1743 = vpop.permute.xlu0 %1742
    %1744 = vrot.lane.b32.xlu0 %v1688, 80
    %v1745 = vpop.permute.xlu0 %1744
    %1746 = vrot.lane.b32.xlu0 %v1689, 80
    %v1747 = vpop.permute.xlu0 %1746
    %1748 = vrot.lane.b32.xlu0 %v1690, 80
    %v1749 = vpop.permute.xlu0 %1748
    %1750 = vrot.lane.b32.xlu0 %v1691, 80
    %v1751 = vpop.permute.xlu0 %1750
    %v1753 = vsel %vm157, %v1670, 0
    %v1755 = vsel %vm157, %v1729, 0
    %v1757 = vsel %vm157, %v1731, 0
    %v1759 = vsel %vm157, %v1733, 0
    %v1761 = vsel %vm157, %v1735, 0
    %v1763 = vsel %vm157, %v1737, 0
    %v1765 = vsel %vm157, %v1739, 0
    %v1767 = vsel %vm157, %v1741, 0
    %v1769 = vsel %vm157, %v1743, 0
    %v1771 = vsel %vm157, %v1745, 0
    %v1773 = vsel %vm157, %v1747, 0
    %v1775 = vsel %vm157, %v1749, 0
    %v1777 = vsel %vm157, %v1751, 0
    %1779 = vmatprep.subr.mxu0 0.0
    %1780 = vmatpush1.xpose.msra.mxu0 0.0
    %1781 = vmatprep.subr.mxu0 0.0
    %1782 = vmatpush1.xpose.msra.mxu0 0.0
    %1783 = vmatprep.subr.mxu0 0.0
    %1784 = vmatpush1.xpose.msra.mxu0 0.0
    %1785 = vmatprep.subr.mxu0 0.0
    %1786 = vmatpush1.xpose.msra.mxu0 0.0
    %1787 = vmatprep.subr.mxu0 0.0
    %1788 = vmatpush1.xpose.msra.mxu0 %v1777
    %1789 = vmatprep.subr.mxu0 0.0
    %1790 = vmatpush1.xpose.msra.mxu0 %v1775
    %1791 = vmatprep.subr.mxu0 0.0
    %1792 = vmatpush1.xpose.msra.mxu0 %v1773
    %1793 = vmatprep.subr.mxu0 0.0
    %1794 = vmatpush1.xpose.msra.mxu0 %v1771
    %1795 = vmatprep.subr.mxu0 0.0
    %1796 = vmatpush1.xpose.msra.mxu0 %v1769
    %1797 = vmatprep.subr.mxu0 0.0
    %1798 = vmatpush1.xpose.msra.mxu0 %v1767
    %1799 = vmatprep.subr.mxu0 0.0
    %1800 = vmatpush1.xpose.msra.mxu0 %v1765
    %1801 = vmatprep.subr.mxu0 0.0
    %1802 = vmatpush1.xpose.msra.mxu0 %v1763
    %1803 = vmatprep.subr.mxu0 0.0
    %1804 = vmatpush1.xpose.msra.mxu0 %v1761
    %1805 = vmatprep.subr.mxu0 0.0
    %1806 = vmatpush1.xpose.msra.mxu0 %v1759
    %1807 = vmatprep.subr.mxu0 0.0
    %1808 = vmatpush1.xpose.msra.mxu0 %v1757
    %1809 = vmatprep.subr.mxu0 0.0
    %1810 = vmatpush1.xpose.msra.mxu0 %v1755
    %1811 = vmatprep.subr.mxu0 0.0
    %1812 = vmatpush2.xpose.msra.mxu0 0.0
    %1813 = vmatprep.subr.mxu0 0.0
    %1814 = vmatpush2.xpose.msra.mxu0 0.0
    %1815 = vmatprep.subr.mxu0 0.0
    %1816 = vmatpush2.xpose.msra.mxu0 0.0
    %1817 = vmatprep.subr.mxu0 0.0
    %1818 = vmatpush2.xpose.msra.mxu0 0.0
    %1819 = vmatprep.subr.mxu0 0.0
    %1820 = vmatpush2.xpose.msra.mxu0 0.0
    %1821 = vmatprep.subr.mxu0 0.0
    %1822 = vmatpush2.xpose.msra.mxu0 0.0
    %1823 = vmatprep.subr.mxu0 0.0
    %1824 = vmatpush2.xpose.msra.mxu0 0.0
    %1825 = vmatprep.subr.mxu0 0.0
    %1826 = vmatpush2.xpose.msra.mxu0 0.0
    %1827 = vmatprep.subr.mxu0 0.0
    %1828 = vmatpush2.xpose.msra.mxu0 0.0
    %1829 = vmatprep.subr.mxu0 0.0
    %1830 = vmatpush2.xpose.msra.mxu0 0.0
    %1831 = vmatprep.subr.mxu0 0.0
    %1832 = vmatpush2.xpose.msra.mxu0 0.0
    %1833 = vmatprep.subr.mxu0 0.0
    %1834 = vmatpush2.xpose.msra.mxu0 0.0
    %1835 = vmatprep.subr.mxu0 0.0
    %1836 = vmatpush2.xpose.msra.mxu0 0.0
    %1837 = vmatprep.subr.mxu0 0.0
    %1838 = vmatpush2.xpose.msra.mxu0 0.0
    %1839 = vmatprep.subr.mxu0 0.0
    %1840 = vmatpush2.xpose.msra.mxu0 0.0
    %1841 = vmatprep.subr.mxu0 0.0
    %1842 = vmatpush2.xpose.msra.mxu0 0.0
    %1843 = vmatprep.mubr.f32.mxu0 0.0
    %1844 = vmatmul.mubr.f32.gmra.mxu0 %v1753
    %v1845 = vpop.f32.mrf.mxu0
    %v1846 = vadd.f32 0.0, %v1845
    %v1847 = vpop.f32.mrf.mxu0
    %1848 = vdwg.mxu0
    %v1849 = vsel %vm506, %v1846, -inf
    %1850 = vmax.xlane.f32.xlu0 %v1849
    %v1851 = vpop.xlane.xlu0 %1850
    %v1852 = vsub.f32 %v1846, %v1851
    %v1853 = vmul.f32 %v1852, 1.442695
    %v1854 = vpow.pop %v1853
    %v1856 = vsel %vm506, %v1854, 0
    %1858 = vmatprep.subr.mxu0 0.0
    %1859 = vmatpush1.msra.mxu0 0.0
    %1860 = vmatprep.subr.mxu0 0.0
    %1861 = vmatpush1.msra.mxu0 0.0
    %1862 = vmatprep.subr.mxu0 0.0
    %1863 = vmatpush1.msra.mxu0 0.0
    %1864 = vmatprep.subr.mxu0 0.0
    %1865 = vmatpush1.msra.mxu0 0.0
    %1866 = vmatprep.subr.mxu0 0.0
    %1867 = vmatpush1.msra.mxu0 %v524
    %1868 = vmatprep.subr.mxu0 0.0
    %1869 = vmatpush1.msra.mxu0 %v523
    %1870 = vmatprep.subr.mxu0 0.0
    %1871 = vmatpush1.msra.mxu0 %v522
    %1872 = vmatprep.subr.mxu0 0.0
    %1873 = vmatpush1.msra.mxu0 %v521
    %1874 = vmatprep.subr.mxu0 0.0
    %1875 = vmatpush1.msra.mxu0 %v520
    %1876 = vmatprep.subr.mxu0 0.0
    %1877 = vmatpush1.msra.mxu0 %v519
    %1878 = vmatprep.subr.mxu0 0.0
    %1879 = vmatpush1.msra.mxu0 %v518
    %1880 = vmatprep.subr.mxu0 0.0
    %1881 = vmatpush1.msra.mxu0 %v517
    %1882 = vmatprep.subr.mxu0 0.0
    %1883 = vmatpush1.msra.mxu0 %v516
    %1884 = vmatprep.subr.mxu0 0.0
    %1885 = vmatpush1.msra.mxu0 %v515
    %1886 = vmatprep.subr.mxu0 0.0
    %1887 = vmatpush1.msra.mxu0 %v514
    %1888 = vmatprep.subr.mxu0 0.0
    %1889 = vmatpush1.msra.mxu0 %v513
    %1890 = vmatprep.subr.mxu0 0.0
    %1891 = vmatpush2.msra.mxu0 0.0
    %1892 = vmatprep.subr.mxu0 0.0
    %1893 = vmatpush2.msra.mxu0 0.0
    %1894 = vmatprep.subr.mxu0 0.0
    %1895 = vmatpush2.msra.mxu0 0.0
    %1896 = vmatprep.subr.mxu0 0.0
    %1897 = vmatpush2.msra.mxu0 0.0
    %1898 = vmatprep.subr.mxu0 0.0
    %1899 = vmatpush2.msra.mxu0 0.0
    %1900 = vmatprep.subr.mxu0 0.0
    %1901 = vmatpush2.msra.mxu0 0.0
    %1902 = vmatprep.subr.mxu0 0.0
    %1903 = vmatpush2.msra.mxu0 0.0
    %1904 = vmatprep.subr.mxu0 0.0
    %1905 = vmatpush2.msra.mxu0 0.0
    %1906 = vmatprep.subr.mxu0 0.0
    %1907 = vmatpush2.msra.mxu0 0.0
    %1908 = vmatprep.subr.mxu0 0.0
    %1909 = vmatpush2.msra.mxu0 0.0
    %1910 = vmatprep.subr.mxu0 0.0
    %1911 = vmatpush2.msra.mxu0 0.0
    %1912 = vmatprep.subr.mxu0 0.0
    %1913 = vmatpush2.msra.mxu0 0.0
    %1914 = vmatprep.subr.mxu0 0.0
    %1915 = vmatpush2.msra.mxu0 0.0
    %1916 = vmatprep.subr.mxu0 0.0
    %1917 = vmatpush2.msra.mxu0 0.0
    %1918 = vmatprep.subr.mxu0 0.0
    %1919 = vmatpush2.msra.mxu0 0.0
    %1920 = vmatprep.subr.mxu0 0.0
    %1921 = vmatpush2.msra.mxu0 0.0
    %1922 = vmatprep.mubr.f32.mxu0 0.0
    %1923 = vmatmul.mubr.f32.gmra.mxu0 %v1856
    %v1924 = vpop.f32.mrf.mxu0
    %v1925 = vadd.f32 0.0, %v1924
    %v1926 = vpop.f32.mrf.mxu0
    %1927 = vdwg.mxu0
    %v1928 = vrcp.pop %v1925
    %v1929 = vmul.f32 %v1854, %v1928
    %1954 = vrot.lane.b32.xlu0 %v1692, 32
    %v1955 = vpop.permute.xlu0 %1954
    %1956 = vrot.lane.b32.xlu0 %v1693, 32
    %v1957 = vpop.permute.xlu0 %1956
    %1958 = vrot.lane.b32.xlu0 %v1694, 32
    %v1959 = vpop.permute.xlu0 %1958
    %1960 = vrot.lane.b32.xlu0 %v1695, 32
    %v1961 = vpop.permute.xlu0 %1960
    %1962 = vrot.lane.b32.xlu0 %v1696, 32
    %v1963 = vpop.permute.xlu0 %1962
    %1964 = vrot.lane.b32.xlu0 %v1697, 32
    %v1965 = vpop.permute.xlu0 %1964
    %1966 = vrot.lane.b32.xlu0 %v1698, 32
    %v1967 = vpop.permute.xlu0 %1966
    %1968 = vrot.lane.b32.xlu0 %v1699, 32
    %v1969 = vpop.permute.xlu0 %1968
    %1970 = vrot.lane.b32.xlu0 %v1700, 32
    %v1971 = vpop.permute.xlu0 %1970
    %1972 = vrot.lane.b32.xlu0 %v1701, 32
    %v1973 = vpop.permute.xlu0 %1972
    %1974 = vrot.lane.b32.xlu0 %v1702, 32
    %v1975 = vpop.permute.xlu0 %1974
    %1976 = vrot.lane.b32.xlu0 %v1703, 32
    %v1977 = vpop.permute.xlu0 %1976
    %1978 = vrot.lane.b32.xlu0 %v1704, 32
    %v1979 = vpop.permute.xlu0 %1978
    %1980 = vrot.lane.b32.xlu0 %v1705, 32
    %v1981 = vpop.permute.xlu0 %1980
    %1982 = vrot.lane.b32.xlu0 %v1706, 32
    %v1983 = vpop.permute.xlu0 %1982
    %1984 = vrot.lane.b32.xlu0 %v1707, 32
    %v1985 = vpop.permute.xlu0 %1984
    %1986 = vrot.lane.b32.xlu0 %v1708, 32
    %v1987 = vpop.permute.xlu0 %1986
    %1988 = vrot.lane.b32.xlu0 %v1709, 32
    %v1989 = vpop.permute.xlu0 %1988
    %1990 = vrot.lane.b32.xlu0 %v1710, 32
    %v1991 = vpop.permute.xlu0 %1990
    %1992 = vrot.lane.b32.xlu0 %v1711, 32
    %v1993 = vpop.permute.xlu0 %1992
    %1994 = vrot.lane.b32.xlu0 %v1712, 32
    %v1995 = vpop.permute.xlu0 %1994
    %1996 = vrot.lane.b32.xlu0 %v1713, 32
    %v1997 = vpop.permute.xlu0 %1996
    %1998 = vrot.lane.b32.xlu0 %v1714, 32
    %v1999 = vpop.permute.xlu0 %1998
    %2000 = vrot.lane.b32.xlu0 %v1715, 32
    %v2001 = vpop.permute.xlu0 %2000
    %v2002 = vsel %vm672, %v1955, %v1957
    %v2003 = vsel %vm672, %v1959, %v1961
    %v2004 = vsel %vm672, %v1963, %v1965
    %v2005 = vsel %vm672, %v1967, %v1969
    %v2006 = vsel %vm672, %v1971, %v1973
    %v2007 = vsel %vm672, %v1975, %v1977
    %v2008 = vsel %vm672, %v1979, %v1981
    %v2009 = vsel %vm672, %v1983, %v1985
    %v2010 = vsel %vm672, %v1987, %v1989
    %v2011 = vsel %vm672, %v1991, %v1993
    %v2012 = vsel %vm672, %v1995, %v1997
    %v2013 = vsel %vm672, %v1999, %v2001
    %v2027 = vsel %vm506, %v1929, 0
    %2029 = vmatprep.subr.mxu0 0.0
    %2030 = vmatpush1.msra.mxu0 0.0
    %2031 = vmatprep.subr.mxu0 0.0
    %2032 = vmatpush1.msra.mxu0 0.0
    %2033 = vmatprep.subr.mxu0 0.0
    %2034 = vmatpush1.msra.mxu0 0.0
    %2035 = vmatprep.subr.mxu0 0.0
    %2036 = vmatpush1.msra.mxu0 0.0
    %2037 = vmatprep.subr.mxu0 0.0
    %2038 = vmatpush1.msra.mxu0 %v2013
    %2039 = vmatprep.subr.mxu0 0.0
    %2040 = vmatpush1.msra.mxu0 %v2012
    %2041 = vmatprep.subr.mxu0 0.0
    %2042 = vmatpush1.msra.mxu0 %v2011
    %2043 = vmatprep.subr.mxu0 0.0
    %2044 = vmatpush1.msra.mxu0 %v2010
    %2045 = vmatprep.subr.mxu0 0.0
    %2046 = vmatpush1.msra.mxu0 %v2009
    %2047 = vmatprep.subr.mxu0 0.0
    %2048 = vmatpush1.msra.mxu0 %v2008
    %2049 = vmatprep.subr.mxu0 0.0
    %2050 = vmatpush1.msra.mxu0 %v2007
    %2051 = vmatprep.subr.mxu0 0.0
    %2052 = vmatpush1.msra.mxu0 %v2006
    %2053 = vmatprep.subr.mxu0 0.0
    %2054 = vmatpush1.msra.mxu0 %v2005
    %2055 = vmatprep.subr.mxu0 0.0
    %2056 = vmatpush1.msra.mxu0 %v2004
    %2057 = vmatprep.subr.mxu0 0.0
    %2058 = vmatpush1.msra.mxu0 %v2003
    %2059 = vmatprep.subr.mxu0 0.0
    %2060 = vmatpush1.msra.mxu0 %v2002
    %2061 = vmatprep.subr.mxu0 0.0
    %2062 = vmatpush2.msra.mxu0 0.0
    %2063 = vmatprep.subr.mxu0 0.0
    %2064 = vmatpush2.msra.mxu0 0.0
    %2065 = vmatprep.subr.mxu0 0.0
    %2066 = vmatpush2.msra.mxu0 0.0
    %2067 = vmatprep.subr.mxu0 0.0
    %2068 = vmatpush2.msra.mxu0 0.0
    %2069 = vmatprep.subr.mxu0 0.0
    %2070 = vmatpush2.msra.mxu0 0.0
    %2071 = vmatprep.subr.mxu0 0.0
    %2072 = vmatpush2.msra.mxu0 0.0
    %2073 = vmatprep.subr.mxu0 0.0
    %2074 = vmatpush2.msra.mxu0 0.0
    %2075 = vmatprep.subr.mxu0 0.0
    %2076 = vmatpush2.msra.mxu0 0.0
    %2077 = vmatprep.subr.mxu0 0.0
    %2078 = vmatpush2.msra.mxu0 0.0
    %2079 = vmatprep.subr.mxu0 0.0
    %2080 = vmatpush2.msra.mxu0 0.0
    %2081 = vmatprep.subr.mxu0 0.0
    %2082 = vmatpush2.msra.mxu0 0.0
    %2083 = vmatprep.subr.mxu0 0.0
    %2084 = vmatpush2.msra.mxu0 0.0
    %2085 = vmatprep.subr.mxu0 0.0
    %2086 = vmatpush2.msra.mxu0 0.0
    %2087 = vmatprep.subr.mxu0 0.0
    %2088 = vmatpush2.msra.mxu0 0.0
    %2089 = vmatprep.subr.mxu0 0.0
    %2090 = vmatpush2.msra.mxu0 0.0
    %2091 = vmatprep.subr.mxu0 0.0
    %2092 = vmatpush2.msra.mxu0 0.0
    %2093 = vmatprep.mubr.f32.mxu0 0.0
    %2094 = vmatmul.mubr.f32.gmra.mxu0 %v2027
    %v2095 = vpop.f32.mrf.mxu0
    %v2096 = vadd.f32 0.0, %v2095
    %v2097 = vpop.f32.mrf.mxu0
    %2098 = vdwg.mxu0
    %v2099 = vmul.f32 %v1676, %v266
    %v2100 = vmul.f32 %v1676, %v268
    %v2101 = vmul.f32 %v1676, %v270
    %v2102 = vmul.f32 %v1676, %v272
    %v2103 = vmul.f32 %v1676, %v274
    %v2104 = vmul.f32 %v1676, %v276
    %v2105 = vmul.f32 %v1676, %v278
    %v2106 = vmul.f32 %v1676, %v280
    %v2107 = vmul.f32 %v1676, %v282
    %v2108 = vmul.f32 %v1676, %v284
    %v2109 = vmul.f32 %v1676, %v286
    %v2110 = vmul.f32 %v1676, %v288
    %v2111 = vmul.f32 %v1676, %v314
    %v2112 = vmul.f32 %v1678, %v314
    %v2113 = vmul.f32 %v1676, %v316
    %v2114 = vmul.f32 %v1678, %v316
    %v2115 = vmul.f32 %v1676, %v318
    %v2116 = vmul.f32 %v1678, %v318
    %v2117 = vmul.f32 %v1676, %v320
    %v2118 = vmul.f32 %v1678, %v320
    %v2119 = vmul.f32 %v1676, %v322
    %v2120 = vmul.f32 %v1678, %v322
    %v2121 = vmul.f32 %v1676, %v324
    %v2122 = vmul.f32 %v1678, %v324
    %v2123 = vmul.f32 %v1676, %v326
    %v2124 = vmul.f32 %v1678, %v326
    %v2125 = vmul.f32 %v1676, %v328
    %v2126 = vmul.f32 %v1678, %v328
    %v2127 = vmul.f32 %v1676, %v330
    %v2128 = vmul.f32 %v1678, %v330
    %v2129 = vmul.f32 %v1676, %v332
    %v2130 = vmul.f32 %v1678, %v332
    %v2131 = vmul.f32 %v1676, %v334
    %v2132 = vmul.f32 %v1678, %v334
    %v2133 = vmul.f32 %v1676, %v336
    %v2134 = vmul.f32 %v1678, %v336
    %2147 = vrot.lane.b32.xlu0 %v2099, 80
    %v2148 = vpop.permute.xlu0 %2147
    %2149 = vrot.lane.b32.xlu0 %v2100, 80
    %v2150 = vpop.permute.xlu0 %2149
    %2151 = vrot.lane.b32.xlu0 %v2101, 80
    %v2152 = vpop.permute.xlu0 %2151
    %2153 = vrot.lane.b32.xlu0 %v2102, 80
    %v2154 = vpop.permute.xlu0 %2153
    %2155 = vrot.lane.b32.xlu0 %v2103, 80
    %v2156 = vpop.permute.xlu0 %2155
    %2157 = vrot.lane.b32.xlu0 %v2104, 80
    %v2158 = vpop.permute.xlu0 %2157
    %2159 = vrot.lane.b32.xlu0 %v2105, 80
    %v2160 = vpop.permute.xlu0 %2159
    %2161 = vrot.lane.b32.xlu0 %v2106, 80
    %v2162 = vpop.permute.xlu0 %2161
    %2163 = vrot.lane.b32.xlu0 %v2107, 80
    %v2164 = vpop.permute.xlu0 %2163
    %2165 = vrot.lane.b32.xlu0 %v2108, 80
    %v2166 = vpop.permute.xlu0 %2165
    %2167 = vrot.lane.b32.xlu0 %v2109, 80
    %v2168 = vpop.permute.xlu0 %2167
    %2169 = vrot.lane.b32.xlu0 %v2110, 80
    %v2170 = vpop.permute.xlu0 %2169
    %v2172 = vsel %vm157, %v1676, 0
    %v2174 = vsel %vm157, %v2148, 0
    %v2176 = vsel %vm157, %v2150, 0
    %v2178 = vsel %vm157, %v2152, 0
    %v2180 = vsel %vm157, %v2154, 0
    %v2182 = vsel %vm157, %v2156, 0
    %v2184 = vsel %vm157, %v2158, 0
    %v2186 = vsel %vm157, %v2160, 0
    %v2188 = vsel %vm157, %v2162, 0
    %v2190 = vsel %vm157, %v2164, 0
    %v2192 = vsel %vm157, %v2166, 0
    %v2194 = vsel %vm157, %v2168, 0
    %v2196 = vsel %vm157, %v2170, 0
    %2198 = vmatprep.subr.mxu0 0.0
    %2199 = vmatpush1.xpose.msra.mxu0 0.0
    %2200 = vmatprep.subr.mxu0 0.0
    %2201 = vmatpush1.xpose.msra.mxu0 0.0
    %2202 = vmatprep.subr.mxu0 0.0
    %2203 = vmatpush1.xpose.msra.mxu0 0.0
    %2204 = vmatprep.subr.mxu0 0.0
    %2205 = vmatpush1.xpose.msra.mxu0 0.0
    %2206 = vmatprep.subr.mxu0 0.0
    %2207 = vmatpush1.xpose.msra.mxu0 %v2196
    %2208 = vmatprep.subr.mxu0 0.0
    %2209 = vmatpush1.xpose.msra.mxu0 %v2194
    %2210 = vmatprep.subr.mxu0 0.0
    %2211 = vmatpush1.xpose.msra.mxu0 %v2192
    %2212 = vmatprep.subr.mxu0 0.0
    %2213 = vmatpush1.xpose.msra.mxu0 %v2190
    %2214 = vmatprep.subr.mxu0 0.0
    %2215 = vmatpush1.xpose.msra.mxu0 %v2188
    %2216 = vmatprep.subr.mxu0 0.0
    %2217 = vmatpush1.xpose.msra.mxu0 %v2186
    %2218 = vmatprep.subr.mxu0 0.0
    %2219 = vmatpush1.xpose.msra.mxu0 %v2184
    %2220 = vmatprep.subr.mxu0 0.0
    %2221 = vmatpush1.xpose.msra.mxu0 %v2182
    %2222 = vmatprep.subr.mxu0 0.0
    %2223 = vmatpush1.xpose.msra.mxu0 %v2180
    %2224 = vmatprep.subr.mxu0 0.0
    %2225 = vmatpush1.xpose.msra.mxu0 %v2178
    %2226 = vmatprep.subr.mxu0 0.0
    %2227 = vmatpush1.xpose.msra.mxu0 %v2176
    %2228 = vmatprep.subr.mxu0 0.0
    %2229 = vmatpush1.xpose.msra.mxu0 %v2174
    %2230 = vmatprep.subr.mxu0 0.0
    %2231 = vmatpush2.xpose.msra.mxu0 0.0
    %2232 = vmatprep.subr.mxu0 0.0
    %2233 = vmatpush2.xpose.msra.mxu0 0.0
    %2234 = vmatprep.subr.mxu0 0.0
    %2235 = vmatpush2.xpose.msra.mxu0 0.0
    %2236 = vmatprep.subr.mxu0 0.0
    %2237 = vmatpush2.xpose.msra.mxu0 0.0
    %2238 = vmatprep.subr.mxu0 0.0
    %2239 = vmatpush2.xpose.msra.mxu0 0.0
    %2240 = vmatprep.subr.mxu0 0.0
    %2241 = vmatpush2.xpose.msra.mxu0 0.0
    %2242 = vmatprep.subr.mxu0 0.0
    %2243 = vmatpush2.xpose.msra.mxu0 0.0
    %2244 = vmatprep.subr.mxu0 0.0
    %2245 = vmatpush2.xpose.msra.mxu0 0.0
    %2246 = vmatprep.subr.mxu0 0.0
    %2247 = vmatpush2.xpose.msra.mxu0 0.0
    %2248 = vmatprep.subr.mxu0 0.0
    %2249 = vmatpush2.xpose.msra.mxu0 0.0
    %2250 = vmatprep.subr.mxu0 0.0
    %2251 = vmatpush2.xpose.msra.mxu0 0.0
    %2252 = vmatprep.subr.mxu0 0.0
    %2253 = vmatpush2.xpose.msra.mxu0 0.0
    %2254 = vmatprep.subr.mxu0 0.0
    %2255 = vmatpush2.xpose.msra.mxu0 0.0
    %2256 = vmatprep.subr.mxu0 0.0
    %2257 = vmatpush2.xpose.msra.mxu0 0.0
    %2258 = vmatprep.subr.mxu0 0.0
    %2259 = vmatpush2.xpose.msra.mxu0 0.0
    %2260 = vmatprep.subr.mxu0 0.0
    %2261 = vmatpush2.xpose.msra.mxu0 0.0
    %2262 = vmatprep.mubr.f32.mxu0 0.0
    %2263 = vmatmul.mubr.f32.gmra.mxu0 %v2172
    %v2264 = vpop.f32.mrf.mxu0
    %v2265 = vadd.f32 0.0, %v2264
    %v2266 = vpop.f32.mrf.mxu0
    %2267 = vdwg.mxu0
    %v2268 = vsel %vm506, %v2265, -inf
    %2269 = vmax.xlane.f32.xlu0 %v2268
    %v2270 = vpop.xlane.xlu0 %2269
    %v2271 = vsub.f32 %v2265, %v2270
    %v2272 = vmul.f32 %v2271, 1.442695
    %v2273 = vpow.pop %v2272
    %v2275 = vsel %vm506, %v2273, 0
    %2277 = vmatprep.subr.mxu0 0.0
    %2278 = vmatpush1.msra.mxu0 0.0
    %2279 = vmatprep.subr.mxu0 0.0
    %2280 = vmatpush1.msra.mxu0 0.0
    %2281 = vmatprep.subr.mxu0 0.0
    %2282 = vmatpush1.msra.mxu0 0.0
    %2283 = vmatprep.subr.mxu0 0.0
    %2284 = vmatpush1.msra.mxu0 0.0
    %2285 = vmatprep.subr.mxu0 0.0
    %2286 = vmatpush1.msra.mxu0 %v524
    %2287 = vmatprep.subr.mxu0 0.0
    %2288 = vmatpush1.msra.mxu0 %v523
    %2289 = vmatprep.subr.mxu0 0.0
    %2290 = vmatpush1.msra.mxu0 %v522
    %2291 = vmatprep.subr.mxu0 0.0
    %2292 = vmatpush1.msra.mxu0 %v521
    %2293 = vmatprep.subr.mxu0 0.0
    %2294 = vmatpush1.msra.mxu0 %v520
    %2295 = vmatprep.subr.mxu0 0.0
    %2296 = vmatpush1.msra.mxu0 %v519
    %2297 = vmatprep.subr.mxu0 0.0
    %2298 = vmatpush1.msra.mxu0 %v518
    %2299 = vmatprep.subr.mxu0 0.0
    %2300 = vmatpush1.msra.mxu0 %v517
    %2301 = vmatprep.subr.mxu0 0.0
    %2302 = vmatpush1.msra.mxu0 %v516
    %2303 = vmatprep.subr.mxu0 0.0
    %2304 = vmatpush1.msra.mxu0 %v515
    %2305 = vmatprep.subr.mxu0 0.0
    %2306 = vmatpush1.msra.mxu0 %v514
    %2307 = vmatprep.subr.mxu0 0.0
    %2308 = vmatpush1.msra.mxu0 %v513
    %2309 = vmatprep.subr.mxu0 0.0
    %2310 = vmatpush2.msra.mxu0 0.0
    %2311 = vmatprep.subr.mxu0 0.0
    %2312 = vmatpush2.msra.mxu0 0.0
    %2313 = vmatprep.subr.mxu0 0.0
    %2314 = vmatpush2.msra.mxu0 0.0
    %2315 = vmatprep.subr.mxu0 0.0
    %2316 = vmatpush2.msra.mxu0 0.0
    %2317 = vmatprep.subr.mxu0 0.0
    %2318 = vmatpush2.msra.mxu0 0.0
    %2319 = vmatprep.subr.mxu0 0.0
    %2320 = vmatpush2.msra.mxu0 0.0
    %2321 = vmatprep.subr.mxu0 0.0
    %2322 = vmatpush2.msra.mxu0 0.0
    %2323 = vmatprep.subr.mxu0 0.0
    %2324 = vmatpush2.msra.mxu0 0.0
    %2325 = vmatprep.subr.mxu0 0.0
    %2326 = vmatpush2.msra.mxu0 0.0
    %2327 = vmatprep.subr.mxu0 0.0
    %2328 = vmatpush2.msra.mxu0 0.0
    %2329 = vmatprep.subr.mxu0 0.0
    %2330 = vmatpush2.msra.mxu0 0.0
    %2331 = vmatprep.subr.mxu0 0.0
    %2332 = vmatpush2.msra.mxu0 0.0
    %2333 = vmatprep.subr.mxu0 0.0
    %2334 = vmatpush2.msra.mxu0 0.0
    %2335 = vmatprep.subr.mxu0 0.0
    %2336 = vmatpush2.msra.mxu0 0.0
    %2337 = vmatprep.subr.mxu0 0.0
    %2338 = vmatpush2.msra.mxu0 0.0
    %2339 = vmatprep.subr.mxu0 0.0
    %2340 = vmatpush2.msra.mxu0 0.0
    %2341 = vmatprep.mubr.f32.mxu0 0.0
    %2342 = vmatmul.mubr.f32.gmra.mxu0 %v2275
    %v2343 = vpop.f32.mrf.mxu0
    %v2344 = vadd.f32 0.0, %v2343
    %v2345 = vpop.f32.mrf.mxu0
    %2346 = vdwg.mxu0
    %v2347 = vrcp.pop %v2344
    %v2348 = vmul.f32 %v2273, %v2347
    %2373 = vrot.lane.b32.xlu0 %v2111, 32
    %v2374 = vpop.permute.xlu0 %2373
    %2375 = vrot.lane.b32.xlu0 %v2112, 32
    %v2376 = vpop.permute.xlu0 %2375
    %2377 = vrot.lane.b32.xlu0 %v2113, 32
    %v2378 = vpop.permute.xlu0 %2377
    %2379 = vrot.lane.b32.xlu0 %v2114, 32
    %v2380 = vpop.permute.xlu0 %2379
    %2381 = vrot.lane.b32.xlu0 %v2115, 32
    %v2382 = vpop.permute.xlu0 %2381
    %2383 = vrot.lane.b32.xlu0 %v2116, 32
    %v2384 = vpop.permute.xlu0 %2383
    %2385 = vrot.lane.b32.xlu0 %v2117, 32
    %v2386 = vpop.permute.xlu0 %2385
    %2387 = vrot.lane.b32.xlu0 %v2118, 32
    %v2388 = vpop.permute.xlu0 %2387
    %2389 = vrot.lane.b32.xlu0 %v2119, 32
    %v2390 = vpop.permute.xlu0 %2389
    %2391 = vrot.lane.b32.xlu0 %v2120, 32
    %v2392 = vpop.permute.xlu0 %2391
    %2393 = vrot.lane.b32.xlu0 %v2121, 32
    %v2394 = vpop.permute.xlu0 %2393
    %2395 = vrot.lane.b32.xlu0 %v2122, 32
    %v2396 = vpop.permute.xlu0 %2395
    %2397 = vrot.lane.b32.xlu0 %v2123, 32
    %v2398 = vpop.permute.xlu0 %2397
    %2399 = vrot.lane.b32.xlu0 %v2124, 32
    %v2400 = vpop.permute.xlu0 %2399
    %2401 = vrot.lane.b32.xlu0 %v2125, 32
    %v2402 = vpop.permute.xlu0 %2401
    %2403 = vrot.lane.b32.xlu0 %v2126, 32
    %v2404 = vpop.permute.xlu0 %2403
    %2405 = vrot.lane.b32.xlu0 %v2127, 32
    %v2406 = vpop.permute.xlu0 %2405
    %2407 = vrot.lane.b32.xlu0 %v2128, 32
    %v2408 = vpop.permute.xlu0 %2407
    %2409 = vrot.lane.b32.xlu0 %v2129, 32
    %v2410 = vpop.permute.xlu0 %2409
    %2411 = vrot.lane.b32.xlu0 %v2130, 32
    %v2412 = vpop.permute.xlu0 %2411
    %2413 = vrot.lane.b32.xlu0 %v2131, 32
    %v2414 = vpop.permute.xlu0 %2413
    %2415 = vrot.lane.b32.xlu0 %v2132, 32
    %v2416 = vpop.permute.xlu0 %2415
    %2417 = vrot.lane.b32.xlu0 %v2133, 32
    %v2418 = vpop.permute.xlu0 %2417
    %2419 = vrot.lane.b32.xlu0 %v2134, 32
    %v2420 = vpop.permute.xlu0 %2419
    %v2421 = vsel %vm672, %v2374, %v2376
    %v2422 = vsel %vm672, %v2378, %v2380
    %v2423 = vsel %vm672, %v2382, %v2384
    %v2424 = vsel %vm672, %v2386, %v2388
    %v2425 = vsel %vm672, %v2390, %v2392
    %v2426 = vsel %vm672, %v2394, %v2396
    %v2427 = vsel %vm672, %v2398, %v2400
    %v2428 = vsel %vm672, %v2402, %v2404
    %v2429 = vsel %vm672, %v2406, %v2408
    %v2430 = vsel %vm672, %v2410, %v2412
    %v2431 = vsel %vm672, %v2414, %v2416
    %v2432 = vsel %vm672, %v2418, %v2420
    %v2446 = vsel %vm506, %v2348, 0
    %2448 = vmatprep.subr.mxu0 0.0
    %2449 = vmatpush1.msra.mxu0 0.0
    %2450 = vmatprep.subr.mxu0 0.0
    %2451 = vmatpush1.msra.mxu0 0.0
    %2452 = vmatprep.subr.mxu0 0.0
    %2453 = vmatpush1.msra.mxu0 0.0
    %2454 = vmatprep.subr.mxu0 0.0
    %2455 = vmatpush1.msra.mxu0 0.0
    %2456 = vmatprep.subr.mxu0 0.0
    %2457 = vmatpush1.msra.mxu0 %v2432
    %2458 = vmatprep.subr.mxu0 0.0
    %2459 = vmatpush1.msra.mxu0 %v2431
    %2460 = vmatprep.subr.mxu0 0.0
    %2461 = vmatpush1.msra.mxu0 %v2430
    %2462 = vmatprep.subr.mxu0 0.0
    %2463 = vmatpush1.msra.mxu0 %v2429
    %2464 = vmatprep.subr.mxu0 0.0
    %2465 = vmatpush1.msra.mxu0 %v2428
    %2466 = vmatprep.subr.mxu0 0.0
    %2467 = vmatpush1.msra.mxu0 %v2427
    %2468 = vmatprep.subr.mxu0 0.0
    %2469 = vmatpush1.msra.mxu0 %v2426
    %2470 = vmatprep.subr.mxu0 0.0
    %2471 = vmatpush1.msra.mxu0 %v2425
    %2472 = vmatprep.subr.mxu0 0.0
    %2473 = vmatpush1.msra.mxu0 %v2424
    %2474 = vmatprep.subr.mxu0 0.0
    %2475 = vmatpush1.msra.mxu0 %v2423
    %2476 = vmatprep.subr.mxu0 0.0
    %2477 = vmatpush1.msra.mxu0 %v2422
    %2478 = vmatprep.subr.mxu0 0.0
    %2479 = vmatpush1.msra.mxu0 %v2421
    %2480 = vmatprep.subr.mxu0 0.0
    %2481 = vmatpush2.msra.mxu0 0.0
    %2482 = vmatprep.subr.mxu0 0.0
    %2483 = vmatpush2.msra.mxu0 0.0
    %2484 = vmatprep.subr.mxu0 0.0
    %2485 = vmatpush2.msra.mxu0 0.0
    %2486 = vmatprep.subr.mxu0 0.0
    %2487 = vmatpush2.msra.mxu0 0.0
    %2488 = vmatprep.subr.mxu0 0.0
    %2489 = vmatpush2.msra.mxu0 0.0
    %2490 = vmatprep.subr.mxu0 0.0
    %2491 = vmatpush2.msra.mxu0 0.0
    %2492 = vmatprep.subr.mxu0 0.0
    %2493 = vmatpush2.msra.mxu0 0.0
    %2494 = vmatprep.subr.mxu0 0.0
    %2495 = vmatpush2.msra.mxu0 0.0
    %2496 = vmatprep.subr.mxu0 0.0
    %2497 = vmatpush2.msra.mxu0 0.0
    %2498 = vmatprep.subr.mxu0 0.0
    %2499 = vmatpush2.msra.mxu0 0.0
    %2500 = vmatprep.subr.mxu0 0.0
    %2501 = vmatpush2.msra.mxu0 0.0
    %2502 = vmatprep.subr.mxu0 0.0
    %2503 = vmatpush2.msra.mxu0 0.0
    %2504 = vmatprep.subr.mxu0 0.0
    %2505 = vmatpush2.msra.mxu0 0.0
    %2506 = vmatprep.subr.mxu0 0.0
    %2507 = vmatpush2.msra.mxu0 0.0
    %2508 = vmatprep.subr.mxu0 0.0
    %2509 = vmatpush2.msra.mxu0 0.0
    %2510 = vmatprep.subr.mxu0 0.0
    %2511 = vmatpush2.msra.mxu0 0.0
    %2512 = vmatprep.mubr.f32.mxu0 0.0
    %2513 = vmatmul.mubr.f32.gmra.mxu0 %v2446
    %v2514 = vpop.f32.mrf.mxu0
    %v2515 = vadd.f32 0.0, %v2514
    %v2516 = vpop.f32.mrf.mxu0
    %2517 = vdwg.mxu0
    %s2518 = scalar_lea.vmem %s4, 48
    %v2519 = vld [vmem:[%s2518] sm:$0xff]
    %v2520 = vld [vmem:[%s2518 + $0x8] sm:$0xff]
    %v2521 = vld [vmem:[%s2518 + $0x10] sm:$0xff]
    %v2522 = vld [vmem:[%s2518 + $0x18] sm:$0xff]
    %v2523 = vld [vmem:[%s2518 + $0x20] sm:$0xff]
    %v2524 = vld [vmem:[%s2518 + $0x28] sm:$0xff]
    %v2525 = vld [vmem:[%s1584 + $0x1] ss:$0 sm:$0xff]
    %v2527 = vsel %vm157, %v2096, 0
    %v2530 = vsel %vm157, %v2515, 0
    %2532 = vmatprep.subr.mxu0 0.0
    %2533 = vmatpush1.msra.mxu0 0.0
    %2534 = vmatprep.subr.mxu0 0.0
    %2535 = vmatpush1.msra.mxu0 0.0
    %2536 = vmatprep.subr.mxu0 0.0
    %2537 = vmatpush1.msra.mxu0 0.0
    %2538 = vmatprep.subr.mxu0 0.0
    %2539 = vmatpush1.msra.mxu0 0.0
    %2540 = vmatprep.subr.mxu0 0.0
    %2541 = vmatpush1.msra.mxu0 0.0
    %2542 = vmatprep.subr.mxu0 0.0
    %2543 = vmatpush1.msra.mxu0 0.0
    %2544 = vmatprep.subr.mxu0 0.0
    %2545 = vmatpush1.msra.mxu0 0.0
    %2546 = vmatprep.subr.mxu0 0.0
    %2547 = vmatpush1.msra.mxu0 0.0
    %2548 = vmatprep.subr.mxu0 0.0
    %2549 = vmatpush1.msra.mxu0 0.0
    %2550 = vmatprep.subr.mxu0 0.0
    %2551 = vmatpush1.msra.mxu0 0.0
    %2552 = vmatprep.subr.mxu0 0.0
    %2553 = vmatpush1.msra.mxu0 %v2524
    %2554 = vmatprep.subr.mxu0 0.0
    %2555 = vmatpush1.msra.mxu0 %v2523
    %2556 = vmatprep.subr.mxu0 0.0
    %2557 = vmatpush1.msra.mxu0 %v2522
    %2558 = vmatprep.subr.mxu0 0.0
    %2559 = vmatpush1.msra.mxu0 %v2521
    %2560 = vmatprep.subr.mxu0 0.0
    %2561 = vmatpush1.msra.mxu0 %v2520
    %2562 = vmatprep.subr.mxu0 0.0
    %2563 = vmatpush1.msra.mxu0 %v2519
    %2564 = vmatprep.subr.mxu0 0.0
    %2565 = vmatpush2.msra.mxu0 0.0
    %2566 = vmatprep.subr.mxu0 0.0
    %2567 = vmatpush2.msra.mxu0 0.0
    %2568 = vmatprep.subr.mxu0 0.0
    %2569 = vmatpush2.msra.mxu0 0.0
    %2570 = vmatprep.subr.mxu0 0.0
    %2571 = vmatpush2.msra.mxu0 0.0
    %2572 = vmatprep.subr.mxu0 0.0
    %2573 = vmatpush2.msra.mxu0 0.0
    %2574 = vmatprep.subr.mxu0 0.0
    %2575 = vmatpush2.msra.mxu0 0.0
    %2576 = vmatprep.subr.mxu0 0.0
    %2577 = vmatpush2.msra.mxu0 0.0
    %2578 = vmatprep.subr.mxu0 0.0
    %2579 = vmatpush2.msra.mxu0 0.0
    %2580 = vmatprep.subr.mxu0 0.0
    %2581 = vmatpush2.msra.mxu0 0.0
    %2582 = vmatprep.subr.mxu0 0.0
    %2583 = vmatpush2.msra.mxu0 0.0
    %2584 = vmatprep.subr.mxu0 0.0
    %2585 = vmatpush2.msra.mxu0 0.0
    %2586 = vmatprep.subr.mxu0 0.0
    %2587 = vmatpush2.msra.mxu0 0.0
    %2588 = vmatprep.subr.mxu0 0.0
    %2589 = vmatpush2.msra.mxu0 0.0
    %2590 = vmatprep.subr.mxu0 0.0
    %2591 = vmatpush2.msra.mxu0 0.0
    %2592 = vmatprep.subr.mxu0 0.0
    %2593 = vmatpush2.msra.mxu0 0.0
    %2594 = vmatprep.subr.mxu0 0.0
    %2595 = vmatpush2.msra.mxu0 0.0
    %2596 = vmatprep.mubr.f32.mxu0 0.0
    %2597 = vmatmul.mubr.f32.gmra.mxu0 %v2527
    %v2598 = vpop.f32.mrf.mxu0
    %v2599 = vadd.f32 %v2525, %v2598
    %v2600 = vpop.f32.mrf.mxu0
    %2601 = vmatprep.mubr.f32.mxu0 0.0
    %2602 = vmatmul.mubr.f32.gmra.mxu0 %v2530
    %v2603 = vpop.f32.mrf.mxu0
    %v2604 = vadd.f32 %v2525, %v2603
    %v2605 = vpop.f32.mrf.mxu0
    %2606 = vdwg.mxu0
    %v2607 = vadd.f32 %v2599, %v1569
    %v2608 = vadd.f32 %v2604, %v1570
    %v2609 = vld [vmem:[%s1584 + $0x4] ss:$0 sm:$0xff]
    %v2610 = vld [vmem:[%s1584 + $0x5] ss:$0 sm:$0xff]
    %v2611 = vsel %vm157, %v2607, 0.0
    %2612 = vadd.xlane.f32.xlu0 %v2611
    %v2613 = vpop.xlane.xlu0 %2612
    %v2614 = vsel %vm157, %v2608, 0.0
    %2615 = vadd.xlane.f32.xlu0 %v2614
    %v2616 = vpop.xlane.xlu0 %2615
    %v2617 = vmul.f32 %v2607, %v2607
    %v2618 = vmul.f32 %v2608, %v2608
    %v2619 = vsel %vm157, %v2617, 0.0
    %2620 = vadd.xlane.f32.xlu0 %v2619
    %v2621 = vpop.xlane.xlu0 %2620
    %v2622 = vsel %vm157, %v2618, 0.0
    %2623 = vadd.xlane.f32.xlu0 %v2622
    %v2624 = vpop.xlane.xlu0 %2623
    %v2625 = vmul.f32 %v2613, 0.020833334
    %v2626 = vmul.f32 %v2616, 0.020833334
    %v2627 = vmul.f32 %v2621, 0.020833334
    %v2628 = vmul.f32 %v2624, 0.020833334
    %v2629 = vmul.f32 %v2625, %v2625
    %v2630 = vmul.f32 %v2626, %v2626
    %v2631 = vsub.f32 %v2627, %v2629
    %v2632 = vsub.f32 %v2628, %v2630
    %v2633 = vsub.f32 %v2607, %v2625
    %v2634 = vsub.f32 %v2608, %v2626
    %v2635 = vadd.f32 %v2631, 1e-05
    %v2636 = vadd.f32 %v2632, 1e-05
    %v2637 = vrsqrt.pop %v2635
    %v2638 = vrsqrt.pop %v2636
    %v2639 = vmul.f32 %v2633, %v2637
    %v2640 = vmul.f32 %v2634, %v2638
    %v2641 = vmul.f32 %v2639, %v2609
    %v2642 = vmul.f32 %v2640, %v2609
    %v2643 = vadd.f32 %v2641, %v2610
    %v2644 = vadd.f32 %v2642, %v2610
    %s2645 = scalar_lea.vmem %s5, 96
    %v2646 = vld [vmem:[%s2645] sm:$0xff]
    %v2647 = vld [vmem:[%s2645 + $0x8] sm:$0xff]
    %v2648 = vld [vmem:[%s2645 + $0x10] sm:$0xff]
    %v2649 = vld [vmem:[%s2645 + $0x18] sm:$0xff]
    %v2650 = vld [vmem:[%s2645 + $0x20] sm:$0xff]
    %v2651 = vld [vmem:[%s2645 + $0x28] sm:$0xff]
    %v2652 = vld [vmem:[%s2645 + $0x30] sm:$0xff]
    %v2653 = vld [vmem:[%s2645 + $0x38] sm:$0xff]
    %v2654 = vld [vmem:[%s2645 + $0x40] sm:$0xff]
    %v2655 = vld [vmem:[%s2645 + $0x48] sm:$0xff]
    %v2656 = vld [vmem:[%s2645 + $0x50] sm:$0xff]
    %v2657 = vld [vmem:[%s2645 + $0x58] sm:$0xff]
    %s2658 = scalar_lea.vmem %s1584, 2
    %v2659 = vld [vmem:[%s2658] ss:$8 sm:$0x3]
    %v2661 = vlaneseq
    %v2662 = vshrl.u32 %v2661, 7
    %v2663 = vsub.s32 0, %v2662
    %v2664 = vrot.slane %v2659, %v2663
    %v2665 = vlaneseq
    %v2666 = vshrl.u32 %v2665, 7
    %v2667 = vsub.s32 1, %v2666
    %v2668 = vrot.slane %v2659, %v2667
    %v2672 = vsel %vm157, %v2643, 0
    %v2675 = vsel %vm157, %v2644, 0
    %2677 = vmatprep.subr.mxu0 0.0
    %2678 = vmatpush1.msra.mxu0 0.0
    %2679 = vmatprep.subr.mxu0 0.0
    %2680 = vmatpush1.msra.mxu0 0.0
    %2681 = vmatprep.subr.mxu0 0.0
    %2682 = vmatpush1.msra.mxu0 0.0
    %2683 = vmatprep.subr.mxu0 0.0
    %2684 = vmatpush1.msra.mxu0 0.0
    %2685 = vmatprep.subr.mxu0 0.0
    %2686 = vmatpush1.msra.mxu0 0.0
    %2687 = vmatprep.subr.mxu0 0.0
    %2688 = vmatpush1.msra.mxu0 0.0
    %2689 = vmatprep.subr.mxu0 0.0
    %2690 = vmatpush1.msra.mxu0 0.0
    %2691 = vmatprep.subr.mxu0 0.0
    %2692 = vmatpush1.msra.mxu0 0.0
    %2693 = vmatprep.subr.mxu0 0.0
    %2694 = vmatpush1.msra.mxu0 0.0
    %2695 = vmatprep.subr.mxu0 0.0
    %2696 = vmatpush1.msra.mxu0 0.0
    %2697 = vmatprep.subr.mxu0 %v2657
    %2698 = vmatpush1.msra.mxu0 %v2656
    %2699 = vmatprep.subr.mxu0 %v2655
    %2700 = vmatpush1.msra.mxu0 %v2654
    %2701 = vmatprep.subr.mxu0 %v2653
    %2702 = vmatpush1.msra.mxu0 %v2652
    %2703 = vmatprep.subr.mxu0 %v2651
    %2704 = vmatpush1.msra.mxu0 %v2650
    %2705 = vmatprep.subr.mxu0 %v2649
    %2706 = vmatpush1.msra.mxu0 %v2648
    %2707 = vmatprep.subr.mxu0 %v2647
    %2708 = vmatpush1.msra.mxu0 %v2646
    %2709 = vmatprep.subr.mxu0 0.0
    %2710 = vmatpush2.msra.mxu0 0.0
    %2711 = vmatprep.subr.mxu0 0.0
    %2712 = vmatpush2.msra.mxu0 0.0
    %2713 = vmatprep.subr.mxu0 0.0
    %2714 = vmatpush2.msra.mxu0 0.0
    %2715 = vmatprep.subr.mxu0 0.0
    %2716 = vmatpush2.msra.mxu0 0.0
    %2717 = vmatprep.subr.mxu0 0.0
    %2718 = vmatpush2.msra.mxu0 0.0
    %2719 = vmatprep.subr.mxu0 0.0
    %2720 = vmatpush2.msra.mxu0 0.0
    %2721 = vmatprep.subr.mxu0 0.0
    %2722 = vmatpush2.msra.mxu0 0.0
    %2723 = vmatprep.subr.mxu0 0.0
    %2724 = vmatpush2.msra.mxu0 0.0
    %2725 = vmatprep.subr.mxu0 0.0
    %2726 = vmatpush2.msra.mxu0 0.0
    %2727 = vmatprep.subr.mxu0 0.0
    %2728 = vmatpush2.msra.mxu0 0.0
    %2729 = vmatprep.subr.mxu0 0.0
    %2730 = vmatpush2.msra.mxu0 0.0
    %2731 = vmatprep.subr.mxu0 0.0
    %2732 = vmatpush2.msra.mxu0 0.0
    %2733 = vmatprep.subr.mxu0 0.0
    %2734 = vmatpush2.msra.mxu0 0.0
    %2735 = vmatprep.subr.mxu0 0.0
    %2736 = vmatpush2.msra.mxu0 0.0
    %2737 = vmatprep.subr.mxu0 0.0
    %2738 = vmatpush2.msra.mxu0 0.0
    %2739 = vmatprep.subr.mxu0 0.0
    %2740 = vmatpush2.msra.mxu0 0.0
    %2741 = vmatprep.mubr.f32.mxu0 0.0
    %2742 = vmatmul.mubr.f32.gmra.mxu0 %v2672
    %v2743 = vpop.f32.mrf.mxu0
    %v2744 = vadd.f32 %v2664, %v2743
    %v2745 = vpop.f32.mrf.mxu0
    %v2746 = vadd.f32 %v2668, %v2745
    %2747 = vmatprep.mubr.f32.mxu0 0.0
    %2748 = vmatmul.mubr.f32.gmra.mxu0 %v2675
    %v2749 = vpop.f32.mrf.mxu0
    %v2750 = vadd.f32 %v2664, %v2749
    %v2751 = vpop.f32.mrf.mxu0
    %v2752 = vadd.f32 %v2668, %v2751
    %2753 = vdwg.mxu0
    %v2754 = vmax.f32 %v2744, 0.0
    %v2755 = vmax.f32 %v2746, 0.0
    %v2756 = vmax.f32 %v2750, 0.0
    %v2757 = vmax.f32 %v2752, 0.0
    %s2758 = scalar_lea.vmem %s6, 192
    %v2759 = vld [vmem:[%s2758] sm:$0xff]
    %v2760 = vld [vmem:[%s2758 + $0x8] sm:$0xff]
    %v2761 = vld [vmem:[%s2758 + $0x10] sm:$0xff]
    %v2762 = vld [vmem:[%s2758 + $0x18] sm:$0xff]
    %v2763 = vld [vmem:[%s2758 + $0x20] sm:$0xff]
    %v2764 = vld [vmem:[%s2758 + $0x28] sm:$0xff]
    %v2765 = vld [vmem:[%s2758 + $0x30] sm:$0xff]
    %v2766 = vld [vmem:[%s2758 + $0x38] sm:$0xff]
    %v2767 = vld [vmem:[%s2758 + $0x40] sm:$0xff]
    %v2768 = vld [vmem:[%s2758 + $0x48] sm:$0xff]
    %v2769 = vld [vmem:[%s2758 + $0x50] sm:$0xff]
    %v2770 = vld [vmem:[%s2758 + $0x58] sm:$0xff]
    %v2771 = vld [vmem:[%s2758 + $0x60] sm:$0xff]
    %v2772 = vld [vmem:[%s2758 + $0x68] sm:$0xff]
    %v2773 = vld [vmem:[%s2758 + $0x70] sm:$0xff]
    %v2774 = vld [vmem:[%s2758 + $0x78] sm:$0xff]
    %v2775 = vld [vmem:[%s2758 + $0x80] sm:$0xff]
    %v2776 = vld [vmem:[%s2758 + $0x88] sm:$0xff]
    %v2777 = vld [vmem:[%s2758 + $0x90] sm:$0xff]
    %v2778 = vld [vmem:[%s2758 + $0x98] sm:$0xff]
    %v2779 = vld [vmem:[%s2758 + $0xa0] sm:$0xff]
    %v2780 = vld [vmem:[%s2758 + $0xa8] sm:$0xff]
    %v2781 = vld [vmem:[%s2758 + $0xb0] sm:$0xff]
    %v2782 = vld [vmem:[%s2758 + $0xb8] sm:$0xff]
    %v2783 = vld [vmem:[%s1584 + $0x3] ss:$0 sm:$0xff]
    %v2785 = vsel %vm51, %v2755, 0
    %v2788 = vsel %vm51, %v2757, 0
    %2790 = vmatprep.subr.mxu0 0.0
    %2791 = vmatpush1.msra.mxu0 %v2774
    %2792 = vmatprep.subr.mxu0 0.0
    %2793 = vmatpush1.msra.mxu0 %v2773
    %2794 = vmatprep.subr.mxu0 0.0
    %2795 = vmatpush1.msra.mxu0 %v2772
    %2796 = vmatprep.subr.mxu0 0.0
    %2797 = vmatpush1.msra.mxu0 %v2771
    %2798 = vmatprep.subr.mxu0 0.0
    %2799 = vmatpush1.msra.mxu0 %v2770
    %2800 = vmatprep.subr.mxu0 0.0
    %2801 = vmatpush1.msra.mxu0 %v2769
    %2802 = vmatprep.subr.mxu0 0.0
    %2803 = vmatpush1.msra.mxu0 %v2768
    %2804 = vmatprep.subr.mxu0 0.0
    %2805 = vmatpush1.msra.mxu0 %v2767
    %2806 = vmatprep.subr.mxu0 0.0
    %2807 = vmatpush1.msra.mxu0 %v2766
    %2808 = vmatprep.subr.mxu0 0.0
    %2809 = vmatpush1.msra.mxu0 %v2765
    %2810 = vmatprep.subr.mxu0 0.0
    %2811 = vmatpush1.msra.mxu0 %v2764
    %2812 = vmatprep.subr.mxu0 0.0
    %2813 = vmatpush1.msra.mxu0 %v2763
    %2814 = vmatprep.subr.mxu0 0.0
    %2815 = vmatpush1.msra.mxu0 %v2762
    %2816 = vmatprep.subr.mxu0 0.0
    %2817 = vmatpush1.msra.mxu0 %v2761
    %2818 = vmatprep.subr.mxu0 0.0
    %2819 = vmatpush1.msra.mxu0 %v2760
    %2820 = vmatprep.subr.mxu0 0.0
    %2821 = vmatpush1.msra.mxu0 %v2759
    %2822 = vmatprep.subr.mxu0 0.0
    %2823 = vmatpush2.msra.mxu0 0.0
    %2824 = vmatprep.subr.mxu0 0.0
    %2825 = vmatpush2.msra.mxu0 0.0
    %2826 = vmatprep.subr.mxu0 0.0
    %2827 = vmatpush2.msra.mxu0 0.0
    %2828 = vmatprep.subr.mxu0 0.0
    %2829 = vmatpush2.msra.mxu0 0.0
    %2830 = vmatprep.subr.mxu0 0.0
    %2831 = vmatpush2.msra.mxu0 0.0
    %2832 = vmatprep.subr.mxu0 0.0
    %2833 = vmatpush2.msra.mxu0 0.0
    %2834 = vmatprep.subr.mxu0 0.0
    %2835 = vmatpush2.msra.mxu0 0.0
    %2836 = vmatprep.subr.mxu0 0.0
    %2837 = vmatpush2.msra.mxu0 0.0
    %2838 = vmatprep.subr.mxu0 0.0
    %2839 = vmatpush2.msra.mxu0 %v2782
    %2840 = vmatprep.subr.mxu0 0.0
    %2841 = vmatpush2.msra.mxu0 %v2781
    %2842 = vmatprep.subr.mxu0 0.0
    %2843 = vmatpush2.msra.mxu0 %v2780
    %2844 = vmatprep.subr.mxu0 0.0
    %2845 = vmatpush2.msra.mxu0 %v2779
    %2846 = vmatprep.subr.mxu0 0.0
    %2847 = vmatpush2.msra.mxu0 %v2778
    %2848 = vmatprep.subr.mxu0 0.0
    %2849 = vmatpush2.msra.mxu0 %v2777
    %2850 = vmatprep.subr.mxu0 0.0
    %2851 = vmatpush2.msra.mxu0 %v2776
    %2852 = vmatprep.subr.mxu0 0.0
    %2853 = vmatpush2.msra.mxu0 %v2775
    %2854 = vmatprep.mubr.f32.mxu0 %v2785
    %2855 = vmatmul.mubr.f32.gmra.mxu0 %v2754
    %v2856 = vpop.f32.mrf.mxu0
    %v2857 = vadd.f32 %v2783, %v2856
    %v2858 = vpop.f32.mrf.mxu0
    %2859 = vmatprep.mubr.f32.mxu0 %v2788
    %2860 = vmatmul.mubr.f32.gmra.mxu0 %v2756
    %v2861 = vpop.f32.mrf.mxu0
    %v2862 = vadd.f32 %v2783, %v2861
    %v2863 = vpop.f32.mrf.mxu0
    %2864 = vdwg.mxu0
    %v2865 = vadd.f32 %v2857, %v2643
    %v2866 = vadd.f32 %v2862, %v2644
    %v2867 = vld [vmem:[%s1584 + $0x6] ss:$0 sm:$0xff]
    %v2868 = vld [vmem:[%s1584 + $0x7] ss:$0 sm:$0xff]
    %v2869 = vsel %vm157, %v2865, 0.0
    %2870 = vadd.xlane.f32.xlu0 %v2869
    %v2871 = vpop.xlane.xlu0 %2870
    %v2872 = vsel %vm157, %v2866, 0.0
    %2873 = vadd.xlane.f32.xlu0 %v2872
    %v2874 = vpop.xlane.xlu0 %2873
    %v2875 = vmul.f32 %v2865, %v2865
    %v2876 = vmul.f32 %v2866, %v2866
    %v2877 = vsel %vm157, %v2875, 0.0
    %2878 = vadd.xlane.f32.xlu0 %v2877
    %v2879 = vpop.xlane.xlu0 %2878
    %v2880 = vsel %vm157, %v2876, 0.0
    %2881 = vadd.xlane.f32.xlu0 %v2880
    %v2882 = vpop.xlane.xlu0 %2881
    %v2883 = vmul.f32 %v2871, 0.020833334
    %v2884 = vmul.f32 %v2874, 0.020833334
    %v2885 = vmul.f32 %v2879, 0.020833334
    %v2886 = vmul.f32 %v2882, 0.020833334
    %v2887 = vmul.f32 %v2883, %v2883
    %v2888 = vmul.f32 %v2884, %v2884
    %v2889 = vsub.f32 %v2885, %v2887
    %v2890 = vsub.f32 %v2886, %v2888
    %v2891 = vsub.f32 %v2865, %v2883
    %v2892 = vsub.f32 %v2866, %v2884
    %v2893 = vadd.f32 %v2889, 1e-05
    %v2894 = vadd.f32 %v2890, 1e-05
    %v2895 = vrsqrt.pop %v2893
    %v2896 = vrsqrt.pop %v2894
    %v2897 = vmul.f32 %v2891, %v2895
    %v2898 = vmul.f32 %v2892, %v2896
    %v2899 = vmul.f32 %v2897, %v2867
    %v2900 = vmul.f32 %v2898, %v2867
    %v2901 = vadd.f32 %v2899, %v2868
    %v2902 = vadd.f32 %v2900, %v2868
    %v2904 = vrot.slane %v2901, 7
    %v2907 = vrot.slane %v2902, 6
    %vm2909 = vcmask 1040384
    %v2910 = vsel %vm2909, %v2904, %v2907
    %v2911 = vld [vmem:[%s1 + $0x110] sm:$0xff]
    %v2912 = vld [vmem:[%s1 + $0x118] sm:$0xff]
    %v2913 = vld [vmem:[%s1 + $0x120] sm:$0xff]
    %v2914 = vld [vmem:[%s1 + $0x128] sm:$0xff]
    %v2915 = vld [vmem:[%s1 + $0x130] sm:$0xff]
    %v2916 = vld [vmem:[%s1 + $0x138] sm:$0xff]
    %v2917 = vld [vmem:[%s1 + $0x140] sm:$0x1]
    %v2918 = vlaneseq
    %v2919 = vshrl.u32 %v2918, 7
    %v2920 = vsub.s32 0, %v2919
    %v2921 = vrot.slane %v2917, %v2920
    %v2923 = vsel %vm157, %v2910, 0
    %2925 = vmatprep.subr.mxu0 0.0
    %2926 = vmatpush1.msra.mxu0 0.0
    %2927 = vmatprep.subr.mxu0 0.0
    %2928 = vmatpush1.msra.mxu0 0.0
    %2929 = vmatprep.subr.mxu0 0.0
    %2930 = vmatpush1.msra.mxu0 0.0
    %2931 = vmatprep.subr.mxu0 0.0
    %2932 = vmatpush1.msra.mxu0 0.0
    %2933 = vmatprep.subr.mxu0 0.0
    %2934 = vmatpush1.msra.mxu0 0.0
    %2935 = vmatprep.subr.mxu0 0.0
    %2936 = vmatpush1.msra.mxu0 0.0
    %2937 = vmatprep.subr.mxu0 0.0
    %2938 = vmatpush1.msra.mxu0 0.0
    %2939 = vmatprep.subr.mxu0 0.0
    %2940 = vmatpush1.msra.mxu0 0.0
    %2941 = vmatprep.subr.mxu0 0.0
    %2942 = vmatpush1.msra.mxu0 0.0
    %2943 = vmatprep.subr.mxu0 0.0
    %2944 = vmatpush1.msra.mxu0 0.0
    %2945 = vmatprep.subr.mxu0 0.0
    %2946 = vmatpush1.msra.mxu0 %v2916
    %2947 = vmatprep.subr.mxu0 0.0
    %2948 = vmatpush1.msra.mxu0 %v2915
    %2949 = vmatprep.subr.mxu0 0.0
    %2950 = vmatpush1.msra.mxu0 %v2914
    %2951 = vmatprep.subr.mxu0 0.0
    %2952 = vmatpush1.msra.mxu0 %v2913
    %2953 = vmatprep.subr.mxu0 0.0
    %2954 = vmatpush1.msra.mxu0 %v2912
    %2955 = vmatprep.subr.mxu0 0.0
    %2956 = vmatpush1.msra.mxu0 %v2911
    %2957 = vmatprep.subr.mxu0 0.0
    %2958 = vmatpush2.msra.mxu0 0.0
    %2959 = vmatprep.subr.mxu0 0.0
    %2960 = vmatpush2.msra.mxu0 0.0
    %2961 = vmatprep.subr.mxu0 0.0
    %2962 = vmatpush2.msra.mxu0 0.0
    %2963 = vmatprep.subr.mxu0 0.0
    %2964 = vmatpush2.msra.mxu0 0.0
    %2965 = vmatprep.subr.mxu0 0.0
    %2966 = vmatpush2.msra.mxu0 0.0
    %2967 = vmatprep.subr.mxu0 0.0
    %2968 = vmatpush2.msra.mxu0 0.0
    %2969 = vmatprep.subr.mxu0 0.0
    %2970 = vmatpush2.msra.mxu0 0.0
    %2971 = vmatprep.subr.mxu0 0.0
    %2972 = vmatpush2.msra.mxu0 0.0
    %2973 = vmatprep.subr.mxu0 0.0
    %2974 = vmatpush2.msra.mxu0 0.0
    %2975 = vmatprep.subr.mxu0 0.0
    %2976 = vmatpush2.msra.mxu0 0.0
    %2977 = vmatprep.subr.mxu0 0.0
    %2978 = vmatpush2.msra.mxu0 0.0
    %2979 = vmatprep.subr.mxu0 0.0
    %2980 = vmatpush2.msra.mxu0 0.0
    %2981 = vmatprep.subr.mxu0 0.0
    %2982 = vmatpush2.msra.mxu0 0.0
    %2983 = vmatprep.subr.mxu0 0.0
    %2984 = vmatpush2.msra.mxu0 0.0
    %2985 = vmatprep.subr.mxu0 0.0
    %2986 = vmatpush2.msra.mxu0 0.0
    %2987 = vmatprep.subr.mxu0 0.0
    %2988 = vmatpush2.msra.mxu0 0.0
    %2989 = vmatprep.mubr.f32.mxu0 0.0
    %2990 = vmatmul.mubr.f32.gmra.mxu0 %v2923
    %v2991 = vpop.f32.mrf.mxu0
    %v2992 = vadd.f32 %v2921, %v2991
    %v2993 = vpop.f32.mrf.mxu0
    %2994 = vdwg.mxu0
    %vm2995 = vcmask 517120
    %2996 = vst.msk [vmem:[#allocation2] sm:$0x3] %vm2995, %v2992
    // Predicated region
    $region30: #{tpu_custom_call.1} parent=1 // pred_check
      _
    $region31: #{tpu_custom_call.1} parent=1 // pred_check_branch
      %2998 = sbr.rel (0) target = $region33
    $region32: #{tpu_custom_call.1} parent=1 // pred_region
      %s3000 = ssub.s32 32, 32
      %3001 = vsyncadd [#allocation3], %s3000
      %s3003 = sshll.u32 [#allocation2], 4
      %s3004 = int_to_ptr.vmem [resolvable:$true] %s3003
      %3006 = dma.vmem_to_hbm [thread:$0]  %s3004, 32, %s7, [#allocation3]
    $region33: #{tpu_custom_call.1} parent=1 // pred_fallthru
      _
    // Predicated region
    $region34: #{tpu_custom_call.1} parent=1 // pred_check
      _
    $region35: #{tpu_custom_call.1} parent=1 // pred_check_branch
      %3008 = sbr.rel (0) target = $region37
    $region36: #{tpu_custom_call.1} parent=1 // pred_region
      %3009 = dma.done [#allocation3], 32
    $region37: #{tpu_custom_call.1} parent=1 // pred_fallthru
      _
    %3010 = vsyncpa [#allocation3], 1

</llo_original>
